<compile_context>
chip_gen: v6e
topology: v6e:2x2x1
jax: 0.10.0
libtpu: 0.0.40
codegen_flags: <defaults>
</compile_context>

<pallas_src>
import functools

import numpy as np

import jax
import jax.numpy as jnp
from jax.experimental import pallas as pl
from jax.experimental.pallas import tpu as pltpu


# ----------------------------------------------------------------------------
# Helpers
# ----------------------------------------------------------------------------
def _round_up(x, m):
    return (x + m - 1) // m * m


def _apply_act(v, kind):
    if kind == "relu":
        return jnp.maximum(v, 0.0)
    if kind == "leaky_relu":
        return jnp.where(v >= 0.0, v, 0.01 * v)  # nn.LeakyReLU default slope
    return v


# ----------------------------------------------------------------------------
# Single fused Pallas kernel: whole forward pass for one image per grid step
# ----------------------------------------------------------------------------
def _fused_net_kernel(p0_ref, w0_ref, ps_ref, w1_ref, wfc1_ref, eps_ref, o_ref,
                      *, act0_1, act0_2, use_bn0, act1_1, act1_2, fc_acts,
                      n_pool, n_off1, m1):
    """One image end-to-end.  Operand layout (all lane-dense, 128-wide):

      p0_ref   (1, M0, K0p)  bf16   conv0 im2col patches for this image
      w0_ref   (K0p, 128)    bf16   conv0 weight (offset-major, cin-minor rows)
      ps_ref   (P, 64, M0)   bf16   0/1 selection matrices: pool-offset -> rows
                                    ordered (conv1 offset, conv1 voxel)
      w1_ref   (Q, 128, 128) bf16   conv1 per-offset (Cin,Cout) weights
      wfc1_ref (M1,128, 128) bf16   FC1 weights restacked per conv1 voxel (flatten folded in)
      eps_ref  (8, 128)      f32    packed per-column vectors:
                                    0 conv0 bias | 1 BN scale | 2 BN shift | 3 conv1 bias
                                    4 fc1 bias   | 5 fc2 weight row | 6 fc2 bias (bcast)
      o_ref    (1, 8, 128)   f32    result broadcast across the block (lane-dense store)
    """
    eps = eps_ref[...]

    # ---- conv0: one MXU matmul + fused bias / act1 / BN / act2 epilogue (f32) ----
    out0 = jnp.dot(p0_ref[0], w0_ref[...], preferred_element_type=jnp.float32)
    out0 = out0 + eps[0:1, :]
    out0 = _apply_act(out0, act0_1)
    if use_bn0:
        out0 = out0 * eps[1:2, :] + eps[2:3, :]
    out0 = _apply_act(out0, act0_2)
    out0 = out0.astype(jnp.bfloat16)

    # ---- MaxPool3d fused with the conv1-patch gather: selection matmul per pool
    #      offset, running elementwise max (VPU).  Rows come out already ordered
    #      (conv1 offset q, conv1 output voxel m). ----
    slabs = jnp.dot(ps_ref[0], out0, preferred_element_type=jnp.float32)
    for pi in range(1, n_pool):
        slabs = jnp.maximum(
            slabs, jnp.dot(ps_ref[pi], out0, preferred_element_type=jnp.float32))
    slabs = slabs.astype(jnp.bfloat16)

    # ---- conv1 (stride == kernel => patchify): sum over offsets of tiny dots ----
    acc1 = jnp.dot(slabs[0:m1, :], w1_ref[0], preferred_element_type=jnp.float32)
    for q in range(1, n_off1):
        acc1 = acc1 + jnp.dot(slabs[q * m1:(q + 1) * m1, :], w1_ref[q],
                              preferred_element_type=jnp.float32)
    act1 = acc1 + eps[3:4, :]
    act1 = _apply_act(act1, act1_1)
    act1 = _apply_act(act1, act1_2)
    act1 = act1.astype(jnp.bfloat16)

    # ---- FC1: the NCDHW flatten permutation is folded into wfc1, so it is just a
    #      sum over conv1 voxels of (1,128)@(128,128) dots ----
    h = jnp.dot(act1[0:1, :], wfc1_ref[0], preferred_element_type=jnp.float32)
    for m in range(1, m1):
        h = h + jnp.dot(act1[m:m + 1, :], wfc1_ref[m],
                        preferred_element_type=jnp.float32)
    h = h + eps[4:5, :]
    h = _apply_act(h, fc_acts[0])

    # ---- FC2 (Nout=1): VPU multiply + lane reduction, stays in f32 ----
    y = jnp.sum(h * eps[5:6, :], axis=1, keepdims=True) + eps[6:7, :]
    y = _apply_act(y, fc_acts[1])

    o_ref[...] = jnp.broadcast_to(y, o_ref.shape).astype(o_ref.dtype)


# ----------------------------------------------------------------------------
# Forward wrapper: builds the (const-folded) packed operands + one pallas_call
# ----------------------------------------------------------------------------
def forward(x_ncdhw, conv_params, fc_params):
    p0, p1 = conv_params
    f0, f1 = fc_params
    N = x_ncdhw.shape[0]

    # ------------- conv0 im2col (only runtime glue; 4 KiB input) -------------
    kd, kh, kw = p0["kernel"]
    sd, sh, sw = p0["stride"]
    pd, ph, pw = p0["padding"]
    x = jnp.transpose(x_ncdhw, (0, 2, 3, 4, 1)).astype(jnp.bfloat16)   # NDHWC, bf16 once
    x = jnp.pad(x, ((0, 0), (pd, pd), (ph, ph), (pw, pw), (0, 0)))
    _, D, H, W, Cin = x.shape
    od = (D - kd) // sd + 1
    oh = (H - kh) // sh + 1
    ow = (W - kw) // sw + 1
    cols = []
    for a in range(kd):
        for b in range(kh):
            for c in range(kw):
                cols.append(x[:, a:a + (od - 1) * sd + 1:sd,
                              b:b + (oh - 1) * sh + 1:sh,
                              c:c + (ow - 1) * sw + 1:sw, :])
    patches = jnp.concatenate(cols, axis=-1)           # (N,od,oh,ow,k^3*Cin), offset-major
    K0 = kd * kh * kw * Cin
    K0p = _round_up(K0, 128)
    M0 = od * oh * ow
    patches = jnp.pad(patches, ((0, 0),) * 4 + ((0, K0p - K0),)).reshape(N, M0, K0p)
    # TODO(synk): for larger genomes (M0 > ~2k) tile M0 with an extra grid axis instead
    # of a single full-M block, and re-derive tile sizes for v7x's 64 MiB VMEM.

    # ------------- constants below are traced on concrete params -> const-folded -----
    C0 = p0["weight"].shape[0]
    C0p = 128                                           # lane-dense conv0 output channels
    w0 = jnp.transpose(p0["weight"], (2, 3, 4, 1, 0)).reshape(K0, C0)
    w0 = jnp.pad(w0, ((0, K0p - K0), (0, C0p - C0))).astype(jnp.bfloat16)

    # Pool / conv1 patchify geometry (fixed genome satisfies these)
    assert p0["pool"] and tuple(p0["pool_kernel"]) == tuple(p0["pool_stride"]), \
        "fused path assumes non-overlapping pooling"
    pkd, pkh, pkw = p0["pool_kernel"]
    assert od % pkd == 0 and oh % pkh == 0 and ow % pkw == 0
    Dp, Hp, Wp = od // pkd, oh // pkh, ow // pkw
    k1d, k1h, k1w = p1["kernel"]
    assert tuple(p1["stride"]) == tuple(p1["kernel"]) and tuple(p1["padding"]) == (0, 0, 0), \
        "fused path assumes conv1 is a patchify conv (stride == kernel, no padding)"
    assert Dp % k1d == 0 and Hp % k1h == 0 and Wp % k1w == 0
    Do, Ho, Wo = Dp // k1d, Hp // k1h, Wp // k1w
    M1 = Do * Ho * Wo                                   # conv1 output voxels (8)
    Q = k1d * k1h * k1w                                 # conv1 kernel offsets (8)
    P = pkd * pkh * pkw                                 # pool offsets (8)
    # TODO(synk): general genomes (overlapping pools, non-patchify conv1, >2 conv blocks)
    # need the kernel body generated per-genome at trace time; not implemented here.

    # 0/1 selection matrices: pool-offset -> rows ordered (conv1 offset, conv1 voxel)
    ps_np = np.zeros((P, Q * M1, M0), np.float32)
    for pi, (pod, poh, pow_) in enumerate(np.ndindex(pkd, pkh, pkw)):
        for qi, (a, b, c) in enumerate(np.ndindex(k1d, k1h, k1w)):
            for mi, (d0, h0, w0_) in enumerate(np.ndindex(Do, Ho, Wo)):
                d = (d0 * k1d + a) * pkd + pod
                h = (h0 * k1h + b) * pkh + poh
                w = (w0_ * k1w + c) * pkw + pow_
                ps_np[pi, qi * M1 + mi, (d * oh + h) * ow + w] = 1.0
    ps = jnp.asarray(ps_np, jnp.bfloat16)

    # conv1 per-offset (Cin, Cout) weights, zero-padded to lane-dense 128x128
    C1 = p1["weight"].shape[0]
    C1p = 128
    w1t = jnp.transpose(p1["weight"], (2, 3, 4, 1, 0)).reshape(Q, C0, C1).astype(jnp.bfloat16)
    w1_off = jnp.zeros((Q, C0p, C1p), jnp.bfloat16).at[:, :C0, :C1].set(w1t)

    # FC1 weights restacked per conv1 voxel so the torch (C,D,H,W) flatten order is
    # folded into the weights instead of transposing the activation.
    F1 = f0["weight"].shape[0]
    F1p = 128
    wfc1 = jnp.transpose(f0["weight"].reshape(F1, C1, M1), (2, 1, 0)).astype(jnp.bfloat16)
    wfc1_p = jnp.zeros((M1, C1p, F1p), jnp.bfloat16).at[:, :C1, :F1].set(wfc1)

    # All small per-column vectors packed into a single (8,128) f32 operand.
    eps = jnp.zeros((8, 128), jnp.float32)
    eps = eps.at[0, :C0].set(p0["bias"])
    if p0["bnorm"]:
        inv = 1.0 / jnp.sqrt(p0["bn_var"] + 1e-5)
        scale = p0["bn_gamma"] * inv
        shift = p0["bn_beta"] - p0["bn_mean"] * scale
        eps = eps.at[1, :C0].set(scale).at[2, :C0].set(shift)
    eps = eps.at[3, :C1].set(p1["bias"])
    eps = eps.at[4, :F1].set(f0["bias"])
    eps = eps.at[5, :F1].set(f1["weight"][0])          # FC2 (Nout=1) weight row
    eps = eps.at[6, :].set(f1["bias"][0])              # FC2 bias broadcast across lanes

    kernel = functools.partial(
        _fused_net_kernel,
        act0_1=p0["act1"], act0_2=p0["act2"], use_bn0=p0["bnorm"],
        act1_1=p1["act1"], act1_2=p1["act2"],
        fc_acts=(f0["act"], f1["act"]),
        n_pool=P, n_off1=Q, m1=M1,
    )

    out = pl.pallas_call(
        kernel,
        out_shape=jax.ShapeDtypeStruct((N, 8, 128), jnp.float32),
        grid=(N,),
        in_specs=[
            pl.BlockSpec((1, M0, K0p), lambda i: (i, 0, 0)),        # per-image patches
            pl.BlockSpec((K0p, C0p), lambda i: (0, 0)),             # conv0 weight
            pl.BlockSpec((P, Q * M1, M0), lambda i: (0, 0, 0)),     # pool/gather selectors
            pl.BlockSpec((Q, C0p, C1p), lambda i: (0, 0, 0)),       # conv1 weights
            pl.BlockSpec((M1, C1p, F1p), lambda i: (0, 0, 0)),      # fc1 weights
            pl.BlockSpec((8, 128), lambda i: (0, 0)),               # packed epilogue vecs
        ],
        out_specs=pl.BlockSpec((1, 8, 128), lambda i: (i, 0, 0)),
        compiler_params=pltpu.CompilerParams(
            dimension_semantics=("parallel",),   # one image per TensorCore on v7x
            vmem_limit_bytes=16 * 1024 * 1024,   # kernel uses < 2 MiB (perf review)
        ),
    )(patches, w0, ps, w1_off, wfc1_p, eps)

    return out[:, 0, :1]                                # (N, 1)


# ----------------------------------------------------------------------------
# Pure-JAX reference (f32) for a correctness cross-check
# ----------------------------------------------------------------------------
def reference_forward(x, conv_params, fc_params):
    for p in conv_params:
        pd, ph, pw = p["padding"]
        x = jax.lax.conv_general_dilated(
            x, p["weight"], window_strides=tuple(p["stride"]),
            padding=[(pd, pd), (ph, ph), (pw, pw)],
            dimension_numbers=("NCDHW", "OIDHW", "NCDHW"))
        x = x + p["bias"].reshape(1, -1, 1, 1, 1)
        x = _apply_act(x, p["act1"])
        if p["bnorm"]:
            mean = p["bn_mean"].reshape(1, -1, 1, 1, 1)
            var = p["bn_var"].reshape(1, -1, 1, 1, 1)
            gamma = p["bn_gamma"].reshape(1, -1, 1, 1, 1)
            beta = p["bn_beta"].reshape(1, -1, 1, 1, 1)
            x = (x - mean) / jnp.sqrt(var + 1e-5) * gamma + beta
        x = _apply_act(x, p["act2"])
        if p["pool"]:
            kd, kh, kw = p["pool_kernel"]
            sd, sh, sw = p["pool_stride"]
            x = jax.lax.reduce_window(x, -jnp.inf, jax.lax.max,
                                      (1, 1, kd, kh, kw), (1, 1, sd, sh, sw), "VALID")
    x = x.reshape(x.shape[0], -1)
    for p in fc_params:
        x = x @ p["weight"].T + p["bias"]
        x = _apply_act(x, p["act"])
    return x
    # TODO(synk): nn.Dropout is stochastic in training mode; eval-mode identity everywhere.


# ----------------------------------------------------------------------------
# Deterministic parameter construction (fixed genome)
# ----------------------------------------------------------------------------
def build_params(key):
    ks = jax.random.split(key, 16)

    conv_params = [
        dict(  # conv block 0: Conv3d(1->4,k3,s1,p1) + ReLU + BN + MaxPool(2,2)
            kernel=(3, 3, 3), stride=(1, 1, 1), padding=(1, 1, 1),
            weight=0.1 * jax.random.normal(ks[0], (4, 1, 3, 3, 3), jnp.float32),
            bias=0.1 * jax.random.normal(ks[1], (4,), jnp.float32),
            act1="relu", act2=None, bnorm=True,
            bn_gamma=1.0 + 0.1 * jax.random.normal(ks[2], (4,), jnp.float32),
            bn_beta=0.1 * jax.random.normal(ks[3], (4,), jnp.float32),
            bn_mean=0.05 * jax.random.normal(ks[4], (4,), jnp.float32),
            bn_var=1.0 + 0.1 * jax.random.uniform(ks[5], (4,), jnp.float32),
            pool=True, pool_kernel=(2, 2, 2), pool_stride=(2, 2, 2),
        ),
        dict(  # conv block 1: Conv3d(4->8,k2,s2,p0) + LeakyReLU + Dropout(eval)
            kernel=(2, 2, 2), stride=(2, 2, 2), padding=(0, 0, 0),
            weight=0.1 * jax.random.normal(ks[6], (8, 4, 2, 2, 2), jnp.float32),
            bias=0.1 * jax.random.normal(ks[7], (8,), jnp.float32),
            act1=None, act2="leaky_relu", bnorm=False,
            bn_gamma=None, bn_beta=None, bn_mean=None, bn_var=None,
            pool=False, pool_kernel=None, pool_stride=None,
        ),
    ]

    # conv output: (N, 8, 2, 2, 2) in NCDHW terms -> 64 flattened features
    fc_params = [
        dict(weight=0.1 * jax.random.normal(ks[8], (16, 64), jnp.float32),
             bias=0.1 * jax.random.normal(ks[9], (16,), jnp.float32),
             act="relu"),
        dict(weight=0.1 * jax.random.normal(ks[10], (1, 16), jnp.float32),
             bias=0.1 * jax.random.normal(ks[11], (1,), jnp.float32),
             act=None),
    ]
    return conv_params, fc_params


if __name__ == "__main__":
    key = jax.random.PRNGKey(0)
    kp, kx = jax.random.split(key)
    conv_params, fc_params = build_params(kp)

    # NCDHW input, channels_in = 1 as in the genome generator
    x = jax.random.normal(kx, (2, 1, 8, 8, 8), jnp.float32)

    fwd = jax.jit(functools.partial(forward, conv_params=conv_params,
                                    fc_params=fc_params))
    out = jax.block_until_ready(fwd(x))
    assert out.shape == (2, 1), out.shape
    assert bool(jnp.all(jnp.isfinite(out)))

    ref = reference_forward(x, conv_params, fc_params)
    # bf16 MXU inputs (f32 accumulate) -> allow ~1e-2-level drift vs the f32 reference.
    assert float(jnp.max(jnp.abs(out - ref))) < 5e-2, (out, ref)

    print("KERNEL_OK")
</pallas_src>

<mosaic_0001>
module attributes {stable_mosaic.version = 11 : i64} {
  func.func @_fused_net_kernel(%arg0: i32, %arg1: memref<1x512x128xbf16, #tpu.memory_space<vmem>>, %arg2: memref<128x128xbf16, #tpu.memory_space<vmem>>, %arg3: memref<8x64x512xbf16, #tpu.memory_space<vmem>>, %arg4: memref<8x128x128xbf16, #tpu.memory_space<vmem>>, %arg5: memref<8x128x128xbf16, #tpu.memory_space<vmem>>, %arg6: memref<8x128xf32, #tpu.memory_space<vmem>>, %arg7: memref<1x8x128xf32, #tpu.memory_space<vmem>>) attributes {dimension_semantics = [#tpu.dimension_semantics<parallel>], iteration_bounds = array<i64: 2>, scalar_prefetch = 0 : i64, scratch_operands = 0 : i64, tpu.core_type = #tpu.core_type<tc>, window_params = [{transform_indices = @transform_0, window_bounds = array<i64: 1, 512, 128>}, {pipeline_mode = #tpu.pipeline_mode<synchronous>, transform_indices = @transform_1, window_bounds = array<i64: 128, 128>}, {pipeline_mode = #tpu.pipeline_mode<synchronous>, transform_indices = @transform_2, window_bounds = array<i64: 8, 64, 512>}, {pipeline_mode = #tpu.pipeline_mode<synchronous>, transform_indices = @transform_3, window_bounds = array<i64: 8, 128, 128>}, {pipeline_mode = #tpu.pipeline_mode<synchronous>, transform_indices = @transform_4, window_bounds = array<i64: 8, 128, 128>}, {pipeline_mode = #tpu.pipeline_mode<synchronous>, transform_indices = @transform_5, window_bounds = array<i64: 8, 128>}, {transform_indices = @transform_6, window_bounds = array<i64: 1, 8, 128>}]} {
    %c0 = arith.constant 0 : index
    %c0_0 = arith.constant 0 : index
    %0 = vector.load %arg6[%c0, %c0_0] : memref<8x128xf32, #tpu.memory_space<vmem>>, vector<8x128xf32>
    %c0_1 = arith.constant 0 : index
    %c0_2 = arith.constant 0 : index
    %c0_3 = arith.constant 0 : index
    %1 = vector.load %arg1[%c0_1, %c0_2, %c0_3] : memref<1x512x128xbf16, #tpu.memory_space<vmem>>, vector<1x512x128xbf16>
    %2 = vector.shape_cast %1 : vector<1x512x128xbf16> to vector<512x128xbf16>
    %c0_4 = arith.constant 0 : index
    %c0_5 = arith.constant 0 : index
    %3 = vector.load %arg2[%c0_4, %c0_5] : memref<128x128xbf16, #tpu.memory_space<vmem>>, vector<128x128xbf16>
    %cst = arith.constant dense<0.000000e+00> : vector<512x128xf32>
    %4 = tpu.matmul %2, %3, %cst {dimension_numbers = #tpu.dot_dimension_numbers<[1], [0], [0], [1], [0, 0, 1, 1], [], []>} : vector<512x128xbf16>, vector<128x128xbf16>, vector<512x128xf32> -> vector<512x128xf32>
    %5 = vector.extract_strided_slice %0 {offsets = [0, 0], sizes = [1, 128], strides = [1, 1]} : vector<8x128xf32> to vector<1x128xf32>
    %6 = vector.broadcast %5 : vector<1x128xf32> to vector<512x128xf32>
    %7 = arith.addf %4, %6 : vector<512x128xf32>
    %cst_6 = arith.constant 0.000000e+00 : f32
    %8 = vector.broadcast %cst_6 : f32 to vector<512x128xf32>
    %9 = arith.maximumf %7, %8 : vector<512x128xf32>
    %10 = vector.extract_strided_slice %0 {offsets = [1, 0], sizes = [1, 128], strides = [1, 1]} : vector<8x128xf32> to vector<1x128xf32>
    %11 = vector.broadcast %10 : vector<1x128xf32> to vector<512x128xf32>
    %12 = arith.mulf %9, %11 : vector<512x128xf32>
    %13 = vector.extract_strided_slice %0 {offsets = [2, 0], sizes = [1, 128], strides = [1, 1]} : vector<8x128xf32> to vector<1x128xf32>
    %14 = vector.broadcast %13 : vector<1x128xf32> to vector<512x128xf32>
    %15 = arith.addf %12, %14 : vector<512x128xf32>
    %16 = arith.truncf %15 : vector<512x128xf32> to vector<512x128xbf16>
    %c0_7 = arith.constant 0 : index
    %c0_8 = arith.constant 0 : index
    %c0_9 = arith.constant 0 : index
    %17 = vector.load %arg3[%c0_7, %c0_8, %c0_9] : memref<8x64x512xbf16, #tpu.memory_space<vmem>>, vector<1x64x512xbf16>
    %18 = vector.shape_cast %17 : vector<1x64x512xbf16> to vector<64x512xbf16>
    %cst_10 = arith.constant dense<0.000000e+00> : vector<64x128xf32>
    %19 = tpu.matmul %18, %16, %cst_10 {dimension_numbers = #tpu.dot_dimension_numbers<[1], [0], [0], [1], [0, 0, 1, 1], [], []>} : vector<64x512xbf16>, vector<512x128xbf16>, vector<64x128xf32> -> vector<64x128xf32>
    %c1 = arith.constant 1 : index
    %c0_11 = arith.constant 0 : index
    %c0_12 = arith.constant 0 : index
    %20 = vector.load %arg3[%c1, %c0_11, %c0_12] : memref<8x64x512xbf16, #tpu.memory_space<vmem>>, vector<1x64x512xbf16>
    %21 = vector.shape_cast %20 : vector<1x64x512xbf16> to vector<64x512xbf16>
    %cst_13 = arith.constant dense<0.000000e+00> : vector<64x128xf32>
    %22 = tpu.matmul %21, %16, %cst_13 {dimension_numbers = #tpu.dot_dimension_numbers<[1], [0], [0], [1], [0, 0, 1, 1], [], []>} : vector<64x512xbf16>, vector<512x128xbf16>, vector<64x128xf32> -> vector<64x128xf32>
    %23 = arith.maximumf %19, %22 : vector<64x128xf32>
    %c2 = arith.constant 2 : index
    %c0_14 = arith.constant 0 : index
    %c0_15 = arith.constant 0 : index
    %24 = vector.load %arg3[%c2, %c0_14, %c0_15] : memref<8x64x512xbf16, #tpu.memory_space<vmem>>, vector<1x64x512xbf16>
    %25 = vector.shape_cast %24 : vector<1x64x512xbf16> to vector<64x512xbf16>
    %cst_16 = arith.constant dense<0.000000e+00> : vector<64x128xf32>
    %26 = tpu.matmul %25, %16, %cst_16 {dimension_numbers = #tpu.dot_dimension_numbers<[1], [0], [0], [1], [0, 0, 1, 1], [], []>} : vector<64x512xbf16>, vector<512x128xbf16>, vector<64x128xf32> -> vector<64x128xf32>
    %27 = arith.maximumf %23, %26 : vector<64x128xf32>
    %c3 = arith.constant 3 : index
    %c0_17 = arith.constant 0 : index
    %c0_18 = arith.constant 0 : index
    %28 = vector.load %arg3[%c3, %c0_17, %c0_18] : memref<8x64x512xbf16, #tpu.memory_space<vmem>>, vector<1x64x512xbf16>
    %29 = vector.shape_cast %28 : vector<1x64x512xbf16> to vector<64x512xbf16>
    %cst_19 = arith.constant dense<0.000000e+00> : vector<64x128xf32>
    %30 = tpu.matmul %29, %16, %cst_19 {dimension_numbers = #tpu.dot_dimension_numbers<[1], [0], [0], [1], [0, 0, 1, 1], [], []>} : vector<64x512xbf16>, vector<512x128xbf16>, vector<64x128xf32> -> vector<64x128xf32>
    %31 = arith.maximumf %27, %30 : vector<64x128xf32>
    %c4 = arith.constant 4 : index
    %c0_20 = arith.constant 0 : index
    %c0_21 = arith.constant 0 : index
    %32 = vector.load %arg3[%c4, %c0_20, %c0_21] : memref<8x64x512xbf16, #tpu.memory_space<vmem>>, vector<1x64x512xbf16>
    %33 = vector.shape_cast %32 : vector<1x64x512xbf16> to vector<64x512xbf16>
    %cst_22 = arith.constant dense<0.000000e+00> : vector<64x128xf32>
    %34 = tpu.matmul %33, %16, %cst_22 {dimension_numbers = #tpu.dot_dimension_numbers<[1], [0], [0], [1], [0, 0, 1, 1], [], []>} : vector<64x512xbf16>, vector<512x128xbf16>, vector<64x128xf32> -> vector<64x128xf32>
    %35 = arith.maximumf %31, %34 : vector<64x128xf32>
    %c5 = arith.constant 5 : index
    %c0_23 = arith.constant 0 : index
    %c0_24 = arith.constant 0 : index
    %36 = vector.load %arg3[%c5, %c0_23, %c0_24] : memref<8x64x512xbf16, #tpu.memory_space<vmem>>, vector<1x64x512xbf16>
    %37 = vector.shape_cast %36 : vector<1x64x512xbf16> to vector<64x512xbf16>
    %cst_25 = arith.constant dense<0.000000e+00> : vector<64x128xf32>
    %38 = tpu.matmul %37, %16, %cst_25 {dimension_numbers = #tpu.dot_dimension_numbers<[1], [0], [0], [1], [0, 0, 1, 1], [], []>} : vector<64x512xbf16>, vector<512x128xbf16>, vector<64x128xf32> -> vector<64x128xf32>
    %39 = arith.maximumf %35, %38 : vector<64x128xf32>
    %c6 = arith.constant 6 : index
    %c0_26 = arith.constant 0 : index
    %c0_27 = arith.constant 0 : index
    %40 = vector.load %arg3[%c6, %c0_26, %c0_27] : memref<8x64x512xbf16, #tpu.memory_space<vmem>>, vector<1x64x512xbf16>
    %41 = vector.shape_cast %40 : vector<1x64x512xbf16> to vector<64x512xbf16>
    %cst_28 = arith.constant dense<0.000000e+00> : vector<64x128xf32>
    %42 = tpu.matmul %41, %16, %cst_28 {dimension_numbers = #tpu.dot_dimension_numbers<[1], [0], [0], [1], [0, 0, 1, 1], [], []>} : vector<64x512xbf16>, vector<512x128xbf16>, vector<64x128xf32> -> vector<64x128xf32>
    %43 = arith.maximumf %39, %42 : vector<64x128xf32>
    %c7 = arith.constant 7 : index
    %c0_29 = arith.constant 0 : index
    %c0_30 = arith.constant 0 : index
    %44 = vector.load %arg3[%c7, %c0_29, %c0_30] : memref<8x64x512xbf16, #tpu.memory_space<vmem>>, vector<1x64x512xbf16>
    %45 = vector.shape_cast %44 : vector<1x64x512xbf16> to vector<64x512xbf16>
    %cst_31 = arith.constant dense<0.000000e+00> : vector<64x128xf32>
    %46 = tpu.matmul %45, %16, %cst_31 {dimension_numbers = #tpu.dot_dimension_numbers<[1], [0], [0], [1], [0, 0, 1, 1], [], []>} : vector<64x512xbf16>, vector<512x128xbf16>, vector<64x128xf32> -> vector<64x128xf32>
    %47 = arith.maximumf %43, %46 : vector<64x128xf32>
    %48 = arith.truncf %47 : vector<64x128xf32> to vector<64x128xbf16>
    %49 = vector.extract_strided_slice %48 {offsets = [0, 0], sizes = [8, 128], strides = [1, 1]} : vector<64x128xbf16> to vector<8x128xbf16>
    %c0_32 = arith.constant 0 : index
    %c0_33 = arith.constant 0 : index
    %c0_34 = arith.constant 0 : index
    %50 = vector.load %arg4[%c0_32, %c0_33, %c0_34] : memref<8x128x128xbf16, #tpu.memory_space<vmem>>, vector<1x128x128xbf16>
    %51 = vector.shape_cast %50 : vector<1x128x128xbf16> to vector<128x128xbf16>
    %cst_35 = arith.constant dense<0.000000e+00> : vector<8x128xf32>
    %52 = tpu.matmul %49, %51, %cst_35 {dimension_numbers = #tpu.dot_dimension_numbers<[1], [0], [0], [1], [0, 0, 1, 1], [], []>} : vector<8x128xbf16>, vector<128x128xbf16>, vector<8x128xf32> -> vector<8x128xf32>
    %53 = vector.extract_strided_slice %48 {offsets = [8, 0], sizes = [8, 128], strides = [1, 1]} : vector<64x128xbf16> to vector<8x128xbf16>
    %c1_36 = arith.constant 1 : index
    %c0_37 = arith.constant 0 : index
    %c0_38 = arith.constant 0 : index
    %54 = vector.load %arg4[%c1_36, %c0_37, %c0_38] : memref<8x128x128xbf16, #tpu.memory_space<vmem>>, vector<1x128x128xbf16>
    %55 = vector.shape_cast %54 : vector<1x128x128xbf16> to vector<128x128xbf16>
    %cst_39 = arith.constant dense<0.000000e+00> : vector<8x128xf32>
    %56 = tpu.matmul %53, %55, %cst_39 {dimension_numbers = #tpu.dot_dimension_numbers<[1], [0], [0], [1], [0, 0, 1, 1], [], []>} : vector<8x128xbf16>, vector<128x128xbf16>, vector<8x128xf32> -> vector<8x128xf32>
    %57 = arith.addf %52, %56 : vector<8x128xf32>
    %58 = vector.extract_strided_slice %48 {offsets = [16, 0], sizes = [8, 128], strides = [1, 1]} : vector<64x128xbf16> to vector<8x128xbf16>
    %c2_40 = arith.constant 2 : index
    %c0_41 = arith.constant 0 : index
    %c0_42 = arith.constant 0 : index
    %59 = vector.load %arg4[%c2_40, %c0_41, %c0_42] : memref<8x128x128xbf16, #tpu.memory_space<vmem>>, vector<1x128x128xbf16>
    %60 = vector.shape_cast %59 : vector<1x128x128xbf16> to vector<128x128xbf16>
    %cst_43 = arith.constant dense<0.000000e+00> : vector<8x128xf32>
    %61 = tpu.matmul %58, %60, %cst_43 {dimension_numbers = #tpu.dot_dimension_numbers<[1], [0], [0], [1], [0, 0, 1, 1], [], []>} : vector<8x128xbf16>, vector<128x128xbf16>, vector<8x128xf32> -> vector<8x128xf32>
    %62 = arith.addf %57, %61 : vector<8x128xf32>
    %63 = vector.extract_strided_slice %48 {offsets = [24, 0], sizes = [8, 128], strides = [1, 1]} : vector<64x128xbf16> to vector<8x128xbf16>
    %c3_44 = arith.constant 3 : index
    %c0_45 = arith.constant 0 : index
    %c0_46 = arith.constant 0 : index
    %64 = vector.load %arg4[%c3_44, %c0_45, %c0_46] : memref<8x128x128xbf16, #tpu.memory_space<vmem>>, vector<1x128x128xbf16>
    %65 = vector.shape_cast %64 : vector<1x128x128xbf16> to vector<128x128xbf16>
    %cst_47 = arith.constant dense<0.000000e+00> : vector<8x128xf32>
    %66 = tpu.matmul %63, %65, %cst_47 {dimension_numbers = #tpu.dot_dimension_numbers<[1], [0], [0], [1], [0, 0, 1, 1], [], []>} : vector<8x128xbf16>, vector<128x128xbf16>, vector<8x128xf32> -> vector<8x128xf32>
    %67 = arith.addf %62, %66 : vector<8x128xf32>
    %68 = vector.extract_strided_slice %48 {offsets = [32, 0], sizes = [8, 128], strides = [1, 1]} : vector<64x128xbf16> to vector<8x128xbf16>
    %c4_48 = arith.constant 4 : index
    %c0_49 = arith.constant 0 : index
    %c0_50 = arith.constant 0 : index
    %69 = vector.load %arg4[%c4_48, %c0_49, %c0_50] : memref<8x128x128xbf16, #tpu.memory_space<vmem>>, vector<1x128x128xbf16>
    %70 = vector.shape_cast %69 : vector<1x128x128xbf16> to vector<128x128xbf16>
    %cst_51 = arith.constant dense<0.000000e+00> : vector<8x128xf32>
    %71 = tpu.matmul %68, %70, %cst_51 {dimension_numbers = #tpu.dot_dimension_numbers<[1], [0], [0], [1], [0, 0, 1, 1], [], []>} : vector<8x128xbf16>, vector<128x128xbf16>, vector<8x128xf32> -> vector<8x128xf32>
    %72 = arith.addf %67, %71 : vector<8x128xf32>
    %73 = vector.extract_strided_slice %48 {offsets = [40, 0], sizes = [8, 128], strides = [1, 1]} : vector<64x128xbf16> to vector<8x128xbf16>
    %c5_52 = arith.constant 5 : index
    %c0_53 = arith.constant 0 : index
    %c0_54 = arith.constant 0 : index
    %74 = vector.load %arg4[%c5_52, %c0_53, %c0_54] : memref<8x128x128xbf16, #tpu.memory_space<vmem>>, vector<1x128x128xbf16>
    %75 = vector.shape_cast %74 : vector<1x128x128xbf16> to vector<128x128xbf16>
    %cst_55 = arith.constant dense<0.000000e+00> : vector<8x128xf32>
    %76 = tpu.matmul %73, %75, %cst_55 {dimension_numbers = #tpu.dot_dimension_numbers<[1], [0], [0], [1], [0, 0, 1, 1], [], []>} : vector<8x128xbf16>, vector<128x128xbf16>, vector<8x128xf32> -> vector<8x128xf32>
    %77 = arith.addf %72, %76 : vector<8x128xf32>
    %78 = vector.extract_strided_slice %48 {offsets = [48, 0], sizes = [8, 128], strides = [1, 1]} : vector<64x128xbf16> to vector<8x128xbf16>
    %c6_56 = arith.constant 6 : index
    %c0_57 = arith.constant 0 : index
    %c0_58 = arith.constant 0 : index
    %79 = vector.load %arg4[%c6_56, %c0_57, %c0_58] : memref<8x128x128xbf16, #tpu.memory_space<vmem>>, vector<1x128x128xbf16>
    %80 = vector.shape_cast %79 : vector<1x128x128xbf16> to vector<128x128xbf16>
    %cst_59 = arith.constant dense<0.000000e+00> : vector<8x128xf32>
    %81 = tpu.matmul %78, %80, %cst_59 {dimension_numbers = #tpu.dot_dimension_numbers<[1], [0], [0], [1], [0, 0, 1, 1], [], []>} : vector<8x128xbf16>, vector<128x128xbf16>, vector<8x128xf32> -> vector<8x128xf32>
    %82 = arith.addf %77, %81 : vector<8x128xf32>
    %83 = vector.extract_strided_slice %48 {offsets = [56, 0], sizes = [8, 128], strides = [1, 1]} : vector<64x128xbf16> to vector<8x128xbf16>
    %c7_60 = arith.constant 7 : index
    %c0_61 = arith.constant 0 : index
    %c0_62 = arith.constant 0 : index
    %84 = vector.load %arg4[%c7_60, %c0_61, %c0_62] : memref<8x128x128xbf16, #tpu.memory_space<vmem>>, vector<1x128x128xbf16>
    %85 = vector.shape_cast %84 : vector<1x128x128xbf16> to vector<128x128xbf16>
    %cst_63 = arith.constant dense<0.000000e+00> : vector<8x128xf32>
    %86 = tpu.matmul %83, %85, %cst_63 {dimension_numbers = #tpu.dot_dimension_numbers<[1], [0], [0], [1], [0, 0, 1, 1], [], []>} : vector<8x128xbf16>, vector<128x128xbf16>, vector<8x128xf32> -> vector<8x128xf32>
    %87 = arith.addf %82, %86 : vector<8x128xf32>
    %88 = vector.extract_strided_slice %0 {offsets = [3, 0], sizes = [1, 128], strides = [1, 1]} : vector<8x128xf32> to vector<1x128xf32>
    %89 = vector.broadcast %88 : vector<1x128xf32> to vector<8x128xf32>
    %90 = arith.addf %87, %89 : vector<8x128xf32>
    %cst_64 = arith.constant 0.000000e+00 : f32
    %91 = vector.broadcast %cst_64 : f32 to vector<8x128xf32>
    %92 = arith.cmpf oge, %90, %91 : vector<8x128xf32>
    %cst_65 = arith.constant 0.00999999977 : f32
    %93 = vector.broadcast %cst_65 : f32 to vector<8x128xf32>
    %94 = arith.mulf %93, %90 : vector<8x128xf32>
    %95 = arith.select %92, %90, %94 : vector<8x128xi1>, vector<8x128xf32>
    %96 = arith.truncf %95 : vector<8x128xf32> to vector<8x128xbf16>
    %97 = vector.extract_strided_slice %96 {offsets = [0, 0], sizes = [1, 128], strides = [1, 1]} : vector<8x128xbf16> to vector<1x128xbf16>
    %c0_66 = arith.constant 0 : index
    %c0_67 = arith.constant 0 : index
    %c0_68 = arith.constant 0 : index
    %98 = vector.load %arg5[%c0_66, %c0_67, %c0_68] : memref<8x128x128xbf16, #tpu.memory_space<vmem>>, vector<1x128x128xbf16>
    %99 = vector.shape_cast %98 : vector<1x128x128xbf16> to vector<128x128xbf16>
    %cst_69 = arith.constant dense<0.000000e+00> : vector<1x128xf32>
    %100 = tpu.matmul %97, %99, %cst_69 {dimension_numbers = #tpu.dot_dimension_numbers<[1], [0], [0], [1], [0, 0, 1, 1], [], []>} : vector<1x128xbf16>, vector<128x128xbf16>, vector<1x128xf32> -> vector<1x128xf32>
    %101 = vector.extract_strided_slice %96 {offsets = [1, 0], sizes = [1, 128], strides = [1, 1]} : vector<8x128xbf16> to vector<1x128xbf16>
    %c1_70 = arith.constant 1 : index
    %c0_71 = arith.constant 0 : index
    %c0_72 = arith.constant 0 : index
    %102 = vector.load %arg5[%c1_70, %c0_71, %c0_72] : memref<8x128x128xbf16, #tpu.memory_space<vmem>>, vector<1x128x128xbf16>
    %103 = vector.shape_cast %102 : vector<1x128x128xbf16> to vector<128x128xbf16>
    %cst_73 = arith.constant dense<0.000000e+00> : vector<1x128xf32>
    %104 = tpu.matmul %101, %103, %cst_73 {dimension_numbers = #tpu.dot_dimension_numbers<[1], [0], [0], [1], [0, 0, 1, 1], [], []>} : vector<1x128xbf16>, vector<128x128xbf16>, vector<1x128xf32> -> vector<1x128xf32>
    %105 = arith.addf %100, %104 : vector<1x128xf32>
    %106 = vector.extract_strided_slice %96 {offsets = [2, 0], sizes = [1, 128], strides = [1, 1]} : vector<8x128xbf16> to vector<1x128xbf16>
    %c2_74 = arith.constant 2 : index
    %c0_75 = arith.constant 0 : index
    %c0_76 = arith.constant 0 : index
    %107 = vector.load %arg5[%c2_74, %c0_75, %c0_76] : memref<8x128x128xbf16, #tpu.memory_space<vmem>>, vector<1x128x128xbf16>
    %108 = vector.shape_cast %107 : vector<1x128x128xbf16> to vector<128x128xbf16>
    %cst_77 = arith.constant dense<0.000000e+00> : vector<1x128xf32>
    %109 = tpu.matmul %106, %108, %cst_77 {dimension_numbers = #tpu.dot_dimension_numbers<[1], [0], [0], [1], [0, 0, 1, 1], [], []>} : vector<1x128xbf16>, vector<128x128xbf16>, vector<1x128xf32> -> vector<1x128xf32>
    %110 = arith.addf %105, %109 : vector<1x128xf32>
    %111 = vector.extract_strided_slice %96 {offsets = [3, 0], sizes = [1, 128], strides = [1, 1]} : vector<8x128xbf16> to vector<1x128xbf16>
    %c3_78 = arith.constant 3 : index
    %c0_79 = arith.constant 0 : index
    %c0_80 = arith.constant 0 : index
    %112 = vector.load %arg5[%c3_78, %c0_79, %c0_80] : memref<8x128x128xbf16, #tpu.memory_space<vmem>>, vector<1x128x128xbf16>
    %113 = vector.shape_cast %112 : vector<1x128x128xbf16> to vector<128x128xbf16>
    %cst_81 = arith.constant dense<0.000000e+00> : vector<1x128xf32>
    %114 = tpu.matmul %111, %113, %cst_81 {dimension_numbers = #tpu.dot_dimension_numbers<[1], [0], [0], [1], [0, 0, 1, 1], [], []>} : vector<1x128xbf16>, vector<128x128xbf16>, vector<1x128xf32> -> vector<1x128xf32>
    %115 = arith.addf %110, %114 : vector<1x128xf32>
    %116 = vector.extract_strided_slice %96 {offsets = [4, 0], sizes = [1, 128], strides = [1, 1]} : vector<8x128xbf16> to vector<1x128xbf16>
    %c4_82 = arith.constant 4 : index
    %c0_83 = arith.constant 0 : index
    %c0_84 = arith.constant 0 : index
    %117 = vector.load %arg5[%c4_82, %c0_83, %c0_84] : memref<8x128x128xbf16, #tpu.memory_space<vmem>>, vector<1x128x128xbf16>
    %118 = vector.shape_cast %117 : vector<1x128x128xbf16> to vector<128x128xbf16>
    %cst_85 = arith.constant dense<0.000000e+00> : vector<1x128xf32>
    %119 = tpu.matmul %116, %118, %cst_85 {dimension_numbers = #tpu.dot_dimension_numbers<[1], [0], [0], [1], [0, 0, 1, 1], [], []>} : vector<1x128xbf16>, vector<128x128xbf16>, vector<1x128xf32> -> vector<1x128xf32>
    %120 = arith.addf %115, %119 : vector<1x128xf32>
    %121 = vector.extract_strided_slice %96 {offsets = [5, 0], sizes = [1, 128], strides = [1, 1]} : vector<8x128xbf16> to vector<1x128xbf16>
    %c5_86 = arith.constant 5 : index
    %c0_87 = arith.constant 0 : index
    %c0_88 = arith.constant 0 : index
    %122 = vector.load %arg5[%c5_86, %c0_87, %c0_88] : memref<8x128x128xbf16, #tpu.memory_space<vmem>>, vector<1x128x128xbf16>
    %123 = vector.shape_cast %122 : vector<1x128x128xbf16> to vector<128x128xbf16>
    %cst_89 = arith.constant dense<0.000000e+00> : vector<1x128xf32>
    %124 = tpu.matmul %121, %123, %cst_89 {dimension_numbers = #tpu.dot_dimension_numbers<[1], [0], [0], [1], [0, 0, 1, 1], [], []>} : vector<1x128xbf16>, vector<128x128xbf16>, vector<1x128xf32> -> vector<1x128xf32>
    %125 = arith.addf %120, %124 : vector<1x128xf32>
    %126 = vector.extract_strided_slice %96 {offsets = [6, 0], sizes = [1, 128], strides = [1, 1]} : vector<8x128xbf16> to vector<1x128xbf16>
    %c6_90 = arith.constant 6 : index
    %c0_91 = arith.constant 0 : index
    %c0_92 = arith.constant 0 : index
    %127 = vector.load %arg5[%c6_90, %c0_91, %c0_92] : memref<8x128x128xbf16, #tpu.memory_space<vmem>>, vector<1x128x128xbf16>
    %128 = vector.shape_cast %127 : vector<1x128x128xbf16> to vector<128x128xbf16>
    %cst_93 = arith.constant dense<0.000000e+00> : vector<1x128xf32>
    %129 = tpu.matmul %126, %128, %cst_93 {dimension_numbers = #tpu.dot_dimension_numbers<[1], [0], [0], [1], [0, 0, 1, 1], [], []>} : vector<1x128xbf16>, vector<128x128xbf16>, vector<1x128xf32> -> vector<1x128xf32>
    %130 = arith.addf %125, %129 : vector<1x128xf32>
    %131 = vector.extract_strided_slice %96 {offsets = [7, 0], sizes = [1, 128], strides = [1, 1]} : vector<8x128xbf16> to vector<1x128xbf16>
    %c7_94 = arith.constant 7 : index
    %c0_95 = arith.constant 0 : index
    %c0_96 = arith.constant 0 : index
    %132 = vector.load %arg5[%c7_94, %c0_95, %c0_96] : memref<8x128x128xbf16, #tpu.memory_space<vmem>>, vector<1x128x128xbf16>
    %133 = vector.shape_cast %132 : vector<1x128x128xbf16> to vector<128x128xbf16>
    %cst_97 = arith.constant dense<0.000000e+00> : vector<1x128xf32>
    %134 = tpu.matmul %131, %133, %cst_97 {dimension_numbers = #tpu.dot_dimension_numbers<[1], [0], [0], [1], [0, 0, 1, 1], [], []>} : vector<1x128xbf16>, vector<128x128xbf16>, vector<1x128xf32> -> vector<1x128xf32>
    %135 = arith.addf %130, %134 : vector<1x128xf32>
    %136 = vector.extract_strided_slice %0 {offsets = [4, 0], sizes = [1, 128], strides = [1, 1]} : vector<8x128xf32> to vector<1x128xf32>
    %137 = arith.addf %135, %136 : vector<1x128xf32>
    %cst_98 = arith.constant 0.000000e+00 : f32
    %138 = vector.broadcast %cst_98 : f32 to vector<1x128xf32>
    %139 = arith.maximumf %137, %138 : vector<1x128xf32>
    %140 = vector.extract_strided_slice %0 {offsets = [5, 0], sizes = [1, 128], strides = [1, 1]} : vector<8x128xf32> to vector<1x128xf32>
    %141 = arith.mulf %139, %140 : vector<1x128xf32>
    %cst_99 = arith.constant dense<0.000000e+00> : vector<1xf32>
    %142 = vector.multi_reduction <add>, %141, %cst_99 [1] : vector<1x128xf32> to vector<1xf32>
    %143 = vector.shape_cast %142 : vector<1xf32> to vector<1x1xf32>
    %144 = vector.extract_strided_slice %0 {offsets = [6, 0], sizes = [1, 128], strides = [1, 1]} : vector<8x128xf32> to vector<1x128xf32>
    %145 = vector.broadcast %143 : vector<1x1xf32> to vector<1x128xf32>
    %146 = arith.addf %145, %144 : vector<1x128xf32>
    %147 = vector.shape_cast %146 : vector<1x128xf32> to vector<1x1x128xf32>
    %148 = vector.broadcast %147 : vector<1x1x128xf32> to vector<1x8x128xf32>
    %c0_100 = arith.constant 0 : index
    %c0_101 = arith.constant 0 : index
    %c0_102 = arith.constant 0 : index
    %149 = vector.load %arg7[%c0_100, %c0_101, %c0_102] : memref<1x8x128xf32, #tpu.memory_space<vmem>>, vector<1x8x128xf32>
    tpu.vector_store %arg7[%c0_100, %c0_101, %c0_102], %148 {strides = array<i32>} : memref<1x8x128xf32, #tpu.memory_space<vmem>>, vector<1x8x128xf32>,
    return
  }
  func.func @transform_0(%arg0: i32) -> (i32, i32, i32) {
    %c0_i32 = arith.constant 0 : i32
    %c0_i32_0 = arith.constant 0 : i32
    %c0_i32_1 = arith.constant 0 : i32
    return %arg0, %c0_i32, %c0_i32_0 : i32, i32, i32
  }
  func.func @transform_1(%arg0: i32) -> (i32, i32) {
    %c0_i32 = arith.constant 0 : i32
    %c0_i32_0 = arith.constant 0 : i32
    %c0_i32_1 = arith.constant 0 : i32
    return %c0_i32, %c0_i32_0 : i32, i32
  }
  func.func @transform_2(%arg0: i32) -> (i32, i32, i32) {
    %c0_i32 = arith.constant 0 : i32
    %c0_i32_0 = arith.constant 0 : i32
    %c0_i32_1 = arith.constant 0 : i32
    %c0_i32_2 = arith.constant 0 : i32
    return %c0_i32, %c0_i32_0, %c0_i32_1 : i32, i32, i32
  }
  func.func @transform_3(%arg0: i32) -> (i32, i32, i32) {
    %c0_i32 = arith.constant 0 : i32
    %c0_i32_0 = arith.constant 0 : i32
    %c0_i32_1 = arith.constant 0 : i32
    %c0_i32_2 = arith.constant 0 : i32
    return %c0_i32, %c0_i32_0, %c0_i32_1 : i32, i32, i32
  }
  func.func @transform_4(%arg0: i32) -> (i32, i32, i32) {
    %c0_i32 = arith.constant 0 : i32
    %c0_i32_0 = arith.constant 0 : i32
    %c0_i32_1 = arith.constant 0 : i32
    %c0_i32_2 = arith.constant 0 : i32
    return %c0_i32, %c0_i32_0, %c0_i32_1 : i32, i32, i32
  }
  func.func @transform_5(%arg0: i32) -> (i32, i32) {
    %c0_i32 = arith.constant 0 : i32
    %c0_i32_0 = arith.constant 0 : i32
    %c0_i32_1 = arith.constant 0 : i32
    return %c0_i32, %c0_i32_0 : i32, i32
  }
  func.func @transform_6(%arg0: i32) -> (i32, i32, i32) {
    %c0_i32 = arith.constant 0 : i32
    %c0_i32_0 = arith.constant 0 : i32
    %c0_i32_1 = arith.constant 0 : i32
    return %arg0, %c0_i32, %c0_i32_0 : i32, i32, i32
  }
}

</mosaic_0001>

<llo_original>
// kernel: forward.1
$region0: #{forward.1}
  #allocation0 [shape = 'u32[]', space=smem, size = 0x4, offset = 0x4, fixed_abs, tag = 'smem constant byte address 0x4 - core index']
  #allocation1 [shape = 'u32[144,128]{1,0:T(1,128)}', space=vmem, size = 0x12000, scoped, tag = 'internal scratch']
  %s0 = inlined_call_operand.vmem [shape: bf16[2,512,128], index: 0, kind: input, shape index: {}]
  %s1 = inlined_call_operand.vmem [shape: bf16[128,128], index: 1, kind: input, shape index: {}]
  %s2 = inlined_call_operand.vmem [shape: bf16[8,64,512], index: 2, kind: input, shape index: {}]
  %s3 = inlined_call_operand.vmem [shape: bf16[8,128,128], index: 3, kind: input, shape index: {}]
  %s4 = inlined_call_operand.vmem [shape: bf16[8,128,128], index: 4, kind: input, shape index: {}]
  %s5 = inlined_call_operand.vmem [shape: f32[8,128], index: 5, kind: input, shape index: {}]
  %s6 = inlined_call_operand.vmem [shape: f32[2,8,128], index: 6, kind: output, shape index: {}]
  %s7 = sld [smem:[#allocation0]]
  $region57: #{forward.1} parent=0
    _
  %s9 = ssub.s32 1, %s7
  %s10 = scalar_select 0, %s9, %s7
  loop: start=0, step=1, limit=4
  $region2: #{forward.1} parent=0 // loop_pre_header
    _
  $region3: #{forward.1} parent=0 // loop_header
    %s12 = sphi 0, %s16
    %p13 = scmp.ge.s32.totalorder %s12, 4
    %s22 = sphi 0, %s24
    %s25 = sphi 0, %s22
    %s26 = sphi 0, %s25
    %s42 = sphi 0, %s26
    %s46 = sphi 0, %s46
    %s48 = sphi 0, %s46
    %s49 = sphi 0, %s48
    %s63 = sphi 0, %s49
    %s67 = sphi 0, %s67
    %s69 = sphi 0, %s67
    %s70 = sphi 0, %s69
    %s84 = sphi 0, %s70
    %s88 = sphi 0, %s88
    %s90 = sphi 0, %s88
    %s91 = sphi 0, %s90
    %s105 = sphi 0, %s91
    %s109 = sphi 0, %s109
    %s111 = sphi 0, %s109
    %s112 = sphi 0, %s111
    %s126 = sphi 0, %s112
    %s130 = sphi 0, %s130
    %s132 = sphi 0, %s130
    %s133 = sphi 0, %s132
    %s147 = sphi 0, %s133
    %s153 = sphi 0, %s155
    %s156 = sphi 0, %s153
    %s157 = sphi 0, %s156
    %s173 = sphi 0, %s157
  $region4: #{forward.1} parent=0 // loop_header_branch
    %15 = sbr.rel (%p13) target = $region8
  $region5: #{forward.1} parent=0 // loop_body
    %s17 = ssub.s32 %s12, 1
    %s18 = ssub.s32 %s12, 2
    %s19 = sadd.s32 %s12, 1
    %s20 = ssub.s32 %s12, %s19
    %p21 = scmp.eq.s32.totalorder %s20, 0
    %s23 = sadd.s32 %s22, 1
    %s24 = scalar_select %p21, %s22, %s23
    %p27 = pneg %p21
    %p28 = scmp.eq.s32.totalorder %s12, 1
    %p29 = por %p27, %p28
    %p30 = scmp.ne.s32.totalorder %s22, %s25
    %p31 = scmp.eq.s32.totalorder %s12, 0
    %p32 = por %p30, %p31
    %p33 = scmp.ne.s32.totalorder %s22, %s25
    %p34 = scmp.eq.s32.totalorder %s17, 1
    %p35 = por %p33, %p34
    %p36 = scmp.ne.s32.totalorder %s25, %s26
    %p37 = scmp.eq.s32.totalorder %s17, 0
    %p38 = por %p36, %p37
    %p39 = scmp.ne.s32.totalorder %s25, %s26
    %p40 = scmp.eq.s32.totalorder %s18, 1
    %p41 = por %p39, %p40
    %p43 = scmp.ne.s32.totalorder %s26, %s42
    %p44 = scmp.eq.s32.totalorder %s18, 0
    %p45 = por %p43, %p44
    %s47 = sadd.s32 %s46, 1
    %p50 = scmp.eq.s32.totalorder %s12, 1
    %p51 = scmp.ne.s32.totalorder %s46, %s48
    %p52 = scmp.eq.s32.totalorder %s12, 0
    %p53 = por %p51, %p52
    %p54 = scmp.ne.s32.totalorder %s46, %s48
    %p55 = scmp.eq.s32.totalorder %s17, 1
    %p56 = por %p54, %p55
    %p57 = scmp.ne.s32.totalorder %s48, %s49
    %p58 = scmp.eq.s32.totalorder %s17, 0
    %p59 = por %p57, %p58
    %p60 = scmp.ne.s32.totalorder %s48, %s49
    %p61 = scmp.eq.s32.totalorder %s18, 1
    %p62 = por %p60, %p61
    %p64 = scmp.ne.s32.totalorder %s49, %s63
    %p65 = scmp.eq.s32.totalorder %s18, 0
    %p66 = por %p64, %p65
    %s68 = sadd.s32 %s67, 1
    %p71 = scmp.eq.s32.totalorder %s12, 1
    %p72 = scmp.ne.s32.totalorder %s67, %s69
    %p73 = scmp.eq.s32.totalorder %s12, 0
    %p74 = por %p72, %p73
    %p75 = scmp.ne.s32.totalorder %s67, %s69
    %p76 = scmp.eq.s32.totalorder %s17, 1
    %p77 = por %p75, %p76
    %p78 = scmp.ne.s32.totalorder %s69, %s70
    %p79 = scmp.eq.s32.totalorder %s17, 0
    %p80 = por %p78, %p79
    %p81 = scmp.ne.s32.totalorder %s69, %s70
    %p82 = scmp.eq.s32.totalorder %s18, 1
    %p83 = por %p81, %p82
    %p85 = scmp.ne.s32.totalorder %s70, %s84
    %p86 = scmp.eq.s32.totalorder %s18, 0
    %p87 = por %p85, %p86
    %s89 = sadd.s32 %s88, 1
    %p92 = scmp.eq.s32.totalorder %s12, 1
    %p93 = scmp.ne.s32.totalorder %s88, %s90
    %p94 = scmp.eq.s32.totalorder %s12, 0
    %p95 = por %p93, %p94
    %p96 = scmp.ne.s32.totalorder %s88, %s90
    %p97 = scmp.eq.s32.totalorder %s17, 1
    %p98 = por %p96, %p97
    %p99 = scmp.ne.s32.totalorder %s90, %s91
    %p100 = scmp.eq.s32.totalorder %s17, 0
    %p101 = por %p99, %p100
    %p102 = scmp.ne.s32.totalorder %s90, %s91
    %p103 = scmp.eq.s32.totalorder %s18, 1
    %p104 = por %p102, %p103
    %p106 = scmp.ne.s32.totalorder %s91, %s105
    %p107 = scmp.eq.s32.totalorder %s18, 0
    %p108 = por %p106, %p107
    %s110 = sadd.s32 %s109, 1
    %p113 = scmp.eq.s32.totalorder %s12, 1
    %p114 = scmp.ne.s32.totalorder %s109, %s111
    %p115 = scmp.eq.s32.totalorder %s12, 0
    %p116 = por %p114, %p115
    %p117 = scmp.ne.s32.totalorder %s109, %s111
    %p118 = scmp.eq.s32.totalorder %s17, 1
    %p119 = por %p117, %p118
    %p120 = scmp.ne.s32.totalorder %s111, %s112
    %p121 = scmp.eq.s32.totalorder %s17, 0
    %p122 = por %p120, %p121
    %p123 = scmp.ne.s32.totalorder %s111, %s112
    %p124 = scmp.eq.s32.totalorder %s18, 1
    %p125 = por %p123, %p124
    %p127 = scmp.ne.s32.totalorder %s112, %s126
    %p128 = scmp.eq.s32.totalorder %s18, 0
    %p129 = por %p127, %p128
    %s131 = sadd.s32 %s130, 1
    %p134 = scmp.eq.s32.totalorder %s12, 1
    %p135 = scmp.ne.s32.totalorder %s130, %s132
    %p136 = scmp.eq.s32.totalorder %s12, 0
    %p137 = por %p135, %p136
    %p138 = scmp.ne.s32.totalorder %s130, %s132
    %p139 = scmp.eq.s32.totalorder %s17, 1
    %p140 = por %p138, %p139
    %p141 = scmp.ne.s32.totalorder %s132, %s133
    %p142 = scmp.eq.s32.totalorder %s17, 0
    %p143 = por %p141, %p142
    %p144 = scmp.ne.s32.totalorder %s132, %s133
    %p145 = scmp.eq.s32.totalorder %s18, 1
    %p146 = por %p144, %p145
    %p148 = scmp.ne.s32.totalorder %s133, %s147
    %p149 = scmp.eq.s32.totalorder %s18, 0
    %p150 = por %p148, %p149
    %s151 = ssub.s32 %s12, %s19
    %p152 = scmp.eq.s32.totalorder %s151, 0
    %s154 = sadd.s32 %s153, 1
    %s155 = scalar_select %p152, %s153, %s154
    %p158 = pneg %p152
    %p159 = scmp.eq.s32.totalorder %s12, 1
    %p160 = por %p158, %p159
    %p161 = scmp.ne.s32.totalorder %s153, %s156
    %p162 = scmp.eq.s32.totalorder %s12, 0
    %p163 = por %p161, %p162
    %p164 = scmp.ne.s32.totalorder %s153, %s156
    %p165 = scmp.eq.s32.totalorder %s17, 1
    %p166 = por %p164, %p165
    %p167 = scmp.ne.s32.totalorder %s156, %s157
    %p168 = scmp.eq.s32.totalorder %s17, 0
    %p169 = por %p167, %p168
    %p170 = scmp.ne.s32.totalorder %s156, %s157
    %p171 = scmp.eq.s32.totalorder %s18, 1
    %p172 = por %p170, %p171
    %p174 = scmp.ne.s32.totalorder %s157, %s173
    %p175 = scmp.eq.s32.totalorder %s18, 0
    %p176 = por %p174, %p175
    %p177 = scmp.le.s32.totalorder 1, %s12
    %p178 = scmp.lt.s32.totalorder %s12, 3
    %p179 = pnand %p177, %p178
    %p180 = pneg %p179
    // Predicated region
    $region9: #{forward.1} parent=5 // pred_check
      _
    $region10: #{forward.1} parent=5 // pred_check_branch
      %182 = sbr.rel (%p179) target = $region12
    $region11: #{forward.1} parent=5 // pred_region
      %s183 = ssub.s32 %s12, 1
      // Predicated region
      $region13: #{forward.1} parent=11 // pred_check
        %p184 = pneg %p59
      $region14: #{forward.1} parent=11 // pred_check_branch
        %186 = sbr.rel (%p184) target = $region16
      $region15: #{forward.1} parent=11 // pred_region
        _
      $region16: #{forward.1} parent=11 // pred_fallthru
        _
      // Predicated region
      $region17: #{forward.1} parent=11 // pred_check
        %p187 = pneg %p80
      $region18: #{forward.1} parent=11 // pred_check_branch
        %189 = sbr.rel (%p187) target = $region20
      $region19: #{forward.1} parent=11 // pred_region
        _
      $region20: #{forward.1} parent=11 // pred_fallthru
        _
      // Predicated region
      $region21: #{forward.1} parent=11 // pred_check
        %p190 = pneg %p101
      $region22: #{forward.1} parent=11 // pred_check_branch
        %192 = sbr.rel (%p190) target = $region24
      $region23: #{forward.1} parent=11 // pred_region
        _
      $region24: #{forward.1} parent=11 // pred_fallthru
        _
      // Predicated region
      $region25: #{forward.1} parent=11 // pred_check
        %p193 = pneg %p122
      $region26: #{forward.1} parent=11 // pred_check_branch
        %195 = sbr.rel (%p193) target = $region28
      $region27: #{forward.1} parent=11 // pred_region
        _
      $region28: #{forward.1} parent=11 // pred_fallthru
        _
      // Predicated region
      $region29: #{forward.1} parent=11 // pred_check
        %p196 = pneg %p143
      $region30: #{forward.1} parent=11 // pred_check_branch
        %198 = sbr.rel (%p196) target = $region32
      $region31: #{forward.1} parent=11 // pred_region
        _
      $region32: #{forward.1} parent=11 // pred_fallthru
        _
    $region12: #{forward.1} parent=5 // pred_fallthru
      _
    %p199 = scmp.lt.s32.totalorder %s12, 2
    // Predicated region
    $region33: #{forward.1} parent=5 // pred_check
      %p200 = pneg %p199
    $region34: #{forward.1} parent=5 // pred_check_branch
      %202 = sbr.rel (%p200) target = $region36
    $region35: #{forward.1} parent=5 // pred_region
      // Predicated region
      $region37: #{forward.1} parent=35 // pred_check
        %p203 = pneg %p32
      $region38: #{forward.1} parent=35 // pred_check_branch
        %205 = sbr.rel (%p203) target = $region40
      $region39: #{forward.1} parent=35 // pred_region
        %p206 = scmp.lt.s32.totalorder %s12, 1
        %s207 = scalar_select %p206, %s12, 1
        %s208 = smul.addr %s207, 64
        %s209 = smul.addr %s208, 4
        %s210 = scalar_lea.vmem %s0, %s209
      $region40: #{forward.1} parent=35 // pred_fallthru
        _
    $region36: #{forward.1} parent=5 // pred_fallthru
      _
    %p211 = scmp.le.s32.totalorder 1, %s12
    %p212 = scmp.lt.s32.totalorder %s12, 3
    %p213 = pnand %p211, %p212
    %p214 = pneg %p213
    // Predicated region
    $region41: #{forward.1} parent=5 // pred_check
      _
    $region42: #{forward.1} parent=5 // pred_check_branch
      %216 = sbr.rel (%p213) target = $region44
    $region43: #{forward.1} parent=5 // pred_region
      %s217 = ssub.s32 %s12, 1
      %p218 = scmp.lt.s32.totalorder %s17, 1
      %s219 = scalar_select %p218, %s17, 1
      %s220 = smul.addr %s219, 64
      %s221 = smul.addr %s220, 4
      %s222 = scalar_lea.vmem %s0, %s221
      %p223 = pneg %p38
      %p224 = pneg %p35
      %p225 = pneg %p59
      %p226 = pneg %p56
      %p227 = pneg %p80
      %p228 = pneg %p77
      %p229 = pneg %p101
      %p230 = pneg %p98
      %p231 = pneg %p122
      %p232 = pneg %p119
      %p233 = pneg %p143
      %p234 = pneg %p140
      %p235 = pneg %p169
      %p236 = pneg %p166
      %p237 = scmp.lt.s32.totalorder %s17, 1
      %s238 = scalar_select %p237, %s17, 1
      %s239 = smul.addr %s238, 8
      %s240 = scalar_lea.vmem %s6, %s239
      %p241 = scmp.lt.s32.totalorder %s17, 1
      %s242 = scalar_select %p241, %s17, 1
      %s243 = smul.addr %s242, 64
      %s244 = smul.addr %s243, 4
      %s245 = scalar_lea.vmem %s0, %s244
      %p246 = scmp.lt.s32.totalorder %s17, 1
      %s247 = scalar_select %p246, %s17, 1
      %s248 = smul.addr %s247, 8
      %s249 = scalar_lea.vmem %s6, %s248
      %v251 = vld [vmem:[%s5] sm:$0xff]
      %v252 = vld [vmem:[%s245] sm:$0xf]
      %v253 = vld [vmem:[%s245 + $0x4] sm:$0xf]
      %v254 = vld [vmem:[%s245 + $0x8] sm:$0xf]
      %v255 = vld [vmem:[%s245 + $0xc] sm:$0xf]
      %v256 = vld [vmem:[%s245 + $0x10] sm:$0xf]
      %v257 = vld [vmem:[%s245 + $0x14] sm:$0xf]
      %v258 = vld [vmem:[%s245 + $0x18] sm:$0xf]
      %v259 = vld [vmem:[%s245 + $0x1c] sm:$0xf]
      %v260 = vld [vmem:[%s245 + $0x20] sm:$0xf]
      %v261 = vld [vmem:[%s245 + $0x24] sm:$0xf]
      %v262 = vld [vmem:[%s245 + $0x28] sm:$0xf]
      %v263 = vld [vmem:[%s245 + $0x2c] sm:$0xf]
      %v264 = vld [vmem:[%s245 + $0x30] sm:$0xf]
      %v265 = vld [vmem:[%s245 + $0x34] sm:$0xf]
      %v266 = vld [vmem:[%s245 + $0x38] sm:$0xf]
      %v267 = vld [vmem:[%s245 + $0x3c] sm:$0xf]
      %v268 = vld [vmem:[%s245 + $0x40] sm:$0xf]
      %v269 = vld [vmem:[%s245 + $0x44] sm:$0xf]
      %v270 = vld [vmem:[%s245 + $0x48] sm:$0xf]
      %v271 = vld [vmem:[%s245 + $0x4c] sm:$0xf]
      %v272 = vld [vmem:[%s245 + $0x50] sm:$0xf]
      %v273 = vld [vmem:[%s245 + $0x54] sm:$0xf]
      %v274 = vld [vmem:[%s245 + $0x58] sm:$0xf]
      %v275 = vld [vmem:[%s245 + $0x5c] sm:$0xf]
      %v276 = vld [vmem:[%s245 + $0x60] sm:$0xf]
      %v277 = vld [vmem:[%s245 + $0x64] sm:$0xf]
      %v278 = vld [vmem:[%s245 + $0x68] sm:$0xf]
      %v279 = vld [vmem:[%s245 + $0x6c] sm:$0xf]
      %v280 = vld [vmem:[%s245 + $0x70] sm:$0xf]
      %v281 = vld [vmem:[%s245 + $0x74] sm:$0xf]
      %v282 = vld [vmem:[%s245 + $0x78] sm:$0xf]
      %v283 = vld [vmem:[%s245 + $0x7c] sm:$0xf]
      %v284 = vld [vmem:[%s245 + $0x80] sm:$0xf]
      %v285 = vld [vmem:[%s245 + $0x84] sm:$0xf]
      %v286 = vld [vmem:[%s245 + $0x88] sm:$0xf]
      %v287 = vld [vmem:[%s245 + $0x8c] sm:$0xf]
      %v288 = vld [vmem:[%s245 + $0x90] sm:$0xf]
      %v289 = vld [vmem:[%s245 + $0x94] sm:$0xf]
      %v290 = vld [vmem:[%s245 + $0x98] sm:$0xf]
      %v291 = vld [vmem:[%s245 + $0x9c] sm:$0xf]
      %v292 = vld [vmem:[%s245 + $0xa0] sm:$0xf]
      %v293 = vld [vmem:[%s245 + $0xa4] sm:$0xf]
      %v294 = vld [vmem:[%s245 + $0xa8] sm:$0xf]
      %v295 = vld [vmem:[%s245 + $0xac] sm:$0xf]
      %v296 = vld [vmem:[%s245 + $0xb0] sm:$0xf]
      %v297 = vld [vmem:[%s245 + $0xb4] sm:$0xf]
      %v298 = vld [vmem:[%s245 + $0xb8] sm:$0xf]
      %v299 = vld [vmem:[%s245 + $0xbc] sm:$0xf]
      %v300 = vld [vmem:[%s245 + $0xc0] sm:$0xf]
      %v301 = vld [vmem:[%s245 + $0xc4] sm:$0xf]
      %v302 = vld [vmem:[%s245 + $0xc8] sm:$0xf]
      %v303 = vld [vmem:[%s245 + $0xcc] sm:$0xf]
      %v304 = vld [vmem:[%s245 + $0xd0] sm:$0xf]
      %v305 = vld [vmem:[%s245 + $0xd4] sm:$0xf]
      %v306 = vld [vmem:[%s245 + $0xd8] sm:$0xf]
      %v307 = vld [vmem:[%s245 + $0xdc] sm:$0xf]
      %v308 = vld [vmem:[%s245 + $0xe0] sm:$0xf]
      %v309 = vld [vmem:[%s245 + $0xe4] sm:$0xf]
      %v310 = vld [vmem:[%s245 + $0xe8] sm:$0xf]
      %v311 = vld [vmem:[%s245 + $0xec] sm:$0xf]
      %v312 = vld [vmem:[%s245 + $0xf0] sm:$0xf]
      %v313 = vld [vmem:[%s245 + $0xf4] sm:$0xf]
      %v314 = vld [vmem:[%s245 + $0xf8] sm:$0xf]
      %v315 = vld [vmem:[%s245 + $0xfc] sm:$0xf]
      %v316 = vld [vmem:[%s1] sm:$0xf]
      %v317 = vld [vmem:[%s1 + $0x4] sm:$0xf]
      %v318 = vld [vmem:[%s1 + $0x8] sm:$0xf]
      %v319 = vld [vmem:[%s1 + $0xc] sm:$0xf]
      %v320 = vld [vmem:[%s1 + $0x10] sm:$0xf]
      %v321 = vld [vmem:[%s1 + $0x14] sm:$0xf]
      %v322 = vld [vmem:[%s1 + $0x18] sm:$0xf]
      %v323 = vld [vmem:[%s1 + $0x1c] sm:$0xf]
      %v324 = vld [vmem:[%s1 + $0x20] sm:$0xf]
      %v325 = vld [vmem:[%s1 + $0x24] sm:$0xf]
      %v326 = vld [vmem:[%s1 + $0x28] sm:$0xf]
      %v327 = vld [vmem:[%s1 + $0x2c] sm:$0xf]
      %v328 = vld [vmem:[%s1 + $0x30] sm:$0xf]
      %v329 = vld [vmem:[%s1 + $0x34] sm:$0xf]
      %v330 = vld [vmem:[%s1 + $0x38] sm:$0xf]
      %v331 = vld [vmem:[%s1 + $0x3c] sm:$0xf]
      %v332 = vlaneseq
      %v333 = vshrl.u32 %v332, 7
      %v334 = vsub.s32 0, %v333
      %v335 = vrot.slane %v251, %v334
      %v400 = vunpack.c.l.b16 %v252
      %v401 = vunpack.c.l.b16 %v253
      %v402 = vunpack.c.l.b16 %v254
      %v403 = vunpack.c.l.b16 %v255
      %v404 = vunpack.c.l.b16 %v256
      %v405 = vunpack.c.l.b16 %v257
      %v406 = vunpack.c.l.b16 %v258
      %v407 = vunpack.c.l.b16 %v259
      %v408 = vunpack.c.l.b16 %v260
      %v409 = vunpack.c.l.b16 %v261
      %v410 = vunpack.c.l.b16 %v262
      %v411 = vunpack.c.l.b16 %v263
      %v412 = vunpack.c.l.b16 %v264
      %v413 = vunpack.c.l.b16 %v265
      %v414 = vunpack.c.l.b16 %v266
      %v415 = vunpack.c.l.b16 %v267
      %v416 = vunpack.c.l.b16 %v268
      %v417 = vunpack.c.l.b16 %v269
      %v418 = vunpack.c.l.b16 %v270
      %v419 = vunpack.c.l.b16 %v271
      %v420 = vunpack.c.l.b16 %v272
      %v421 = vunpack.c.l.b16 %v273
      %v422 = vunpack.c.l.b16 %v274
      %v423 = vunpack.c.l.b16 %v275
      %v424 = vunpack.c.l.b16 %v276
      %v425 = vunpack.c.l.b16 %v277
      %v426 = vunpack.c.l.b16 %v278
      %v427 = vunpack.c.l.b16 %v279
      %v428 = vunpack.c.l.b16 %v280
      %v429 = vunpack.c.l.b16 %v281
      %v430 = vunpack.c.l.b16 %v282
      %v431 = vunpack.c.l.b16 %v283
      %v432 = vunpack.c.l.b16 %v284
      %v433 = vunpack.c.l.b16 %v285
      %v434 = vunpack.c.l.b16 %v286
      %v435 = vunpack.c.l.b16 %v287
      %v436 = vunpack.c.l.b16 %v288
      %v437 = vunpack.c.l.b16 %v289
      %v438 = vunpack.c.l.b16 %v290
      %v439 = vunpack.c.l.b16 %v291
      %v440 = vunpack.c.l.b16 %v292
      %v441 = vunpack.c.l.b16 %v293
      %v442 = vunpack.c.l.b16 %v294
      %v443 = vunpack.c.l.b16 %v295
      %v444 = vunpack.c.l.b16 %v296
      %v445 = vunpack.c.l.b16 %v297
      %v446 = vunpack.c.l.b16 %v298
      %v447 = vunpack.c.l.b16 %v299
      %v448 = vunpack.c.l.b16 %v300
      %v449 = vunpack.c.l.b16 %v301
      %v450 = vunpack.c.l.b16 %v302
      %v451 = vunpack.c.l.b16 %v303
      %v452 = vunpack.c.l.b16 %v304
      %v453 = vunpack.c.l.b16 %v305
      %v454 = vunpack.c.l.b16 %v306
      %v455 = vunpack.c.l.b16 %v307
      %v456 = vunpack.c.l.b16 %v308
      %v457 = vunpack.c.l.b16 %v309
      %v458 = vunpack.c.l.b16 %v310
      %v459 = vunpack.c.l.b16 %v311
      %v460 = vunpack.c.l.b16 %v312
      %v461 = vunpack.c.l.b16 %v313
      %v462 = vunpack.c.l.b16 %v314
      %v463 = vunpack.c.l.b16 %v315
      %v464 = vpack.c.b16 %v401, %v400
      %v465 = vpack.c.b16 %v403, %v402
      %v466 = vpack.c.b16 %v405, %v404
      %v467 = vpack.c.b16 %v407, %v406
      %v468 = vpack.c.b16 %v409, %v408
      %v469 = vpack.c.b16 %v411, %v410
      %v470 = vpack.c.b16 %v413, %v412
      %v471 = vpack.c.b16 %v415, %v414
      %v472 = vpack.c.b16 %v417, %v416
      %v473 = vpack.c.b16 %v419, %v418
      %v474 = vpack.c.b16 %v421, %v420
      %v475 = vpack.c.b16 %v423, %v422
      %v476 = vpack.c.b16 %v425, %v424
      %v477 = vpack.c.b16 %v427, %v426
      %v478 = vpack.c.b16 %v429, %v428
      %v479 = vpack.c.b16 %v431, %v430
      %v480 = vpack.c.b16 %v433, %v432
      %v481 = vpack.c.b16 %v435, %v434
      %v482 = vpack.c.b16 %v437, %v436
      %v483 = vpack.c.b16 %v439, %v438
      %v484 = vpack.c.b16 %v441, %v440
      %v485 = vpack.c.b16 %v443, %v442
      %v486 = vpack.c.b16 %v445, %v444
      %v487 = vpack.c.b16 %v447, %v446
      %v488 = vpack.c.b16 %v449, %v448
      %v489 = vpack.c.b16 %v451, %v450
      %v490 = vpack.c.b16 %v453, %v452
      %v491 = vpack.c.b16 %v455, %v454
      %v492 = vpack.c.b16 %v457, %v456
      %v493 = vpack.c.b16 %v459, %v458
      %v494 = vpack.c.b16 %v461, %v460
      %v495 = vpack.c.b16 %v463, %v462
      %v544 = vunpack.c.l.b16 %v316
      %v545 = vunpack.c.l.b16 %v317
      %v546 = vunpack.c.l.b16 %v318
      %v547 = vunpack.c.l.b16 %v319
      %v548 = vunpack.c.l.b16 %v320
      %v549 = vunpack.c.l.b16 %v321
      %v550 = vunpack.c.l.b16 %v322
      %v551 = vunpack.c.l.b16 %v323
      %v552 = vunpack.c.l.b16 %v324
      %v553 = vunpack.c.l.b16 %v325
      %v554 = vunpack.c.l.b16 %v326
      %v555 = vunpack.c.l.b16 %v327
      %v556 = vunpack.c.l.b16 %v328
      %v557 = vunpack.c.l.b16 %v329
      %v558 = vunpack.c.l.b16 %v330
      %v559 = vunpack.c.l.b16 %v331
      %v560 = vpack.c.b16 %v545, %v544
      %v561 = vpack.c.b16 %v547, %v546
      %v562 = vpack.c.b16 %v549, %v548
      %v563 = vpack.c.b16 %v551, %v550
      %v564 = vpack.c.b16 %v553, %v552
      %v565 = vpack.c.b16 %v555, %v554
      %v566 = vpack.c.b16 %v557, %v556
      %v567 = vpack.c.b16 %v559, %v558
      %576 = vmatprep.subr.bf16.mxu0 0
      %577 = vmatpush1.bf16.msra.mxu0 %v567
      %578 = vmatprep.subr.bf16.mxu0 0
      %579 = vmatpush1.bf16.msra.mxu0 %v566
      %580 = vmatprep.subr.bf16.mxu0 0
      %581 = vmatpush1.bf16.msra.mxu0 %v565
      %582 = vmatprep.subr.bf16.mxu0 0
      %583 = vmatpush1.bf16.msra.mxu0 %v564
      %584 = vmatprep.subr.bf16.mxu0 0
      %585 = vmatpush1.bf16.msra.mxu0 %v563
      %586 = vmatprep.subr.bf16.mxu0 0
      %587 = vmatpush1.bf16.msra.mxu0 %v562
      %588 = vmatprep.subr.bf16.mxu0 0
      %589 = vmatpush1.bf16.msra.mxu0 %v561
      %590 = vmatprep.subr.bf16.mxu0 0
      %591 = vmatpush1.bf16.msra.mxu0 %v560
      %592 = vmatprep.subr.bf16.mxu0 0
      %593 = vmatpush2.bf16.msra.mxu0 0
      %594 = vmatprep.subr.bf16.mxu0 0
      %595 = vmatpush2.bf16.msra.mxu0 0
      %596 = vmatprep.subr.bf16.mxu0 0
      %597 = vmatpush2.bf16.msra.mxu0 0
      %598 = vmatprep.subr.bf16.mxu0 0
      %599 = vmatpush2.bf16.msra.mxu0 0
      %600 = vmatprep.subr.bf16.mxu0 0
      %601 = vmatpush2.bf16.msra.mxu0 0
      %602 = vmatprep.subr.bf16.mxu0 0
      %603 = vmatpush2.bf16.msra.mxu0 0
      %604 = vmatprep.subr.bf16.mxu0 0
      %605 = vmatpush2.bf16.msra.mxu0 0
      %606 = vmatprep.subr.bf16.mxu0 0
      %607 = vmatpush2.bf16.msra.mxu0 0
      %608 = vmatprep.mubr.bf16.mxu0 0
      %609 = vmatmul.mubr.bf16.gmra.mxu0 %v464
      %v610 = vpop.f32.mrf.mxu0
      %v611 = vadd.f32 %v335, %v610
      %v612 = vpop.f32.mrf.mxu0
      %v613 = vpop.f32.mrf.mxu0
      %v614 = vadd.f32 %v335, %v613
      %v615 = vpop.f32.mrf.mxu0
      %616 = vmatprep.mubr.bf16.mxu0 0
      %617 = vmatmul.mubr.bf16.gmra.mxu0 %v465
      %v618 = vpop.f32.mrf.mxu0
      %v619 = vadd.f32 %v335, %v618
      %v620 = vpop.f32.mrf.mxu0
      %v621 = vpop.f32.mrf.mxu0
      %v622 = vadd.f32 %v335, %v621
      %v623 = vpop.f32.mrf.mxu0
      %624 = vmatprep.mubr.bf16.mxu0 0
      %625 = vmatmul.mubr.bf16.gmra.mxu0 %v466
      %v626 = vpop.f32.mrf.mxu0
      %v627 = vadd.f32 %v335, %v626
      %v628 = vpop.f32.mrf.mxu0
      %v629 = vpop.f32.mrf.mxu0
      %v630 = vadd.f32 %v335, %v629
      %v631 = vpop.f32.mrf.mxu0
      %632 = vmatprep.mubr.bf16.mxu0 0
      %633 = vmatmul.mubr.bf16.gmra.mxu0 %v467
      %v634 = vpop.f32.mrf.mxu0
      %v635 = vadd.f32 %v335, %v634
      %v636 = vpop.f32.mrf.mxu0
      %v637 = vpop.f32.mrf.mxu0
      %v638 = vadd.f32 %v335, %v637
      %v639 = vpop.f32.mrf.mxu0
      %640 = vmatprep.mubr.bf16.mxu0 0
      %641 = vmatmul.mubr.bf16.gmra.mxu0 %v468
      %v642 = vpop.f32.mrf.mxu0
      %v643 = vadd.f32 %v335, %v642
      %v644 = vpop.f32.mrf.mxu0
      %v645 = vpop.f32.mrf.mxu0
      %v646 = vadd.f32 %v335, %v645
      %v647 = vpop.f32.mrf.mxu0
      %648 = vmatprep.mubr.bf16.mxu0 0
      %649 = vmatmul.mubr.bf16.gmra.mxu0 %v469
      %v650 = vpop.f32.mrf.mxu0
      %v651 = vadd.f32 %v335, %v650
      %v652 = vpop.f32.mrf.mxu0
      %v653 = vpop.f32.mrf.mxu0
      %v654 = vadd.f32 %v335, %v653
      %v655 = vpop.f32.mrf.mxu0
      %656 = vmatprep.mubr.bf16.mxu0 0
      %657 = vmatmul.mubr.bf16.gmra.mxu0 %v470
      %v658 = vpop.f32.mrf.mxu0
      %v659 = vadd.f32 %v335, %v658
      %v660 = vpop.f32.mrf.mxu0
      %v661 = vpop.f32.mrf.mxu0
      %v662 = vadd.f32 %v335, %v661
      %v663 = vpop.f32.mrf.mxu0
      %664 = vmatprep.mubr.bf16.mxu0 0
      %665 = vmatmul.mubr.bf16.gmra.mxu0 %v471
      %v666 = vpop.f32.mrf.mxu0
      %v667 = vadd.f32 %v335, %v666
      %v668 = vpop.f32.mrf.mxu0
      %v669 = vpop.f32.mrf.mxu0
      %v670 = vadd.f32 %v335, %v669
      %v671 = vpop.f32.mrf.mxu0
      %672 = vmatprep.mubr.bf16.mxu0 0
      %673 = vmatmul.mubr.bf16.gmra.mxu0 %v472
      %v674 = vpop.f32.mrf.mxu0
      %v675 = vadd.f32 %v335, %v674
      %v676 = vpop.f32.mrf.mxu0
      %v677 = vpop.f32.mrf.mxu0
      %v678 = vadd.f32 %v335, %v677
      %v679 = vpop.f32.mrf.mxu0
      %680 = vmatprep.mubr.bf16.mxu0 0
      %681 = vmatmul.mubr.bf16.gmra.mxu0 %v473
      %v682 = vpop.f32.mrf.mxu0
      %v683 = vadd.f32 %v335, %v682
      %v684 = vpop.f32.mrf.mxu0
      %v685 = vpop.f32.mrf.mxu0
      %v686 = vadd.f32 %v335, %v685
      %v687 = vpop.f32.mrf.mxu0
      %688 = vmatprep.mubr.bf16.mxu0 0
      %689 = vmatmul.mubr.bf16.gmra.mxu0 %v474
      %v690 = vpop.f32.mrf.mxu0
      %v691 = vadd.f32 %v335, %v690
      %v692 = vpop.f32.mrf.mxu0
      %v693 = vpop.f32.mrf.mxu0
      %v694 = vadd.f32 %v335, %v693
      %v695 = vpop.f32.mrf.mxu0
      %696 = vmatprep.mubr.bf16.mxu0 0
      %697 = vmatmul.mubr.bf16.gmra.mxu0 %v475
      %v698 = vpop.f32.mrf.mxu0
      %v699 = vadd.f32 %v335, %v698
      %v700 = vpop.f32.mrf.mxu0
      %v701 = vpop.f32.mrf.mxu0
      %v702 = vadd.f32 %v335, %v701
      %v703 = vpop.f32.mrf.mxu0
      %704 = vmatprep.mubr.bf16.mxu0 0
      %705 = vmatmul.mubr.bf16.gmra.mxu0 %v476
      %v706 = vpop.f32.mrf.mxu0
      %v707 = vadd.f32 %v335, %v706
      %v708 = vpop.f32.mrf.mxu0
      %v709 = vpop.f32.mrf.mxu0
      %v710 = vadd.f32 %v335, %v709
      %v711 = vpop.f32.mrf.mxu0
      %712 = vmatprep.mubr.bf16.mxu0 0
      %713 = vmatmul.mubr.bf16.gmra.mxu0 %v477
      %v714 = vpop.f32.mrf.mxu0
      %v715 = vadd.f32 %v335, %v714
      %v716 = vpop.f32.mrf.mxu0
      %v717 = vpop.f32.mrf.mxu0
      %v718 = vadd.f32 %v335, %v717
      %v719 = vpop.f32.mrf.mxu0
      %720 = vmatprep.mubr.bf16.mxu0 0
      %721 = vmatmul.mubr.bf16.gmra.mxu0 %v478
      %v722 = vpop.f32.mrf.mxu0
      %v723 = vadd.f32 %v335, %v722
      %v724 = vpop.f32.mrf.mxu0
      %v725 = vpop.f32.mrf.mxu0
      %v726 = vadd.f32 %v335, %v725
      %v727 = vpop.f32.mrf.mxu0
      %728 = vmatprep.mubr.bf16.mxu0 0
      %729 = vmatmul.mubr.bf16.gmra.mxu0 %v479
      %v730 = vpop.f32.mrf.mxu0
      %v731 = vadd.f32 %v335, %v730
      %v732 = vpop.f32.mrf.mxu0
      %v733 = vpop.f32.mrf.mxu0
      %v734 = vadd.f32 %v335, %v733
      %v735 = vpop.f32.mrf.mxu0
      %736 = vmatprep.mubr.bf16.mxu0 0
      %737 = vmatmul.mubr.bf16.gmra.mxu0 %v480
      %v738 = vpop.f32.mrf.mxu0
      %v739 = vadd.f32 %v335, %v738
      %v740 = vpop.f32.mrf.mxu0
      %v741 = vpop.f32.mrf.mxu0
      %v742 = vadd.f32 %v335, %v741
      %v743 = vpop.f32.mrf.mxu0
      %744 = vmatprep.mubr.bf16.mxu0 0
      %745 = vmatmul.mubr.bf16.gmra.mxu0 %v481
      %v746 = vpop.f32.mrf.mxu0
      %v747 = vadd.f32 %v335, %v746
      %v748 = vpop.f32.mrf.mxu0
      %v749 = vpop.f32.mrf.mxu0
      %v750 = vadd.f32 %v335, %v749
      %v751 = vpop.f32.mrf.mxu0
      %752 = vmatprep.mubr.bf16.mxu0 0
      %753 = vmatmul.mubr.bf16.gmra.mxu0 %v482
      %v754 = vpop.f32.mrf.mxu0
      %v755 = vadd.f32 %v335, %v754
      %v756 = vpop.f32.mrf.mxu0
      %v757 = vpop.f32.mrf.mxu0
      %v758 = vadd.f32 %v335, %v757
      %v759 = vpop.f32.mrf.mxu0
      %760 = vmatprep.mubr.bf16.mxu0 0
      %761 = vmatmul.mubr.bf16.gmra.mxu0 %v483
      %v762 = vpop.f32.mrf.mxu0
      %v763 = vadd.f32 %v335, %v762
      %v764 = vpop.f32.mrf.mxu0
      %v765 = vpop.f32.mrf.mxu0
      %v766 = vadd.f32 %v335, %v765
      %v767 = vpop.f32.mrf.mxu0
      %768 = vmatprep.mubr.bf16.mxu0 0
      %769 = vmatmul.mubr.bf16.gmra.mxu0 %v484
      %v770 = vpop.f32.mrf.mxu0
      %v771 = vadd.f32 %v335, %v770
      %v772 = vpop.f32.mrf.mxu0
      %v773 = vpop.f32.mrf.mxu0
      %v774 = vadd.f32 %v335, %v773
      %v775 = vpop.f32.mrf.mxu0
      %776 = vmatprep.mubr.bf16.mxu0 0
      %777 = vmatmul.mubr.bf16.gmra.mxu0 %v485
      %v778 = vpop.f32.mrf.mxu0
      %v779 = vadd.f32 %v335, %v778
      %v780 = vpop.f32.mrf.mxu0
      %v781 = vpop.f32.mrf.mxu0
      %v782 = vadd.f32 %v335, %v781
      %v783 = vpop.f32.mrf.mxu0
      %784 = vmatprep.mubr.bf16.mxu0 0
      %785 = vmatmul.mubr.bf16.gmra.mxu0 %v486
      %v786 = vpop.f32.mrf.mxu0
      %v787 = vadd.f32 %v335, %v786
      %v788 = vpop.f32.mrf.mxu0
      %v789 = vpop.f32.mrf.mxu0
      %v790 = vadd.f32 %v335, %v789
      %v791 = vpop.f32.mrf.mxu0
      %792 = vmatprep.mubr.bf16.mxu0 0
      %793 = vmatmul.mubr.bf16.gmra.mxu0 %v487
      %v794 = vpop.f32.mrf.mxu0
      %v795 = vadd.f32 %v335, %v794
      %v796 = vpop.f32.mrf.mxu0
      %v797 = vpop.f32.mrf.mxu0
      %v798 = vadd.f32 %v335, %v797
      %v799 = vpop.f32.mrf.mxu0
      %800 = vmatprep.mubr.bf16.mxu0 0
      %801 = vmatmul.mubr.bf16.gmra.mxu0 %v488
      %v802 = vpop.f32.mrf.mxu0
      %v803 = vadd.f32 %v335, %v802
      %v804 = vpop.f32.mrf.mxu0
      %v805 = vpop.f32.mrf.mxu0
      %v806 = vadd.f32 %v335, %v805
      %v807 = vpop.f32.mrf.mxu0
      %808 = vmatprep.mubr.bf16.mxu0 0
      %809 = vmatmul.mubr.bf16.gmra.mxu0 %v489
      %v810 = vpop.f32.mrf.mxu0
      %v811 = vadd.f32 %v335, %v810
      %v812 = vpop.f32.mrf.mxu0
      %v813 = vpop.f32.mrf.mxu0
      %v814 = vadd.f32 %v335, %v813
      %v815 = vpop.f32.mrf.mxu0
      %816 = vmatprep.mubr.bf16.mxu0 0
      %817 = vmatmul.mubr.bf16.gmra.mxu0 %v490
      %v818 = vpop.f32.mrf.mxu0
      %v819 = vadd.f32 %v335, %v818
      %v820 = vpop.f32.mrf.mxu0
      %v821 = vpop.f32.mrf.mxu0
      %v822 = vadd.f32 %v335, %v821
      %v823 = vpop.f32.mrf.mxu0
      %824 = vmatprep.mubr.bf16.mxu0 0
      %825 = vmatmul.mubr.bf16.gmra.mxu0 %v491
      %v826 = vpop.f32.mrf.mxu0
      %v827 = vadd.f32 %v335, %v826
      %v828 = vpop.f32.mrf.mxu0
      %v829 = vpop.f32.mrf.mxu0
      %v830 = vadd.f32 %v335, %v829
      %v831 = vpop.f32.mrf.mxu0
      %832 = vmatprep.mubr.bf16.mxu0 0
      %833 = vmatmul.mubr.bf16.gmra.mxu0 %v492
      %v834 = vpop.f32.mrf.mxu0
      %v835 = vadd.f32 %v335, %v834
      %v836 = vpop.f32.mrf.mxu0
      %v837 = vpop.f32.mrf.mxu0
      %v838 = vadd.f32 %v335, %v837
      %v839 = vpop.f32.mrf.mxu0
      %840 = vmatprep.mubr.bf16.mxu0 0
      %841 = vmatmul.mubr.bf16.gmra.mxu0 %v493
      %v842 = vpop.f32.mrf.mxu0
      %v843 = vadd.f32 %v335, %v842
      %v844 = vpop.f32.mrf.mxu0
      %v845 = vpop.f32.mrf.mxu0
      %v846 = vadd.f32 %v335, %v845
      %v847 = vpop.f32.mrf.mxu0
      %848 = vmatprep.mubr.bf16.mxu0 0
      %849 = vmatmul.mubr.bf16.gmra.mxu0 %v494
      %v850 = vpop.f32.mrf.mxu0
      %v851 = vadd.f32 %v335, %v850
      %v852 = vpop.f32.mrf.mxu0
      %v853 = vpop.f32.mrf.mxu0
      %v854 = vadd.f32 %v335, %v853
      %v855 = vpop.f32.mrf.mxu0
      %856 = vmatprep.mubr.bf16.mxu0 0
      %857 = vmatmul.mubr.bf16.gmra.mxu0 %v495
      %v858 = vpop.f32.mrf.mxu0
      %v859 = vadd.f32 %v335, %v858
      %v860 = vpop.f32.mrf.mxu0
      %v861 = vpop.f32.mrf.mxu0
      %v862 = vadd.f32 %v335, %v861
      %v863 = vpop.f32.mrf.mxu0
      %864 = vdwg.mxu0
      %v865 = vmax.f32 %v611, 0.0
      %v866 = vmax.f32 %v614, 0.0
      %v867 = vmax.f32 %v619, 0.0
      %v868 = vmax.f32 %v622, 0.0
      %v869 = vmax.f32 %v627, 0.0
      %v870 = vmax.f32 %v630, 0.0
      %v871 = vmax.f32 %v635, 0.0
      %v872 = vmax.f32 %v638, 0.0
      %v873 = vmax.f32 %v643, 0.0
      %v874 = vmax.f32 %v646, 0.0
      %v875 = vmax.f32 %v651, 0.0
      %v876 = vmax.f32 %v654, 0.0
      %v877 = vmax.f32 %v659, 0.0
      %v878 = vmax.f32 %v662, 0.0
      %v879 = vmax.f32 %v667, 0.0
      %v880 = vmax.f32 %v670, 0.0
      %v881 = vmax.f32 %v675, 0.0
      %v882 = vmax.f32 %v678, 0.0
      %v883 = vmax.f32 %v683, 0.0
      %v884 = vmax.f32 %v686, 0.0
      %v885 = vmax.f32 %v691, 0.0
      %v886 = vmax.f32 %v694, 0.0
      %v887 = vmax.f32 %v699, 0.0
      %v888 = vmax.f32 %v702, 0.0
      %v889 = vmax.f32 %v707, 0.0
      %v890 = vmax.f32 %v710, 0.0
      %v891 = vmax.f32 %v715, 0.0
      %v892 = vmax.f32 %v718, 0.0
      %v893 = vmax.f32 %v723, 0.0
      %v894 = vmax.f32 %v726, 0.0
      %v895 = vmax.f32 %v731, 0.0
      %v896 = vmax.f32 %v734, 0.0
      %v897 = vmax.f32 %v739, 0.0
      %v898 = vmax.f32 %v742, 0.0
      %v899 = vmax.f32 %v747, 0.0
      %v900 = vmax.f32 %v750, 0.0
      %v901 = vmax.f32 %v755, 0.0
      %v902 = vmax.f32 %v758, 0.0
      %v903 = vmax.f32 %v763, 0.0
      %v904 = vmax.f32 %v766, 0.0
      %v905 = vmax.f32 %v771, 0.0
      %v906 = vmax.f32 %v774, 0.0
      %v907 = vmax.f32 %v779, 0.0
      %v908 = vmax.f32 %v782, 0.0
      %v909 = vmax.f32 %v787, 0.0
      %v910 = vmax.f32 %v790, 0.0
      %v911 = vmax.f32 %v795, 0.0
      %v912 = vmax.f32 %v798, 0.0
      %v913 = vmax.f32 %v803, 0.0
      %v914 = vmax.f32 %v806, 0.0
      %v915 = vmax.f32 %v811, 0.0
      %v916 = vmax.f32 %v814, 0.0
      %v917 = vmax.f32 %v819, 0.0
      %v918 = vmax.f32 %v822, 0.0
      %v919 = vmax.f32 %v827, 0.0
      %v920 = vmax.f32 %v830, 0.0
      %v921 = vmax.f32 %v835, 0.0
      %v922 = vmax.f32 %v838, 0.0
      %v923 = vmax.f32 %v843, 0.0
      %v924 = vmax.f32 %v846, 0.0
      %v925 = vmax.f32 %v851, 0.0
      %v926 = vmax.f32 %v854, 0.0
      %v927 = vmax.f32 %v859, 0.0
      %v928 = vmax.f32 %v862, 0.0
      %v929 = vlaneseq
      %v930 = vshrl.u32 %v929, 7
      %v931 = vsub.s32 1, %v930
      %v932 = vrot.slane %v251, %v931
      %v933 = vmul.f32 %v865, %v932
      %v934 = vmul.f32 %v866, %v932
      %v935 = vmul.f32 %v867, %v932
      %v936 = vmul.f32 %v868, %v932
      %v937 = vmul.f32 %v869, %v932
      %v938 = vmul.f32 %v870, %v932
      %v939 = vmul.f32 %v871, %v932
      %v940 = vmul.f32 %v872, %v932
      %v941 = vmul.f32 %v873, %v932
      %v942 = vmul.f32 %v874, %v932
      %v943 = vmul.f32 %v875, %v932
      %v944 = vmul.f32 %v876, %v932
      %v945 = vmul.f32 %v877, %v932
      %v946 = vmul.f32 %v878, %v932
      %v947 = vmul.f32 %v879, %v932
      %v948 = vmul.f32 %v880, %v932
      %v949 = vmul.f32 %v881, %v932
      %v950 = vmul.f32 %v882, %v932
      %v951 = vmul.f32 %v883, %v932
      %v952 = vmul.f32 %v884, %v932
      %v953 = vmul.f32 %v885, %v932
      %v954 = vmul.f32 %v886, %v932
      %v955 = vmul.f32 %v887, %v932
      %v956 = vmul.f32 %v888, %v932
      %v957 = vmul.f32 %v889, %v932
      %v958 = vmul.f32 %v890, %v932
      %v959 = vmul.f32 %v891, %v932
      %v960 = vmul.f32 %v892, %v932
      %v961 = vmul.f32 %v893, %v932
      %v962 = vmul.f32 %v894, %v932
      %v963 = vmul.f32 %v895, %v932
      %v964 = vmul.f32 %v896, %v932
      %v965 = vmul.f32 %v897, %v932
      %v966 = vmul.f32 %v898, %v932
      %v967 = vmul.f32 %v899, %v932
      %v968 = vmul.f32 %v900, %v932
      %v969 = vmul.f32 %v901, %v932
      %v970 = vmul.f32 %v902, %v932
      %v971 = vmul.f32 %v903, %v932
      %v972 = vmul.f32 %v904, %v932
      %v973 = vmul.f32 %v905, %v932
      %v974 = vmul.f32 %v906, %v932
      %v975 = vmul.f32 %v907, %v932
      %v976 = vmul.f32 %v908, %v932
      %v977 = vmul.f32 %v909, %v932
      %v978 = vmul.f32 %v910, %v932
      %v979 = vmul.f32 %v911, %v932
      %v980 = vmul.f32 %v912, %v932
      %v981 = vmul.f32 %v913, %v932
      %v982 = vmul.f32 %v914, %v932
      %v983 = vmul.f32 %v915, %v932
      %v984 = vmul.f32 %v916, %v932
      %v985 = vmul.f32 %v917, %v932
      %v986 = vmul.f32 %v918, %v932
      %v987 = vmul.f32 %v919, %v932
      %v988 = vmul.f32 %v920, %v932
      %v989 = vmul.f32 %v921, %v932
      %v990 = vmul.f32 %v922, %v932
      %v991 = vmul.f32 %v923, %v932
      %v992 = vmul.f32 %v924, %v932
      %v993 = vmul.f32 %v925, %v932
      %v994 = vmul.f32 %v926, %v932
      %v995 = vmul.f32 %v927, %v932
      %v996 = vmul.f32 %v928, %v932
      %v997 = vlaneseq
      %v998 = vshrl.u32 %v997, 7
      %v999 = vsub.s32 2, %v998
      %v1000 = vrot.slane %v251, %v999
      %v1001 = vadd.f32 %v933, %v1000
      %v1002 = vadd.f32 %v934, %v1000
      %v1003 = vadd.f32 %v935, %v1000
      %v1004 = vadd.f32 %v936, %v1000
      %v1005 = vadd.f32 %v937, %v1000
      %v1006 = vadd.f32 %v938, %v1000
      %v1007 = vadd.f32 %v939, %v1000
      %v1008 = vadd.f32 %v940, %v1000
      %v1009 = vadd.f32 %v941, %v1000
      %v1010 = vadd.f32 %v942, %v1000
      %v1011 = vadd.f32 %v943, %v1000
      %v1012 = vadd.f32 %v944, %v1000
      %v1013 = vadd.f32 %v945, %v1000
      %v1014 = vadd.f32 %v946, %v1000
      %v1015 = vadd.f32 %v947, %v1000
      %v1016 = vadd.f32 %v948, %v1000
      %v1017 = vadd.f32 %v949, %v1000
      %v1018 = vadd.f32 %v950, %v1000
      %v1019 = vadd.f32 %v951, %v1000
      %v1020 = vadd.f32 %v952, %v1000
      %v1021 = vadd.f32 %v953, %v1000
      %v1022 = vadd.f32 %v954, %v1000
      %v1023 = vadd.f32 %v955, %v1000
      %v1024 = vadd.f32 %v956, %v1000
      %v1025 = vadd.f32 %v957, %v1000
      %v1026 = vadd.f32 %v958, %v1000
      %v1027 = vadd.f32 %v959, %v1000
      %v1028 = vadd.f32 %v960, %v1000
      %v1029 = vadd.f32 %v961, %v1000
      %v1030 = vadd.f32 %v962, %v1000
      %v1031 = vadd.f32 %v963, %v1000
      %v1032 = vadd.f32 %v964, %v1000
      %v1033 = vadd.f32 %v965, %v1000
      %v1034 = vadd.f32 %v966, %v1000
      %v1035 = vadd.f32 %v967, %v1000
      %v1036 = vadd.f32 %v968, %v1000
      %v1037 = vadd.f32 %v969, %v1000
      %v1038 = vadd.f32 %v970, %v1000
      %v1039 = vadd.f32 %v971, %v1000
      %v1040 = vadd.f32 %v972, %v1000
      %v1041 = vadd.f32 %v973, %v1000
      %v1042 = vadd.f32 %v974, %v1000
      %v1043 = vadd.f32 %v975, %v1000
      %v1044 = vadd.f32 %v976, %v1000
      %v1045 = vadd.f32 %v977, %v1000
      %v1046 = vadd.f32 %v978, %v1000
      %v1047 = vadd.f32 %v979, %v1000
      %v1048 = vadd.f32 %v980, %v1000
      %v1049 = vadd.f32 %v981, %v1000
      %v1050 = vadd.f32 %v982, %v1000
      %v1051 = vadd.f32 %v983, %v1000
      %v1052 = vadd.f32 %v984, %v1000
      %v1053 = vadd.f32 %v985, %v1000
      %v1054 = vadd.f32 %v986, %v1000
      %v1055 = vadd.f32 %v987, %v1000
      %v1056 = vadd.f32 %v988, %v1000
      %v1057 = vadd.f32 %v989, %v1000
      %v1058 = vadd.f32 %v990, %v1000
      %v1059 = vadd.f32 %v991, %v1000
      %v1060 = vadd.f32 %v992, %v1000
      %v1061 = vadd.f32 %v993, %v1000
      %v1062 = vadd.f32 %v994, %v1000
      %v1063 = vadd.f32 %v995, %v1000
      %v1064 = vadd.f32 %v996, %v1000
      %v1065 = vpack.c.bf16 %v1002, %v1001
      %v1066 = vpack.c.bf16 %v1004, %v1003
      %v1067 = vpack.c.bf16 %v1006, %v1005
      %v1068 = vpack.c.bf16 %v1008, %v1007
      %v1069 = vpack.c.bf16 %v1010, %v1009
      %v1070 = vpack.c.bf16 %v1012, %v1011
      %v1071 = vpack.c.bf16 %v1014, %v1013
      %v1072 = vpack.c.bf16 %v1016, %v1015
      %v1073 = vpack.c.bf16 %v1018, %v1017
      %v1074 = vpack.c.bf16 %v1020, %v1019
      %v1075 = vpack.c.bf16 %v1022, %v1021
      %v1076 = vpack.c.bf16 %v1024, %v1023
      %v1077 = vpack.c.bf16 %v1026, %v1025
      %v1078 = vpack.c.bf16 %v1028, %v1027
      %v1079 = vpack.c.bf16 %v1030, %v1029
      %v1080 = vpack.c.bf16 %v1032, %v1031
      %v1081 = vpack.c.bf16 %v1034, %v1033
      %v1082 = vpack.c.bf16 %v1036, %v1035
      %v1083 = vpack.c.bf16 %v1038, %v1037
      %v1084 = vpack.c.bf16 %v1040, %v1039
      %v1085 = vpack.c.bf16 %v1042, %v1041
      %v1086 = vpack.c.bf16 %v1044, %v1043
      %v1087 = vpack.c.bf16 %v1046, %v1045
      %v1088 = vpack.c.bf16 %v1048, %v1047
      %v1089 = vpack.c.bf16 %v1050, %v1049
      %v1090 = vpack.c.bf16 %v1052, %v1051
      %v1091 = vpack.c.bf16 %v1054, %v1053
      %v1092 = vpack.c.bf16 %v1056, %v1055
      %v1093 = vpack.c.bf16 %v1058, %v1057
      %v1094 = vpack.c.bf16 %v1060, %v1059
      %v1095 = vpack.c.bf16 %v1062, %v1061
      %v1096 = vpack.c.bf16 %v1064, %v1063
      %v1097 = vld [vmem:[%s2] sm:$0xff]
      %v1098 = vld [vmem:[%s2 + $0x8] sm:$0xff]
      %v1099 = vld [vmem:[%s2 + $0x10] sm:$0xff]
      %v1100 = vld [vmem:[%s2 + $0x18] sm:$0xff]
      %v1101 = vld [vmem:[%s2 + $0x20] sm:$0xff]
      %v1102 = vld [vmem:[%s2 + $0x28] sm:$0xff]
      %v1103 = vld [vmem:[%s2 + $0x30] sm:$0xff]
      %v1104 = vld [vmem:[%s2 + $0x38] sm:$0xff]
      %v1105 = vld [vmem:[%s2 + $0x40] sm:$0xff]
      %v1106 = vld [vmem:[%s2 + $0x48] sm:$0xff]
      %v1107 = vld [vmem:[%s2 + $0x50] sm:$0xff]
      %v1108 = vld [vmem:[%s2 + $0x58] sm:$0xff]
      %v1109 = vld [vmem:[%s2 + $0x60] sm:$0xff]
      %v1110 = vld [vmem:[%s2 + $0x68] sm:$0xff]
      %v1111 = vld [vmem:[%s2 + $0x70] sm:$0xff]
      %v1112 = vld [vmem:[%s2 + $0x78] sm:$0xff]
      %v1129 = vunpack.c.l.b16 %v1097
      %v1130 = vunpack.c.h.b16 %v1097
      %v1131 = vunpack.c.l.b16 %v1098
      %v1132 = vunpack.c.h.b16 %v1098
      %v1133 = vunpack.c.l.b16 %v1099
      %v1134 = vunpack.c.h.b16 %v1099
      %v1135 = vunpack.c.l.b16 %v1100
      %v1136 = vunpack.c.h.b16 %v1100
      %v1137 = vunpack.c.l.b16 %v1101
      %v1138 = vunpack.c.h.b16 %v1101
      %v1139 = vunpack.c.l.b16 %v1102
      %v1140 = vunpack.c.h.b16 %v1102
      %v1141 = vunpack.c.l.b16 %v1103
      %v1142 = vunpack.c.h.b16 %v1103
      %v1143 = vunpack.c.l.b16 %v1104
      %v1144 = vunpack.c.h.b16 %v1104
      %v1145 = vunpack.c.l.b16 %v1105
      %v1146 = vunpack.c.h.b16 %v1105
      %v1147 = vunpack.c.l.b16 %v1106
      %v1148 = vunpack.c.h.b16 %v1106
      %v1149 = vunpack.c.l.b16 %v1107
      %v1150 = vunpack.c.h.b16 %v1107
      %v1151 = vunpack.c.l.b16 %v1108
      %v1152 = vunpack.c.h.b16 %v1108
      %v1153 = vunpack.c.l.b16 %v1109
      %v1154 = vunpack.c.h.b16 %v1109
      %v1155 = vunpack.c.l.b16 %v1110
      %v1156 = vunpack.c.h.b16 %v1110
      %v1157 = vunpack.c.l.b16 %v1111
      %v1158 = vunpack.c.h.b16 %v1111
      %v1159 = vunpack.c.l.b16 %v1112
      %v1160 = vunpack.c.h.b16 %v1112
      %v1161 = vpack.c.b16 %v1133, %v1129
      %v1162 = vpack.c.b16 %v1134, %v1130
      %v1163 = vpack.c.b16 %v1135, %v1131
      %v1164 = vpack.c.b16 %v1136, %v1132
      %v1165 = vpack.c.b16 %v1141, %v1137
      %v1166 = vpack.c.b16 %v1142, %v1138
      %v1167 = vpack.c.b16 %v1143, %v1139
      %v1168 = vpack.c.b16 %v1144, %v1140
      %v1169 = vpack.c.b16 %v1149, %v1145
      %v1170 = vpack.c.b16 %v1150, %v1146
      %v1171 = vpack.c.b16 %v1151, %v1147
      %v1172 = vpack.c.b16 %v1152, %v1148
      %v1173 = vpack.c.b16 %v1157, %v1153
      %v1174 = vpack.c.b16 %v1158, %v1154
      %v1175 = vpack.c.b16 %v1159, %v1155
      %v1176 = vpack.c.b16 %v1160, %v1156
      %1193 = vmatprep.subr.bf16.mxu0 0
      %1194 = vmatpush1.bf16.msra.mxu0 %v1072
      %1195 = vmatprep.subr.bf16.mxu0 0
      %1196 = vmatpush1.bf16.msra.mxu0 %v1071
      %1197 = vmatprep.subr.bf16.mxu0 0
      %1198 = vmatpush1.bf16.msra.mxu0 %v1070
      %1199 = vmatprep.subr.bf16.mxu0 0
      %1200 = vmatpush1.bf16.msra.mxu0 %v1069
      %1201 = vmatprep.subr.bf16.mxu0 0
      %1202 = vmatpush1.bf16.msra.mxu0 %v1068
      %1203 = vmatprep.subr.bf16.mxu0 0
      %1204 = vmatpush1.bf16.msra.mxu0 %v1067
      %1205 = vmatprep.subr.bf16.mxu0 0
      %1206 = vmatpush1.bf16.msra.mxu0 %v1066
      %1207 = vmatprep.subr.bf16.mxu0 0
      %1208 = vmatpush1.bf16.msra.mxu0 %v1065
      %1209 = vmatprep.subr.bf16.mxu0 0
      %1210 = vmatpush2.bf16.msra.mxu0 %v1080
      %1211 = vmatprep.subr.bf16.mxu0 0
      %1212 = vmatpush2.bf16.msra.mxu0 %v1079
      %1213 = vmatprep.subr.bf16.mxu0 0
      %1214 = vmatpush2.bf16.msra.mxu0 %v1078
      %1215 = vmatprep.subr.bf16.mxu0 0
      %1216 = vmatpush2.bf16.msra.mxu0 %v1077
      %1217 = vmatprep.subr.bf16.mxu0 0
      %1218 = vmatpush2.bf16.msra.mxu0 %v1076
      %1219 = vmatprep.subr.bf16.mxu0 0
      %1220 = vmatpush2.bf16.msra.mxu0 %v1075
      %1221 = vmatprep.subr.bf16.mxu0 0
      %1222 = vmatpush2.bf16.msra.mxu0 %v1074
      %1223 = vmatprep.subr.bf16.mxu0 0
      %1224 = vmatpush2.bf16.msra.mxu0 %v1073
      %1225 = vmatprep.mubr.bf16.mxu0 %v1162
      %1226 = vmatmul.mubr.bf16.gmra.mxu0 %v1161
      %v1227 = vpop.f32.mrf.mxu0
      %v1228 = vadd.f32 0.0, %v1227
      %v1229 = vpop.f32.mrf.mxu0
      %v1230 = vpop.f32.mrf.mxu0
      %v1231 = vadd.f32 0.0, %v1230
      %v1232 = vpop.f32.mrf.mxu0
      %1233 = vmatprep.mubr.bf16.mxu0 %v1166
      %1234 = vmatmul.mubr.bf16.gmra.mxu0 %v1165
      %v1235 = vpop.f32.mrf.mxu0
      %v1236 = vadd.f32 0.0, %v1235
      %v1237 = vpop.f32.mrf.mxu0
      %v1238 = vpop.f32.mrf.mxu0
      %v1239 = vadd.f32 0.0, %v1238
      %v1240 = vpop.f32.mrf.mxu0
      %1241 = vmatprep.mubr.bf16.mxu0 %v1170
      %1242 = vmatmul.mubr.bf16.gmra.mxu0 %v1169
      %v1243 = vpop.f32.mrf.mxu0
      %v1244 = vadd.f32 0.0, %v1243
      %v1245 = vpop.f32.mrf.mxu0
      %v1246 = vpop.f32.mrf.mxu0
      %v1247 = vadd.f32 0.0, %v1246
      %v1248 = vpop.f32.mrf.mxu0
      %1249 = vmatprep.mubr.bf16.mxu0 %v1174
      %1250 = vmatmul.mubr.bf16.gmra.mxu0 %v1173
      %v1251 = vpop.f32.mrf.mxu0
      %v1252 = vadd.f32 0.0, %v1251
      %v1253 = vpop.f32.mrf.mxu0
      %v1254 = vpop.f32.mrf.mxu0
      %v1255 = vadd.f32 0.0, %v1254
      %v1256 = vpop.f32.mrf.mxu0
      %1257 = vdwg.mxu0
      %1258 = vmatprep.subr.bf16.mxu0 0
      %1259 = vmatpush1.bf16.msra.mxu0 %v1088
      %1260 = vmatprep.subr.bf16.mxu0 0
      %1261 = vmatpush1.bf16.msra.mxu0 %v1087
      %1262 = vmatprep.subr.bf16.mxu0 0
      %1263 = vmatpush1.bf16.msra.mxu0 %v1086
      %1264 = vmatprep.subr.bf16.mxu0 0
      %1265 = vmatpush1.bf16.msra.mxu0 %v1085
      %1266 = vmatprep.subr.bf16.mxu0 0
      %1267 = vmatpush1.bf16.msra.mxu0 %v1084
      %1268 = vmatprep.subr.bf16.mxu0 0
      %1269 = vmatpush1.bf16.msra.mxu0 %v1083
      %1270 = vmatprep.subr.bf16.mxu0 0
      %1271 = vmatpush1.bf16.msra.mxu0 %v1082
      %1272 = vmatprep.subr.bf16.mxu0 0
      %1273 = vmatpush1.bf16.msra.mxu0 %v1081
      %1274 = vmatprep.subr.bf16.mxu0 0
      %1275 = vmatpush2.bf16.msra.mxu0 %v1096
      %1276 = vmatprep.subr.bf16.mxu0 0
      %1277 = vmatpush2.bf16.msra.mxu0 %v1095
      %1278 = vmatprep.subr.bf16.mxu0 0
      %1279 = vmatpush2.bf16.msra.mxu0 %v1094
      %1280 = vmatprep.subr.bf16.mxu0 0
      %1281 = vmatpush2.bf16.msra.mxu0 %v1093
      %1282 = vmatprep.subr.bf16.mxu0 0
      %1283 = vmatpush2.bf16.msra.mxu0 %v1092
      %1284 = vmatprep.subr.bf16.mxu0 0
      %1285 = vmatpush2.bf16.msra.mxu0 %v1091
      %1286 = vmatprep.subr.bf16.mxu0 0
      %1287 = vmatpush2.bf16.msra.mxu0 %v1090
      %1288 = vmatprep.subr.bf16.mxu0 0
      %1289 = vmatpush2.bf16.msra.mxu0 %v1089
      %1290 = vmatprep.mubr.bf16.mxu0 %v1164
      %1291 = vmatmul.mubr.bf16.gmra.mxu0 %v1163
      %v1292 = vpop.f32.mrf.mxu0
      %v1293 = vadd.f32 %v1228, %v1292
      %v1294 = vpop.f32.mrf.mxu0
      %v1295 = vpop.f32.mrf.mxu0
      %v1296 = vadd.f32 %v1231, %v1295
      %v1297 = vpop.f32.mrf.mxu0
      %1298 = vmatprep.mubr.bf16.mxu0 %v1168
      %1299 = vmatmul.mubr.bf16.gmra.mxu0 %v1167
      %v1300 = vpop.f32.mrf.mxu0
      %v1301 = vadd.f32 %v1236, %v1300
      %v1302 = vpop.f32.mrf.mxu0
      %v1303 = vpop.f32.mrf.mxu0
      %v1304 = vadd.f32 %v1239, %v1303
      %v1305 = vpop.f32.mrf.mxu0
      %1306 = vmatprep.mubr.bf16.mxu0 %v1172
      %1307 = vmatmul.mubr.bf16.gmra.mxu0 %v1171
      %v1308 = vpop.f32.mrf.mxu0
      %v1309 = vadd.f32 %v1244, %v1308
      %v1310 = vpop.f32.mrf.mxu0
      %v1311 = vpop.f32.mrf.mxu0
      %v1312 = vadd.f32 %v1247, %v1311
      %v1313 = vpop.f32.mrf.mxu0
      %1314 = vmatprep.mubr.bf16.mxu0 %v1176
      %1315 = vmatmul.mubr.bf16.gmra.mxu0 %v1175
      %v1316 = vpop.f32.mrf.mxu0
      %v1317 = vadd.f32 %v1252, %v1316
      %v1318 = vpop.f32.mrf.mxu0
      %v1319 = vpop.f32.mrf.mxu0
      %v1320 = vadd.f32 %v1255, %v1319
      %v1321 = vpop.f32.mrf.mxu0
      %1322 = vdwg.mxu0
      %s1323 = scalar_lea.vmem %s2, 128
      %v1324 = vld [vmem:[%s1323] sm:$0xff]
      %v1325 = vld [vmem:[%s1323 + $0x8] sm:$0xff]
      %v1326 = vld [vmem:[%s1323 + $0x10] sm:$0xff]
      %v1327 = vld [vmem:[%s1323 + $0x18] sm:$0xff]
      %v1328 = vld [vmem:[%s1323 + $0x20] sm:$0xff]
      %v1329 = vld [vmem:[%s1323 + $0x28] sm:$0xff]
      %v1330 = vld [vmem:[%s1323 + $0x30] sm:$0xff]
      %v1331 = vld [vmem:[%s1323 + $0x38] sm:$0xff]
      %v1332 = vld [vmem:[%s1323 + $0x40] sm:$0xff]
      %v1333 = vld [vmem:[%s1323 + $0x48] sm:$0xff]
      %v1334 = vld [vmem:[%s1323 + $0x50] sm:$0xff]
      %v1335 = vld [vmem:[%s1323 + $0x58] sm:$0xff]
      %v1336 = vld [vmem:[%s1323 + $0x60] sm:$0xff]
      %v1337 = vld [vmem:[%s1323 + $0x68] sm:$0xff]
      %v1338 = vld [vmem:[%s1323 + $0x70] sm:$0xff]
      %v1339 = vld [vmem:[%s1323 + $0x78] sm:$0xff]
      %v1356 = vunpack.c.l.b16 %v1324
      %v1357 = vunpack.c.h.b16 %v1324
      %v1358 = vunpack.c.l.b16 %v1325
      %v1359 = vunpack.c.h.b16 %v1325
      %v1360 = vunpack.c.l.b16 %v1326
      %v1361 = vunpack.c.h.b16 %v1326
      %v1362 = vunpack.c.l.b16 %v1327
      %v1363 = vunpack.c.h.b16 %v1327
      %v1364 = vunpack.c.l.b16 %v1328
      %v1365 = vunpack.c.h.b16 %v1328
      %v1366 = vunpack.c.l.b16 %v1329
      %v1367 = vunpack.c.h.b16 %v1329
      %v1368 = vunpack.c.l.b16 %v1330
      %v1369 = vunpack.c.h.b16 %v1330
      %v1370 = vunpack.c.l.b16 %v1331
      %v1371 = vunpack.c.h.b16 %v1331
      %v1372 = vunpack.c.l.b16 %v1332
      %v1373 = vunpack.c.h.b16 %v1332
      %v1374 = vunpack.c.l.b16 %v1333
      %v1375 = vunpack.c.h.b16 %v1333
      %v1376 = vunpack.c.l.b16 %v1334
      %v1377 = vunpack.c.h.b16 %v1334
      %v1378 = vunpack.c.l.b16 %v1335
      %v1379 = vunpack.c.h.b16 %v1335
      %v1380 = vunpack.c.l.b16 %v1336
      %v1381 = vunpack.c.h.b16 %v1336
      %v1382 = vunpack.c.l.b16 %v1337
      %v1383 = vunpack.c.h.b16 %v1337
      %v1384 = vunpack.c.l.b16 %v1338
      %v1385 = vunpack.c.h.b16 %v1338
      %v1386 = vunpack.c.l.b16 %v1339
      %v1387 = vunpack.c.h.b16 %v1339
      %v1388 = vpack.c.b16 %v1360, %v1356
      %v1389 = vpack.c.b16 %v1361, %v1357
      %v1390 = vpack.c.b16 %v1362, %v1358
      %v1391 = vpack.c.b16 %v1363, %v1359
      %v1392 = vpack.c.b16 %v1368, %v1364
      %v1393 = vpack.c.b16 %v1369, %v1365
      %v1394 = vpack.c.b16 %v1370, %v1366
      %v1395 = vpack.c.b16 %v1371, %v1367
      %v1396 = vpack.c.b16 %v1376, %v1372
      %v1397 = vpack.c.b16 %v1377, %v1373
      %v1398 = vpack.c.b16 %v1378, %v1374
      %v1399 = vpack.c.b16 %v1379, %v1375
      %v1400 = vpack.c.b16 %v1384, %v1380
      %v1401 = vpack.c.b16 %v1385, %v1381
      %v1402 = vpack.c.b16 %v1386, %v1382
      %v1403 = vpack.c.b16 %v1387, %v1383
      %1420 = vmatprep.subr.bf16.mxu0 0
      %1421 = vmatpush1.bf16.msra.mxu0 %v1072
      %1422 = vmatprep.subr.bf16.mxu0 0
      %1423 = vmatpush1.bf16.msra.mxu0 %v1071
      %1424 = vmatprep.subr.bf16.mxu0 0
      %1425 = vmatpush1.bf16.msra.mxu0 %v1070
      %1426 = vmatprep.subr.bf16.mxu0 0
      %1427 = vmatpush1.bf16.msra.mxu0 %v1069
      %1428 = vmatprep.subr.bf16.mxu0 0
      %1429 = vmatpush1.bf16.msra.mxu0 %v1068
      %1430 = vmatprep.subr.bf16.mxu0 0
      %1431 = vmatpush1.bf16.msra.mxu0 %v1067
      %1432 = vmatprep.subr.bf16.mxu0 0
      %1433 = vmatpush1.bf16.msra.mxu0 %v1066
      %1434 = vmatprep.subr.bf16.mxu0 0
      %1435 = vmatpush1.bf16.msra.mxu0 %v1065
      %1436 = vmatprep.subr.bf16.mxu0 0
      %1437 = vmatpush2.bf16.msra.mxu0 %v1080
      %1438 = vmatprep.subr.bf16.mxu0 0
      %1439 = vmatpush2.bf16.msra.mxu0 %v1079
      %1440 = vmatprep.subr.bf16.mxu0 0
      %1441 = vmatpush2.bf16.msra.mxu0 %v1078
      %1442 = vmatprep.subr.bf16.mxu0 0
      %1443 = vmatpush2.bf16.msra.mxu0 %v1077
      %1444 = vmatprep.subr.bf16.mxu0 0
      %1445 = vmatpush2.bf16.msra.mxu0 %v1076
      %1446 = vmatprep.subr.bf16.mxu0 0
      %1447 = vmatpush2.bf16.msra.mxu0 %v1075
      %1448 = vmatprep.subr.bf16.mxu0 0
      %1449 = vmatpush2.bf16.msra.mxu0 %v1074
      %1450 = vmatprep.subr.bf16.mxu0 0
      %1451 = vmatpush2.bf16.msra.mxu0 %v1073
      %1452 = vmatprep.mubr.bf16.mxu0 %v1389
      %1453 = vmatmul.mubr.bf16.gmra.mxu0 %v1388
      %v1454 = vpop.f32.mrf.mxu0
      %v1455 = vadd.f32 0.0, %v1454
      %v1456 = vpop.f32.mrf.mxu0
      %v1457 = vpop.f32.mrf.mxu0
      %v1458 = vadd.f32 0.0, %v1457
      %v1459 = vpop.f32.mrf.mxu0
      %1460 = vmatprep.mubr.bf16.mxu0 %v1393
      %1461 = vmatmul.mubr.bf16.gmra.mxu0 %v1392
      %v1462 = vpop.f32.mrf.mxu0
      %v1463 = vadd.f32 0.0, %v1462
      %v1464 = vpop.f32.mrf.mxu0
      %v1465 = vpop.f32.mrf.mxu0
      %v1466 = vadd.f32 0.0, %v1465
      %v1467 = vpop.f32.mrf.mxu0
      %1468 = vmatprep.mubr.bf16.mxu0 %v1397
      %1469 = vmatmul.mubr.bf16.gmra.mxu0 %v1396
      %v1470 = vpop.f32.mrf.mxu0
      %v1471 = vadd.f32 0.0, %v1470
      %v1472 = vpop.f32.mrf.mxu0
      %v1473 = vpop.f32.mrf.mxu0
      %v1474 = vadd.f32 0.0, %v1473
      %v1475 = vpop.f32.mrf.mxu0
      %1476 = vmatprep.mubr.bf16.mxu0 %v1401
      %1477 = vmatmul.mubr.bf16.gmra.mxu0 %v1400
      %v1478 = vpop.f32.mrf.mxu0
      %v1479 = vadd.f32 0.0, %v1478
      %v1480 = vpop.f32.mrf.mxu0
      %v1481 = vpop.f32.mrf.mxu0
      %v1482 = vadd.f32 0.0, %v1481
      %v1483 = vpop.f32.mrf.mxu0
      %1484 = vdwg.mxu0
      %1485 = vmatprep.subr.bf16.mxu0 0
      %1486 = vmatpush1.bf16.msra.mxu0 %v1088
      %1487 = vmatprep.subr.bf16.mxu0 0
      %1488 = vmatpush1.bf16.msra.mxu0 %v1087
      %1489 = vmatprep.subr.bf16.mxu0 0
      %1490 = vmatpush1.bf16.msra.mxu0 %v1086
      %1491 = vmatprep.subr.bf16.mxu0 0
      %1492 = vmatpush1.bf16.msra.mxu0 %v1085
      %1493 = vmatprep.subr.bf16.mxu0 0
      %1494 = vmatpush1.bf16.msra.mxu0 %v1084
      %1495 = vmatprep.subr.bf16.mxu0 0
      %1496 = vmatpush1.bf16.msra.mxu0 %v1083
      %1497 = vmatprep.subr.bf16.mxu0 0
      %1498 = vmatpush1.bf16.msra.mxu0 %v1082
      %1499 = vmatprep.subr.bf16.mxu0 0
      %1500 = vmatpush1.bf16.msra.mxu0 %v1081
      %1501 = vmatprep.subr.bf16.mxu0 0
      %1502 = vmatpush2.bf16.msra.mxu0 %v1096
      %1503 = vmatprep.subr.bf16.mxu0 0
      %1504 = vmatpush2.bf16.msra.mxu0 %v1095
      %1505 = vmatprep.subr.bf16.mxu0 0
      %1506 = vmatpush2.bf16.msra.mxu0 %v1094
      %1507 = vmatprep.subr.bf16.mxu0 0
      %1508 = vmatpush2.bf16.msra.mxu0 %v1093
      %1509 = vmatprep.subr.bf16.mxu0 0
      %1510 = vmatpush2.bf16.msra.mxu0 %v1092
      %1511 = vmatprep.subr.bf16.mxu0 0
      %1512 = vmatpush2.bf16.msra.mxu0 %v1091
      %1513 = vmatprep.subr.bf16.mxu0 0
      %1514 = vmatpush2.bf16.msra.mxu0 %v1090
      %1515 = vmatprep.subr.bf16.mxu0 0
      %1516 = vmatpush2.bf16.msra.mxu0 %v1089
      %1517 = vmatprep.mubr.bf16.mxu0 %v1391
      %1518 = vmatmul.mubr.bf16.gmra.mxu0 %v1390
      %v1519 = vpop.f32.mrf.mxu0
      %v1520 = vadd.f32 %v1455, %v1519
      %v1521 = vpop.f32.mrf.mxu0
      %v1522 = vpop.f32.mrf.mxu0
      %v1523 = vadd.f32 %v1458, %v1522
      %v1524 = vpop.f32.mrf.mxu0
      %1525 = vmatprep.mubr.bf16.mxu0 %v1395
      %1526 = vmatmul.mubr.bf16.gmra.mxu0 %v1394
      %v1527 = vpop.f32.mrf.mxu0
      %v1528 = vadd.f32 %v1463, %v1527
      %v1529 = vpop.f32.mrf.mxu0
      %v1530 = vpop.f32.mrf.mxu0
      %v1531 = vadd.f32 %v1466, %v1530
      %v1532 = vpop.f32.mrf.mxu0
      %1533 = vmatprep.mubr.bf16.mxu0 %v1399
      %1534 = vmatmul.mubr.bf16.gmra.mxu0 %v1398
      %v1535 = vpop.f32.mrf.mxu0
      %v1536 = vadd.f32 %v1471, %v1535
      %v1537 = vpop.f32.mrf.mxu0
      %v1538 = vpop.f32.mrf.mxu0
      %v1539 = vadd.f32 %v1474, %v1538
      %v1540 = vpop.f32.mrf.mxu0
      %1541 = vmatprep.mubr.bf16.mxu0 %v1403
      %1542 = vmatmul.mubr.bf16.gmra.mxu0 %v1402
      %v1543 = vpop.f32.mrf.mxu0
      %v1544 = vadd.f32 %v1479, %v1543
      %v1545 = vpop.f32.mrf.mxu0
      %v1546 = vpop.f32.mrf.mxu0
      %v1547 = vadd.f32 %v1482, %v1546
      %v1548 = vpop.f32.mrf.mxu0
      %1549 = vdwg.mxu0
      %v1550 = vmax.f32 %v1293, %v1520
      %v1551 = vmax.f32 %v1296, %v1523
      %v1552 = vmax.f32 %v1301, %v1528
      %v1553 = vmax.f32 %v1304, %v1531
      %v1554 = vmax.f32 %v1309, %v1536
      %v1555 = vmax.f32 %v1312, %v1539
      %v1556 = vmax.f32 %v1317, %v1544
      %v1557 = vmax.f32 %v1320, %v1547
      %s1558 = scalar_lea.vmem %s2, 256
      %v1559 = vld [vmem:[%s1558] sm:$0xff]
      %v1560 = vld [vmem:[%s1558 + $0x8] sm:$0xff]
      %v1561 = vld [vmem:[%s1558 + $0x10] sm:$0xff]
      %v1562 = vld [vmem:[%s1558 + $0x18] sm:$0xff]
      %v1563 = vld [vmem:[%s1558 + $0x20] sm:$0xff]
      %v1564 = vld [vmem:[%s1558 + $0x28] sm:$0xff]
      %v1565 = vld [vmem:[%s1558 + $0x30] sm:$0xff]
      %v1566 = vld [vmem:[%s1558 + $0x38] sm:$0xff]
      %v1567 = vld [vmem:[%s1558 + $0x40] sm:$0xff]
      %v1568 = vld [vmem:[%s1558 + $0x48] sm:$0xff]
      %v1569 = vld [vmem:[%s1558 + $0x50] sm:$0xff]
      %v1570 = vld [vmem:[%s1558 + $0x58] sm:$0xff]
      %v1571 = vld [vmem:[%s1558 + $0x60] sm:$0xff]
      %v1572 = vld [vmem:[%s1558 + $0x68] sm:$0xff]
      %v1573 = vld [vmem:[%s1558 + $0x70] sm:$0xff]
      %v1574 = vld [vmem:[%s1558 + $0x78] sm:$0xff]
      %v1591 = vunpack.c.l.b16 %v1559
      %v1592 = vunpack.c.h.b16 %v1559
      %v1593 = vunpack.c.l.b16 %v1560
      %v1594 = vunpack.c.h.b16 %v1560
      %v1595 = vunpack.c.l.b16 %v1561
      %v1596 = vunpack.c.h.b16 %v1561
      %v1597 = vunpack.c.l.b16 %v1562
      %v1598 = vunpack.c.h.b16 %v1562
      %v1599 = vunpack.c.l.b16 %v1563
      %v1600 = vunpack.c.h.b16 %v1563
      %v1601 = vunpack.c.l.b16 %v1564
      %v1602 = vunpack.c.h.b16 %v1564
      %v1603 = vunpack.c.l.b16 %v1565
      %v1604 = vunpack.c.h.b16 %v1565
      %v1605 = vunpack.c.l.b16 %v1566
      %v1606 = vunpack.c.h.b16 %v1566
      %v1607 = vunpack.c.l.b16 %v1567
      %v1608 = vunpack.c.h.b16 %v1567
      %v1609 = vunpack.c.l.b16 %v1568
      %v1610 = vunpack.c.h.b16 %v1568
      %v1611 = vunpack.c.l.b16 %v1569
      %v1612 = vunpack.c.h.b16 %v1569
      %v1613 = vunpack.c.l.b16 %v1570
      %v1614 = vunpack.c.h.b16 %v1570
      %v1615 = vunpack.c.l.b16 %v1571
      %v1616 = vunpack.c.h.b16 %v1571
      %v1617 = vunpack.c.l.b16 %v1572
      %v1618 = vunpack.c.h.b16 %v1572
      %v1619 = vunpack.c.l.b16 %v1573
      %v1620 = vunpack.c.h.b16 %v1573
      %v1621 = vunpack.c.l.b16 %v1574
      %v1622 = vunpack.c.h.b16 %v1574
      %v1623 = vpack.c.b16 %v1595, %v1591
      %v1624 = vpack.c.b16 %v1596, %v1592
      %v1625 = vpack.c.b16 %v1597, %v1593
      %v1626 = vpack.c.b16 %v1598, %v1594
      %v1627 = vpack.c.b16 %v1603, %v1599
      %v1628 = vpack.c.b16 %v1604, %v1600
      %v1629 = vpack.c.b16 %v1605, %v1601
      %v1630 = vpack.c.b16 %v1606, %v1602
      %v1631 = vpack.c.b16 %v1611, %v1607
      %v1632 = vpack.c.b16 %v1612, %v1608
      %v1633 = vpack.c.b16 %v1613, %v1609
      %v1634 = vpack.c.b16 %v1614, %v1610
      %v1635 = vpack.c.b16 %v1619, %v1615
      %v1636 = vpack.c.b16 %v1620, %v1616
      %v1637 = vpack.c.b16 %v1621, %v1617
      %v1638 = vpack.c.b16 %v1622, %v1618
      %1655 = vmatprep.subr.bf16.mxu0 0
      %1656 = vmatpush1.bf16.msra.mxu0 %v1072
      %1657 = vmatprep.subr.bf16.mxu0 0
      %1658 = vmatpush1.bf16.msra.mxu0 %v1071
      %1659 = vmatprep.subr.bf16.mxu0 0
      %1660 = vmatpush1.bf16.msra.mxu0 %v1070
      %1661 = vmatprep.subr.bf16.mxu0 0
      %1662 = vmatpush1.bf16.msra.mxu0 %v1069
      %1663 = vmatprep.subr.bf16.mxu0 0
      %1664 = vmatpush1.bf16.msra.mxu0 %v1068
      %1665 = vmatprep.subr.bf16.mxu0 0
      %1666 = vmatpush1.bf16.msra.mxu0 %v1067
      %1667 = vmatprep.subr.bf16.mxu0 0
      %1668 = vmatpush1.bf16.msra.mxu0 %v1066
      %1669 = vmatprep.subr.bf16.mxu0 0
      %1670 = vmatpush1.bf16.msra.mxu0 %v1065
      %1671 = vmatprep.subr.bf16.mxu0 0
      %1672 = vmatpush2.bf16.msra.mxu0 %v1080
      %1673 = vmatprep.subr.bf16.mxu0 0
      %1674 = vmatpush2.bf16.msra.mxu0 %v1079
      %1675 = vmatprep.subr.bf16.mxu0 0
      %1676 = vmatpush2.bf16.msra.mxu0 %v1078
      %1677 = vmatprep.subr.bf16.mxu0 0
      %1678 = vmatpush2.bf16.msra.mxu0 %v1077
      %1679 = vmatprep.subr.bf16.mxu0 0
      %1680 = vmatpush2.bf16.msra.mxu0 %v1076
      %1681 = vmatprep.subr.bf16.mxu0 0
      %1682 = vmatpush2.bf16.msra.mxu0 %v1075
      %1683 = vmatprep.subr.bf16.mxu0 0
      %1684 = vmatpush2.bf16.msra.mxu0 %v1074
      %1685 = vmatprep.subr.bf16.mxu0 0
      %1686 = vmatpush2.bf16.msra.mxu0 %v1073
      %1687 = vmatprep.mubr.bf16.mxu0 %v1624
      %1688 = vmatmul.mubr.bf16.gmra.mxu0 %v1623
      %v1689 = vpop.f32.mrf.mxu0
      %v1690 = vadd.f32 0.0, %v1689
      %v1691 = vpop.f32.mrf.mxu0
      %v1692 = vpop.f32.mrf.mxu0
      %v1693 = vadd.f32 0.0, %v1692
      %v1694 = vpop.f32.mrf.mxu0
      %1695 = vmatprep.mubr.bf16.mxu0 %v1628
      %1696 = vmatmul.mubr.bf16.gmra.mxu0 %v1627
      %v1697 = vpop.f32.mrf.mxu0
      %v1698 = vadd.f32 0.0, %v1697
      %v1699 = vpop.f32.mrf.mxu0
      %v1700 = vpop.f32.mrf.mxu0
      %v1701 = vadd.f32 0.0, %v1700
      %v1702 = vpop.f32.mrf.mxu0
      %1703 = vmatprep.mubr.bf16.mxu0 %v1632
      %1704 = vmatmul.mubr.bf16.gmra.mxu0 %v1631
      %v1705 = vpop.f32.mrf.mxu0
      %v1706 = vadd.f32 0.0, %v1705
      %v1707 = vpop.f32.mrf.mxu0
      %v1708 = vpop.f32.mrf.mxu0
      %v1709 = vadd.f32 0.0, %v1708
      %v1710 = vpop.f32.mrf.mxu0
      %1711 = vmatprep.mubr.bf16.mxu0 %v1636
      %1712 = vmatmul.mubr.bf16.gmra.mxu0 %v1635
      %v1713 = vpop.f32.mrf.mxu0
      %v1714 = vadd.f32 0.0, %v1713
      %v1715 = vpop.f32.mrf.mxu0
      %v1716 = vpop.f32.mrf.mxu0
      %v1717 = vadd.f32 0.0, %v1716
      %v1718 = vpop.f32.mrf.mxu0
      %1719 = vdwg.mxu0
      %1720 = vmatprep.subr.bf16.mxu0 0
      %1721 = vmatpush1.bf16.msra.mxu0 %v1088
      %1722 = vmatprep.subr.bf16.mxu0 0
      %1723 = vmatpush1.bf16.msra.mxu0 %v1087
      %1724 = vmatprep.subr.bf16.mxu0 0
      %1725 = vmatpush1.bf16.msra.mxu0 %v1086
      %1726 = vmatprep.subr.bf16.mxu0 0
      %1727 = vmatpush1.bf16.msra.mxu0 %v1085
      %1728 = vmatprep.subr.bf16.mxu0 0
      %1729 = vmatpush1.bf16.msra.mxu0 %v1084
      %1730 = vmatprep.subr.bf16.mxu0 0
      %1731 = vmatpush1.bf16.msra.mxu0 %v1083
      %1732 = vmatprep.subr.bf16.mxu0 0
      %1733 = vmatpush1.bf16.msra.mxu0 %v1082
      %1734 = vmatprep.subr.bf16.mxu0 0
      %1735 = vmatpush1.bf16.msra.mxu0 %v1081
      %1736 = vmatprep.subr.bf16.mxu0 0
      %1737 = vmatpush2.bf16.msra.mxu0 %v1096
      %1738 = vmatprep.subr.bf16.mxu0 0
      %1739 = vmatpush2.bf16.msra.mxu0 %v1095
      %1740 = vmatprep.subr.bf16.mxu0 0
      %1741 = vmatpush2.bf16.msra.mxu0 %v1094
      %1742 = vmatprep.subr.bf16.mxu0 0
      %1743 = vmatpush2.bf16.msra.mxu0 %v1093
      %1744 = vmatprep.subr.bf16.mxu0 0
      %1745 = vmatpush2.bf16.msra.mxu0 %v1092
      %1746 = vmatprep.subr.bf16.mxu0 0
      %1747 = vmatpush2.bf16.msra.mxu0 %v1091
      %1748 = vmatprep.subr.bf16.mxu0 0
      %1749 = vmatpush2.bf16.msra.mxu0 %v1090
      %1750 = vmatprep.subr.bf16.mxu0 0
      %1751 = vmatpush2.bf16.msra.mxu0 %v1089
      %1752 = vmatprep.mubr.bf16.mxu0 %v1626
      %1753 = vmatmul.mubr.bf16.gmra.mxu0 %v1625
      %v1754 = vpop.f32.mrf.mxu0
      %v1755 = vadd.f32 %v1690, %v1754
      %v1756 = vpop.f32.mrf.mxu0
      %v1757 = vpop.f32.mrf.mxu0
      %v1758 = vadd.f32 %v1693, %v1757
      %v1759 = vpop.f32.mrf.mxu0
      %1760 = vmatprep.mubr.bf16.mxu0 %v1630
      %1761 = vmatmul.mubr.bf16.gmra.mxu0 %v1629
      %v1762 = vpop.f32.mrf.mxu0
      %v1763 = vadd.f32 %v1698, %v1762
      %v1764 = vpop.f32.mrf.mxu0
      %v1765 = vpop.f32.mrf.mxu0
      %v1766 = vadd.f32 %v1701, %v1765
      %v1767 = vpop.f32.mrf.mxu0
      %1768 = vmatprep.mubr.bf16.mxu0 %v1634
      %1769 = vmatmul.mubr.bf16.gmra.mxu0 %v1633
      %v1770 = vpop.f32.mrf.mxu0
      %v1771 = vadd.f32 %v1706, %v1770
      %v1772 = vpop.f32.mrf.mxu0
      %v1773 = vpop.f32.mrf.mxu0
      %v1774 = vadd.f32 %v1709, %v1773
      %v1775 = vpop.f32.mrf.mxu0
      %1776 = vmatprep.mubr.bf16.mxu0 %v1638
      %1777 = vmatmul.mubr.bf16.gmra.mxu0 %v1637
      %v1778 = vpop.f32.mrf.mxu0
      %v1779 = vadd.f32 %v1714, %v1778
      %v1780 = vpop.f32.mrf.mxu0
      %v1781 = vpop.f32.mrf.mxu0
      %v1782 = vadd.f32 %v1717, %v1781
      %v1783 = vpop.f32.mrf.mxu0
      %1784 = vdwg.mxu0
      %v1785 = vmax.f32 %v1550, %v1755
      %v1786 = vmax.f32 %v1551, %v1758
      %v1787 = vmax.f32 %v1552, %v1763
      %v1788 = vmax.f32 %v1553, %v1766
      %v1789 = vmax.f32 %v1554, %v1771
      %v1790 = vmax.f32 %v1555, %v1774
      %v1791 = vmax.f32 %v1556, %v1779
      %v1792 = vmax.f32 %v1557, %v1782
      %s1793 = scalar_lea.vmem %s2, 384
      %v1794 = vld [vmem:[%s1793] sm:$0xff]
      %v1795 = vld [vmem:[%s1793 + $0x8] sm:$0xff]
      %v1796 = vld [vmem:[%s1793 + $0x10] sm:$0xff]
      %v1797 = vld [vmem:[%s1793 + $0x18] sm:$0xff]
      %v1798 = vld [vmem:[%s1793 + $0x20] sm:$0xff]
      %v1799 = vld [vmem:[%s1793 + $0x28] sm:$0xff]
      %v1800 = vld [vmem:[%s1793 + $0x30] sm:$0xff]
      %v1801 = vld [vmem:[%s1793 + $0x38] sm:$0xff]
      %v1802 = vld [vmem:[%s1793 + $0x40] sm:$0xff]
      %v1803 = vld [vmem:[%s1793 + $0x48] sm:$0xff]
      %v1804 = vld [vmem:[%s1793 + $0x50] sm:$0xff]
      %v1805 = vld [vmem:[%s1793 + $0x58] sm:$0xff]
      %v1806 = vld [vmem:[%s1793 + $0x60] sm:$0xff]
      %v1807 = vld [vmem:[%s1793 + $0x68] sm:$0xff]
      %v1808 = vld [vmem:[%s1793 + $0x70] sm:$0xff]
      %v1809 = vld [vmem:[%s1793 + $0x78] sm:$0xff]
      %v1826 = vunpack.c.l.b16 %v1794
      %v1827 = vunpack.c.h.b16 %v1794
      %v1828 = vunpack.c.l.b16 %v1795
      %v1829 = vunpack.c.h.b16 %v1795
      %v1830 = vunpack.c.l.b16 %v1796
      %v1831 = vunpack.c.h.b16 %v1796
      %v1832 = vunpack.c.l.b16 %v1797
      %v1833 = vunpack.c.h.b16 %v1797
      %v1834 = vunpack.c.l.b16 %v1798
      %v1835 = vunpack.c.h.b16 %v1798
      %v1836 = vunpack.c.l.b16 %v1799
      %v1837 = vunpack.c.h.b16 %v1799
      %v1838 = vunpack.c.l.b16 %v1800
      %v1839 = vunpack.c.h.b16 %v1800
      %v1840 = vunpack.c.l.b16 %v1801
      %v1841 = vunpack.c.h.b16 %v1801
      %v1842 = vunpack.c.l.b16 %v1802
      %v1843 = vunpack.c.h.b16 %v1802
      %v1844 = vunpack.c.l.b16 %v1803
      %v1845 = vunpack.c.h.b16 %v1803
      %v1846 = vunpack.c.l.b16 %v1804
      %v1847 = vunpack.c.h.b16 %v1804
      %v1848 = vunpack.c.l.b16 %v1805
      %v1849 = vunpack.c.h.b16 %v1805
      %v1850 = vunpack.c.l.b16 %v1806
      %v1851 = vunpack.c.h.b16 %v1806
      %v1852 = vunpack.c.l.b16 %v1807
      %v1853 = vunpack.c.h.b16 %v1807
      %v1854 = vunpack.c.l.b16 %v1808
      %v1855 = vunpack.c.h.b16 %v1808
      %v1856 = vunpack.c.l.b16 %v1809
      %v1857 = vunpack.c.h.b16 %v1809
      %v1858 = vpack.c.b16 %v1830, %v1826
      %v1859 = vpack.c.b16 %v1831, %v1827
      %v1860 = vpack.c.b16 %v1832, %v1828
      %v1861 = vpack.c.b16 %v1833, %v1829
      %v1862 = vpack.c.b16 %v1838, %v1834
      %v1863 = vpack.c.b16 %v1839, %v1835
      %v1864 = vpack.c.b16 %v1840, %v1836
      %v1865 = vpack.c.b16 %v1841, %v1837
      %v1866 = vpack.c.b16 %v1846, %v1842
      %v1867 = vpack.c.b16 %v1847, %v1843
      %v1868 = vpack.c.b16 %v1848, %v1844
      %v1869 = vpack.c.b16 %v1849, %v1845
      %v1870 = vpack.c.b16 %v1854, %v1850
      %v1871 = vpack.c.b16 %v1855, %v1851
      %v1872 = vpack.c.b16 %v1856, %v1852
      %v1873 = vpack.c.b16 %v1857, %v1853
      %1890 = vmatprep.subr.bf16.mxu0 0
      %1891 = vmatpush1.bf16.msra.mxu0 %v1072
      %1892 = vmatprep.subr.bf16.mxu0 0
      %1893 = vmatpush1.bf16.msra.mxu0 %v1071
      %1894 = vmatprep.subr.bf16.mxu0 0
      %1895 = vmatpush1.bf16.msra.mxu0 %v1070
      %1896 = vmatprep.subr.bf16.mxu0 0
      %1897 = vmatpush1.bf16.msra.mxu0 %v1069
      %1898 = vmatprep.subr.bf16.mxu0 0
      %1899 = vmatpush1.bf16.msra.mxu0 %v1068
      %1900 = vmatprep.subr.bf16.mxu0 0
      %1901 = vmatpush1.bf16.msra.mxu0 %v1067
      %1902 = vmatprep.subr.bf16.mxu0 0
      %1903 = vmatpush1.bf16.msra.mxu0 %v1066
      %1904 = vmatprep.subr.bf16.mxu0 0
      %1905 = vmatpush1.bf16.msra.mxu0 %v1065
      %1906 = vmatprep.subr.bf16.mxu0 0
      %1907 = vmatpush2.bf16.msra.mxu0 %v1080
      %1908 = vmatprep.subr.bf16.mxu0 0
      %1909 = vmatpush2.bf16.msra.mxu0 %v1079
      %1910 = vmatprep.subr.bf16.mxu0 0
      %1911 = vmatpush2.bf16.msra.mxu0 %v1078
      %1912 = vmatprep.subr.bf16.mxu0 0
      %1913 = vmatpush2.bf16.msra.mxu0 %v1077
      %1914 = vmatprep.subr.bf16.mxu0 0
      %1915 = vmatpush2.bf16.msra.mxu0 %v1076
      %1916 = vmatprep.subr.bf16.mxu0 0
      %1917 = vmatpush2.bf16.msra.mxu0 %v1075
      %1918 = vmatprep.subr.bf16.mxu0 0
      %1919 = vmatpush2.bf16.msra.mxu0 %v1074
      %1920 = vmatprep.subr.bf16.mxu0 0
      %1921 = vmatpush2.bf16.msra.mxu0 %v1073
      %1922 = vmatprep.mubr.bf16.mxu0 %v1859
      %1923 = vmatmul.mubr.bf16.gmra.mxu0 %v1858
      %v1924 = vpop.f32.mrf.mxu0
      %v1925 = vadd.f32 0.0, %v1924
      %v1926 = vpop.f32.mrf.mxu0
      %v1927 = vpop.f32.mrf.mxu0
      %v1928 = vadd.f32 0.0, %v1927
      %v1929 = vpop.f32.mrf.mxu0
      %1930 = vmatprep.mubr.bf16.mxu0 %v1863
      %1931 = vmatmul.mubr.bf16.gmra.mxu0 %v1862
      %v1932 = vpop.f32.mrf.mxu0
      %v1933 = vadd.f32 0.0, %v1932
      %v1934 = vpop.f32.mrf.mxu0
      %v1935 = vpop.f32.mrf.mxu0
      %v1936 = vadd.f32 0.0, %v1935
      %v1937 = vpop.f32.mrf.mxu0
      %1938 = vmatprep.mubr.bf16.mxu0 %v1867
      %1939 = vmatmul.mubr.bf16.gmra.mxu0 %v1866
      %v1940 = vpop.f32.mrf.mxu0
      %v1941 = vadd.f32 0.0, %v1940
      %v1942 = vpop.f32.mrf.mxu0
      %v1943 = vpop.f32.mrf.mxu0
      %v1944 = vadd.f32 0.0, %v1943
      %v1945 = vpop.f32.mrf.mxu0
      %1946 = vmatprep.mubr.bf16.mxu0 %v1871
      %1947 = vmatmul.mubr.bf16.gmra.mxu0 %v1870
      %v1948 = vpop.f32.mrf.mxu0
      %v1949 = vadd.f32 0.0, %v1948
      %v1950 = vpop.f32.mrf.mxu0
      %v1951 = vpop.f32.mrf.mxu0
      %v1952 = vadd.f32 0.0, %v1951
      %v1953 = vpop.f32.mrf.mxu0
      %1954 = vdwg.mxu0
      %1955 = vmatprep.subr.bf16.mxu0 0
      %1956 = vmatpush1.bf16.msra.mxu0 %v1088
      %1957 = vmatprep.subr.bf16.mxu0 0
      %1958 = vmatpush1.bf16.msra.mxu0 %v1087
      %1959 = vmatprep.subr.bf16.mxu0 0
      %1960 = vmatpush1.bf16.msra.mxu0 %v1086
      %1961 = vmatprep.subr.bf16.mxu0 0
      %1962 = vmatpush1.bf16.msra.mxu0 %v1085
      %1963 = vmatprep.subr.bf16.mxu0 0
      %1964 = vmatpush1.bf16.msra.mxu0 %v1084
      %1965 = vmatprep.subr.bf16.mxu0 0
      %1966 = vmatpush1.bf16.msra.mxu0 %v1083
      %1967 = vmatprep.subr.bf16.mxu0 0
      %1968 = vmatpush1.bf16.msra.mxu0 %v1082
      %1969 = vmatprep.subr.bf16.mxu0 0
      %1970 = vmatpush1.bf16.msra.mxu0 %v1081
      %1971 = vmatprep.subr.bf16.mxu0 0
      %1972 = vmatpush2.bf16.msra.mxu0 %v1096
      %1973 = vmatprep.subr.bf16.mxu0 0
      %1974 = vmatpush2.bf16.msra.mxu0 %v1095
      %1975 = vmatprep.subr.bf16.mxu0 0
      %1976 = vmatpush2.bf16.msra.mxu0 %v1094
      %1977 = vmatprep.subr.bf16.mxu0 0
      %1978 = vmatpush2.bf16.msra.mxu0 %v1093
      %1979 = vmatprep.subr.bf16.mxu0 0
      %1980 = vmatpush2.bf16.msra.mxu0 %v1092
      %1981 = vmatprep.subr.bf16.mxu0 0
      %1982 = vmatpush2.bf16.msra.mxu0 %v1091
      %1983 = vmatprep.subr.bf16.mxu0 0
      %1984 = vmatpush2.bf16.msra.mxu0 %v1090
      %1985 = vmatprep.subr.bf16.mxu0 0
      %1986 = vmatpush2.bf16.msra.mxu0 %v1089
      %1987 = vmatprep.mubr.bf16.mxu0 %v1861
      %1988 = vmatmul.mubr.bf16.gmra.mxu0 %v1860
      %v1989 = vpop.f32.mrf.mxu0
      %v1990 = vadd.f32 %v1925, %v1989
      %v1991 = vpop.f32.mrf.mxu0
      %v1992 = vpop.f32.mrf.mxu0
      %v1993 = vadd.f32 %v1928, %v1992
      %v1994 = vpop.f32.mrf.mxu0
      %1995 = vmatprep.mubr.bf16.mxu0 %v1865
      %1996 = vmatmul.mubr.bf16.gmra.mxu0 %v1864
      %v1997 = vpop.f32.mrf.mxu0
      %v1998 = vadd.f32 %v1933, %v1997
      %v1999 = vpop.f32.mrf.mxu0
      %v2000 = vpop.f32.mrf.mxu0
      %v2001 = vadd.f32 %v1936, %v2000
      %v2002 = vpop.f32.mrf.mxu0
      %2003 = vmatprep.mubr.bf16.mxu0 %v1869
      %2004 = vmatmul.mubr.bf16.gmra.mxu0 %v1868
      %v2005 = vpop.f32.mrf.mxu0
      %v2006 = vadd.f32 %v1941, %v2005
      %v2007 = vpop.f32.mrf.mxu0
      %v2008 = vpop.f32.mrf.mxu0
      %v2009 = vadd.f32 %v1944, %v2008
      %v2010 = vpop.f32.mrf.mxu0
      %2011 = vmatprep.mubr.bf16.mxu0 %v1873
      %2012 = vmatmul.mubr.bf16.gmra.mxu0 %v1872
      %v2013 = vpop.f32.mrf.mxu0
      %v2014 = vadd.f32 %v1949, %v2013
      %v2015 = vpop.f32.mrf.mxu0
      %v2016 = vpop.f32.mrf.mxu0
      %v2017 = vadd.f32 %v1952, %v2016
      %v2018 = vpop.f32.mrf.mxu0
      %2019 = vdwg.mxu0
      %v2020 = vmax.f32 %v1785, %v1990
      %v2021 = vmax.f32 %v1786, %v1993
      %v2022 = vmax.f32 %v1787, %v1998
      %v2023 = vmax.f32 %v1788, %v2001
      %v2024 = vmax.f32 %v1789, %v2006
      %v2025 = vmax.f32 %v1790, %v2009
      %v2026 = vmax.f32 %v1791, %v2014
      %v2027 = vmax.f32 %v1792, %v2017
      %s2028 = scalar_lea.vmem %s2, 512
      %v2029 = vld [vmem:[%s2028] sm:$0xff]
      %v2030 = vld [vmem:[%s2028 + $0x8] sm:$0xff]
      %v2031 = vld [vmem:[%s2028 + $0x10] sm:$0xff]
      %v2032 = vld [vmem:[%s2028 + $0x18] sm:$0xff]
      %v2033 = vld [vmem:[%s2028 + $0x20] sm:$0xff]
      %v2034 = vld [vmem:[%s2028 + $0x28] sm:$0xff]
      %v2035 = vld [vmem:[%s2028 + $0x30] sm:$0xff]
      %v2036 = vld [vmem:[%s2028 + $0x38] sm:$0xff]
      %v2037 = vld [vmem:[%s2028 + $0x40] sm:$0xff]
      %v2038 = vld [vmem:[%s2028 + $0x48] sm:$0xff]
      %v2039 = vld [vmem:[%s2028 + $0x50] sm:$0xff]
      %v2040 = vld [vmem:[%s2028 + $0x58] sm:$0xff]
      %v2041 = vld [vmem:[%s2028 + $0x60] sm:$0xff]
      %v2042 = vld [vmem:[%s2028 + $0x68] sm:$0xff]
      %v2043 = vld [vmem:[%s2028 + $0x70] sm:$0xff]
      %v2044 = vld [vmem:[%s2028 + $0x78] sm:$0xff]
      %v2061 = vunpack.c.l.b16 %v2029
      %v2062 = vunpack.c.h.b16 %v2029
      %v2063 = vunpack.c.l.b16 %v2030
      %v2064 = vunpack.c.h.b16 %v2030
      %v2065 = vunpack.c.l.b16 %v2031
      %v2066 = vunpack.c.h.b16 %v2031
      %v2067 = vunpack.c.l.b16 %v2032
      %v2068 = vunpack.c.h.b16 %v2032
      %v2069 = vunpack.c.l.b16 %v2033
      %v2070 = vunpack.c.h.b16 %v2033
      %v2071 = vunpack.c.l.b16 %v2034
      %v2072 = vunpack.c.h.b16 %v2034
      %v2073 = vunpack.c.l.b16 %v2035
      %v2074 = vunpack.c.h.b16 %v2035
      %v2075 = vunpack.c.l.b16 %v2036
      %v2076 = vunpack.c.h.b16 %v2036
      %v2077 = vunpack.c.l.b16 %v2037
      %v2078 = vunpack.c.h.b16 %v2037
      %v2079 = vunpack.c.l.b16 %v2038
      %v2080 = vunpack.c.h.b16 %v2038
      %v2081 = vunpack.c.l.b16 %v2039
      %v2082 = vunpack.c.h.b16 %v2039
      %v2083 = vunpack.c.l.b16 %v2040
      %v2084 = vunpack.c.h.b16 %v2040
      %v2085 = vunpack.c.l.b16 %v2041
      %v2086 = vunpack.c.h.b16 %v2041
      %v2087 = vunpack.c.l.b16 %v2042
      %v2088 = vunpack.c.h.b16 %v2042
      %v2089 = vunpack.c.l.b16 %v2043
      %v2090 = vunpack.c.h.b16 %v2043
      %v2091 = vunpack.c.l.b16 %v2044
      %v2092 = vunpack.c.h.b16 %v2044
      %v2093 = vpack.c.b16 %v2065, %v2061
      %v2094 = vpack.c.b16 %v2066, %v2062
      %v2095 = vpack.c.b16 %v2067, %v2063
      %v2096 = vpack.c.b16 %v2068, %v2064
      %v2097 = vpack.c.b16 %v2073, %v2069
      %v2098 = vpack.c.b16 %v2074, %v2070
      %v2099 = vpack.c.b16 %v2075, %v2071
      %v2100 = vpack.c.b16 %v2076, %v2072
      %v2101 = vpack.c.b16 %v2081, %v2077
      %v2102 = vpack.c.b16 %v2082, %v2078
      %v2103 = vpack.c.b16 %v2083, %v2079
      %v2104 = vpack.c.b16 %v2084, %v2080
      %v2105 = vpack.c.b16 %v2089, %v2085
      %v2106 = vpack.c.b16 %v2090, %v2086
      %v2107 = vpack.c.b16 %v2091, %v2087
      %v2108 = vpack.c.b16 %v2092, %v2088
      %2125 = vmatprep.subr.bf16.mxu0 0
      %2126 = vmatpush1.bf16.msra.mxu0 %v1072
      %2127 = vmatprep.subr.bf16.mxu0 0
      %2128 = vmatpush1.bf16.msra.mxu0 %v1071
      %2129 = vmatprep.subr.bf16.mxu0 0
      %2130 = vmatpush1.bf16.msra.mxu0 %v1070
      %2131 = vmatprep.subr.bf16.mxu0 0
      %2132 = vmatpush1.bf16.msra.mxu0 %v1069
      %2133 = vmatprep.subr.bf16.mxu0 0
      %2134 = vmatpush1.bf16.msra.mxu0 %v1068
      %2135 = vmatprep.subr.bf16.mxu0 0
      %2136 = vmatpush1.bf16.msra.mxu0 %v1067
      %2137 = vmatprep.subr.bf16.mxu0 0
      %2138 = vmatpush1.bf16.msra.mxu0 %v1066
      %2139 = vmatprep.subr.bf16.mxu0 0
      %2140 = vmatpush1.bf16.msra.mxu0 %v1065
      %2141 = vmatprep.subr.bf16.mxu0 0
      %2142 = vmatpush2.bf16.msra.mxu0 %v1080
      %2143 = vmatprep.subr.bf16.mxu0 0
      %2144 = vmatpush2.bf16.msra.mxu0 %v1079
      %2145 = vmatprep.subr.bf16.mxu0 0
      %2146 = vmatpush2.bf16.msra.mxu0 %v1078
      %2147 = vmatprep.subr.bf16.mxu0 0
      %2148 = vmatpush2.bf16.msra.mxu0 %v1077
      %2149 = vmatprep.subr.bf16.mxu0 0
      %2150 = vmatpush2.bf16.msra.mxu0 %v1076
      %2151 = vmatprep.subr.bf16.mxu0 0
      %2152 = vmatpush2.bf16.msra.mxu0 %v1075
      %2153 = vmatprep.subr.bf16.mxu0 0
      %2154 = vmatpush2.bf16.msra.mxu0 %v1074
      %2155 = vmatprep.subr.bf16.mxu0 0
      %2156 = vmatpush2.bf16.msra.mxu0 %v1073
      %2157 = vmatprep.mubr.bf16.mxu0 %v2094
      %2158 = vmatmul.mubr.bf16.gmra.mxu0 %v2093
      %v2159 = vpop.f32.mrf.mxu0
      %v2160 = vadd.f32 0.0, %v2159
      %v2161 = vpop.f32.mrf.mxu0
      %v2162 = vpop.f32.mrf.mxu0
      %v2163 = vadd.f32 0.0, %v2162
      %v2164 = vpop.f32.mrf.mxu0
      %2165 = vmatprep.mubr.bf16.mxu0 %v2098
      %2166 = vmatmul.mubr.bf16.gmra.mxu0 %v2097
      %v2167 = vpop.f32.mrf.mxu0
      %v2168 = vadd.f32 0.0, %v2167
      %v2169 = vpop.f32.mrf.mxu0
      %v2170 = vpop.f32.mrf.mxu0
      %v2171 = vadd.f32 0.0, %v2170
      %v2172 = vpop.f32.mrf.mxu0
      %2173 = vmatprep.mubr.bf16.mxu0 %v2102
      %2174 = vmatmul.mubr.bf16.gmra.mxu0 %v2101
      %v2175 = vpop.f32.mrf.mxu0
      %v2176 = vadd.f32 0.0, %v2175
      %v2177 = vpop.f32.mrf.mxu0
      %v2178 = vpop.f32.mrf.mxu0
      %v2179 = vadd.f32 0.0, %v2178
      %v2180 = vpop.f32.mrf.mxu0
      %2181 = vmatprep.mubr.bf16.mxu0 %v2106
      %2182 = vmatmul.mubr.bf16.gmra.mxu0 %v2105
      %v2183 = vpop.f32.mrf.mxu0
      %v2184 = vadd.f32 0.0, %v2183
      %v2185 = vpop.f32.mrf.mxu0
      %v2186 = vpop.f32.mrf.mxu0
      %v2187 = vadd.f32 0.0, %v2186
      %v2188 = vpop.f32.mrf.mxu0
      %2189 = vdwg.mxu0
      %2190 = vmatprep.subr.bf16.mxu0 0
      %2191 = vmatpush1.bf16.msra.mxu0 %v1088
      %2192 = vmatprep.subr.bf16.mxu0 0
      %2193 = vmatpush1.bf16.msra.mxu0 %v1087
      %2194 = vmatprep.subr.bf16.mxu0 0
      %2195 = vmatpush1.bf16.msra.mxu0 %v1086
      %2196 = vmatprep.subr.bf16.mxu0 0
      %2197 = vmatpush1.bf16.msra.mxu0 %v1085
      %2198 = vmatprep.subr.bf16.mxu0 0
      %2199 = vmatpush1.bf16.msra.mxu0 %v1084
      %2200 = vmatprep.subr.bf16.mxu0 0
      %2201 = vmatpush1.bf16.msra.mxu0 %v1083
      %2202 = vmatprep.subr.bf16.mxu0 0
      %2203 = vmatpush1.bf16.msra.mxu0 %v1082
      %2204 = vmatprep.subr.bf16.mxu0 0
      %2205 = vmatpush1.bf16.msra.mxu0 %v1081
      %2206 = vmatprep.subr.bf16.mxu0 0
      %2207 = vmatpush2.bf16.msra.mxu0 %v1096
      %2208 = vmatprep.subr.bf16.mxu0 0
      %2209 = vmatpush2.bf16.msra.mxu0 %v1095
      %2210 = vmatprep.subr.bf16.mxu0 0
      %2211 = vmatpush2.bf16.msra.mxu0 %v1094
      %2212 = vmatprep.subr.bf16.mxu0 0
      %2213 = vmatpush2.bf16.msra.mxu0 %v1093
      %2214 = vmatprep.subr.bf16.mxu0 0
      %2215 = vmatpush2.bf16.msra.mxu0 %v1092
      %2216 = vmatprep.subr.bf16.mxu0 0
      %2217 = vmatpush2.bf16.msra.mxu0 %v1091
      %2218 = vmatprep.subr.bf16.mxu0 0
      %2219 = vmatpush2.bf16.msra.mxu0 %v1090
      %2220 = vmatprep.subr.bf16.mxu0 0
      %2221 = vmatpush2.bf16.msra.mxu0 %v1089
      %2222 = vmatprep.mubr.bf16.mxu0 %v2096
      %2223 = vmatmul.mubr.bf16.gmra.mxu0 %v2095
      %v2224 = vpop.f32.mrf.mxu0
      %v2225 = vadd.f32 %v2160, %v2224
      %v2226 = vpop.f32.mrf.mxu0
      %v2227 = vpop.f32.mrf.mxu0
      %v2228 = vadd.f32 %v2163, %v2227
      %v2229 = vpop.f32.mrf.mxu0
      %2230 = vmatprep.mubr.bf16.mxu0 %v2100
      %2231 = vmatmul.mubr.bf16.gmra.mxu0 %v2099
      %v2232 = vpop.f32.mrf.mxu0
      %v2233 = vadd.f32 %v2168, %v2232
      %v2234 = vpop.f32.mrf.mxu0
      %v2235 = vpop.f32.mrf.mxu0
      %v2236 = vadd.f32 %v2171, %v2235
      %v2237 = vpop.f32.mrf.mxu0
      %2238 = vmatprep.mubr.bf16.mxu0 %v2104
      %2239 = vmatmul.mubr.bf16.gmra.mxu0 %v2103
      %v2240 = vpop.f32.mrf.mxu0
      %v2241 = vadd.f32 %v2176, %v2240
      %v2242 = vpop.f32.mrf.mxu0
      %v2243 = vpop.f32.mrf.mxu0
      %v2244 = vadd.f32 %v2179, %v2243
      %v2245 = vpop.f32.mrf.mxu0
      %2246 = vmatprep.mubr.bf16.mxu0 %v2108
      %2247 = vmatmul.mubr.bf16.gmra.mxu0 %v2107
      %v2248 = vpop.f32.mrf.mxu0
      %v2249 = vadd.f32 %v2184, %v2248
      %v2250 = vpop.f32.mrf.mxu0
      %v2251 = vpop.f32.mrf.mxu0
      %v2252 = vadd.f32 %v2187, %v2251
      %v2253 = vpop.f32.mrf.mxu0
      %2254 = vdwg.mxu0
      %v2255 = vmax.f32 %v2020, %v2225
      %v2256 = vmax.f32 %v2021, %v2228
      %v2257 = vmax.f32 %v2022, %v2233
      %v2258 = vmax.f32 %v2023, %v2236
      %v2259 = vmax.f32 %v2024, %v2241
      %v2260 = vmax.f32 %v2025, %v2244
      %v2261 = vmax.f32 %v2026, %v2249
      %v2262 = vmax.f32 %v2027, %v2252
      %s2263 = scalar_lea.vmem %s2, 640
      %v2264 = vld [vmem:[%s2263] sm:$0xff]
      %v2265 = vld [vmem:[%s2263 + $0x8] sm:$0xff]
      %v2266 = vld [vmem:[%s2263 + $0x10] sm:$0xff]
      %v2267 = vld [vmem:[%s2263 + $0x18] sm:$0xff]
      %v2268 = vld [vmem:[%s2263 + $0x20] sm:$0xff]
      %v2269 = vld [vmem:[%s2263 + $0x28] sm:$0xff]
      %v2270 = vld [vmem:[%s2263 + $0x30] sm:$0xff]
      %v2271 = vld [vmem:[%s2263 + $0x38] sm:$0xff]
      %v2272 = vld [vmem:[%s2263 + $0x40] sm:$0xff]
      %v2273 = vld [vmem:[%s2263 + $0x48] sm:$0xff]
      %v2274 = vld [vmem:[%s2263 + $0x50] sm:$0xff]
      %v2275 = vld [vmem:[%s2263 + $0x58] sm:$0xff]
      %v2276 = vld [vmem:[%s2263 + $0x60] sm:$0xff]
      %v2277 = vld [vmem:[%s2263 + $0x68] sm:$0xff]
      %v2278 = vld [vmem:[%s2263 + $0x70] sm:$0xff]
      %v2279 = vld [vmem:[%s2263 + $0x78] sm:$0xff]
      %v2296 = vunpack.c.l.b16 %v2264
      %v2297 = vunpack.c.h.b16 %v2264
      %v2298 = vunpack.c.l.b16 %v2265
      %v2299 = vunpack.c.h.b16 %v2265
      %v2300 = vunpack.c.l.b16 %v2266
      %v2301 = vunpack.c.h.b16 %v2266
      %v2302 = vunpack.c.l.b16 %v2267
      %v2303 = vunpack.c.h.b16 %v2267
      %v2304 = vunpack.c.l.b16 %v2268
      %v2305 = vunpack.c.h.b16 %v2268
      %v2306 = vunpack.c.l.b16 %v2269
      %v2307 = vunpack.c.h.b16 %v2269
      %v2308 = vunpack.c.l.b16 %v2270
      %v2309 = vunpack.c.h.b16 %v2270
      %v2310 = vunpack.c.l.b16 %v2271
      %v2311 = vunpack.c.h.b16 %v2271
      %v2312 = vunpack.c.l.b16 %v2272
      %v2313 = vunpack.c.h.b16 %v2272
      %v2314 = vunpack.c.l.b16 %v2273
      %v2315 = vunpack.c.h.b16 %v2273
      %v2316 = vunpack.c.l.b16 %v2274
      %v2317 = vunpack.c.h.b16 %v2274
      %v2318 = vunpack.c.l.b16 %v2275
      %v2319 = vunpack.c.h.b16 %v2275
      %v2320 = vunpack.c.l.b16 %v2276
      %v2321 = vunpack.c.h.b16 %v2276
      %v2322 = vunpack.c.l.b16 %v2277
      %v2323 = vunpack.c.h.b16 %v2277
      %v2324 = vunpack.c.l.b16 %v2278
      %v2325 = vunpack.c.h.b16 %v2278
      %v2326 = vunpack.c.l.b16 %v2279
      %v2327 = vunpack.c.h.b16 %v2279
      %v2328 = vpack.c.b16 %v2300, %v2296
      %v2329 = vpack.c.b16 %v2301, %v2297
      %v2330 = vpack.c.b16 %v2302, %v2298
      %v2331 = vpack.c.b16 %v2303, %v2299
      %v2332 = vpack.c.b16 %v2308, %v2304
      %v2333 = vpack.c.b16 %v2309, %v2305
      %v2334 = vpack.c.b16 %v2310, %v2306
      %v2335 = vpack.c.b16 %v2311, %v2307
      %v2336 = vpack.c.b16 %v2316, %v2312
      %v2337 = vpack.c.b16 %v2317, %v2313
      %v2338 = vpack.c.b16 %v2318, %v2314
      %v2339 = vpack.c.b16 %v2319, %v2315
      %v2340 = vpack.c.b16 %v2324, %v2320
      %v2341 = vpack.c.b16 %v2325, %v2321
      %v2342 = vpack.c.b16 %v2326, %v2322
      %v2343 = vpack.c.b16 %v2327, %v2323
      %2360 = vmatprep.subr.bf16.mxu0 0
      %2361 = vmatpush1.bf16.msra.mxu0 %v1072
      %2362 = vmatprep.subr.bf16.mxu0 0
      %2363 = vmatpush1.bf16.msra.mxu0 %v1071
      %2364 = vmatprep.subr.bf16.mxu0 0
      %2365 = vmatpush1.bf16.msra.mxu0 %v1070
      %2366 = vmatprep.subr.bf16.mxu0 0
      %2367 = vmatpush1.bf16.msra.mxu0 %v1069
      %2368 = vmatprep.subr.bf16.mxu0 0
      %2369 = vmatpush1.bf16.msra.mxu0 %v1068
      %2370 = vmatprep.subr.bf16.mxu0 0
      %2371 = vmatpush1.bf16.msra.mxu0 %v1067
      %2372 = vmatprep.subr.bf16.mxu0 0
      %2373 = vmatpush1.bf16.msra.mxu0 %v1066
      %2374 = vmatprep.subr.bf16.mxu0 0
      %2375 = vmatpush1.bf16.msra.mxu0 %v1065
      %2376 = vmatprep.subr.bf16.mxu0 0
      %2377 = vmatpush2.bf16.msra.mxu0 %v1080
      %2378 = vmatprep.subr.bf16.mxu0 0
      %2379 = vmatpush2.bf16.msra.mxu0 %v1079
      %2380 = vmatprep.subr.bf16.mxu0 0
      %2381 = vmatpush2.bf16.msra.mxu0 %v1078
      %2382 = vmatprep.subr.bf16.mxu0 0
      %2383 = vmatpush2.bf16.msra.mxu0 %v1077
      %2384 = vmatprep.subr.bf16.mxu0 0
      %2385 = vmatpush2.bf16.msra.mxu0 %v1076
      %2386 = vmatprep.subr.bf16.mxu0 0
      %2387 = vmatpush2.bf16.msra.mxu0 %v1075
      %2388 = vmatprep.subr.bf16.mxu0 0
      %2389 = vmatpush2.bf16.msra.mxu0 %v1074
      %2390 = vmatprep.subr.bf16.mxu0 0
      %2391 = vmatpush2.bf16.msra.mxu0 %v1073
      %2392 = vmatprep.mubr.bf16.mxu0 %v2329
      %2393 = vmatmul.mubr.bf16.gmra.mxu0 %v2328
      %v2394 = vpop.f32.mrf.mxu0
      %v2395 = vadd.f32 0.0, %v2394
      %v2396 = vpop.f32.mrf.mxu0
      %v2397 = vpop.f32.mrf.mxu0
      %v2398 = vadd.f32 0.0, %v2397
      %v2399 = vpop.f32.mrf.mxu0
      %2400 = vmatprep.mubr.bf16.mxu0 %v2333
      %2401 = vmatmul.mubr.bf16.gmra.mxu0 %v2332
      %v2402 = vpop.f32.mrf.mxu0
      %v2403 = vadd.f32 0.0, %v2402
      %v2404 = vpop.f32.mrf.mxu0
      %v2405 = vpop.f32.mrf.mxu0
      %v2406 = vadd.f32 0.0, %v2405
      %v2407 = vpop.f32.mrf.mxu0
      %2408 = vmatprep.mubr.bf16.mxu0 %v2337
      %2409 = vmatmul.mubr.bf16.gmra.mxu0 %v2336
      %v2410 = vpop.f32.mrf.mxu0
      %v2411 = vadd.f32 0.0, %v2410
      %v2412 = vpop.f32.mrf.mxu0
      %v2413 = vpop.f32.mrf.mxu0
      %v2414 = vadd.f32 0.0, %v2413
      %v2415 = vpop.f32.mrf.mxu0
      %2416 = vmatprep.mubr.bf16.mxu0 %v2341
      %2417 = vmatmul.mubr.bf16.gmra.mxu0 %v2340
      %v2418 = vpop.f32.mrf.mxu0
      %v2419 = vadd.f32 0.0, %v2418
      %v2420 = vpop.f32.mrf.mxu0
      %v2421 = vpop.f32.mrf.mxu0
      %v2422 = vadd.f32 0.0, %v2421
      %v2423 = vpop.f32.mrf.mxu0
      %2424 = vdwg.mxu0
      %2425 = vmatprep.subr.bf16.mxu0 0
      %2426 = vmatpush1.bf16.msra.mxu0 %v1088
      %2427 = vmatprep.subr.bf16.mxu0 0
      %2428 = vmatpush1.bf16.msra.mxu0 %v1087
      %2429 = vmatprep.subr.bf16.mxu0 0
      %2430 = vmatpush1.bf16.msra.mxu0 %v1086
      %2431 = vmatprep.subr.bf16.mxu0 0
      %2432 = vmatpush1.bf16.msra.mxu0 %v1085
      %2433 = vmatprep.subr.bf16.mxu0 0
      %2434 = vmatpush1.bf16.msra.mxu0 %v1084
      %2435 = vmatprep.subr.bf16.mxu0 0
      %2436 = vmatpush1.bf16.msra.mxu0 %v1083
      %2437 = vmatprep.subr.bf16.mxu0 0
      %2438 = vmatpush1.bf16.msra.mxu0 %v1082
      %2439 = vmatprep.subr.bf16.mxu0 0
      %2440 = vmatpush1.bf16.msra.mxu0 %v1081
      %2441 = vmatprep.subr.bf16.mxu0 0
      %2442 = vmatpush2.bf16.msra.mxu0 %v1096
      %2443 = vmatprep.subr.bf16.mxu0 0
      %2444 = vmatpush2.bf16.msra.mxu0 %v1095
      %2445 = vmatprep.subr.bf16.mxu0 0
      %2446 = vmatpush2.bf16.msra.mxu0 %v1094
      %2447 = vmatprep.subr.bf16.mxu0 0
      %2448 = vmatpush2.bf16.msra.mxu0 %v1093
      %2449 = vmatprep.subr.bf16.mxu0 0
      %2450 = vmatpush2.bf16.msra.mxu0 %v1092
      %2451 = vmatprep.subr.bf16.mxu0 0
      %2452 = vmatpush2.bf16.msra.mxu0 %v1091
      %2453 = vmatprep.subr.bf16.mxu0 0
      %2454 = vmatpush2.bf16.msra.mxu0 %v1090
      %2455 = vmatprep.subr.bf16.mxu0 0
      %2456 = vmatpush2.bf16.msra.mxu0 %v1089
      %2457 = vmatprep.mubr.bf16.mxu0 %v2331
      %2458 = vmatmul.mubr.bf16.gmra.mxu0 %v2330
      %v2459 = vpop.f32.mrf.mxu0
      %v2460 = vadd.f32 %v2395, %v2459
      %v2461 = vpop.f32.mrf.mxu0
      %v2462 = vpop.f32.mrf.mxu0
      %v2463 = vadd.f32 %v2398, %v2462
      %v2464 = vpop.f32.mrf.mxu0
      %2465 = vmatprep.mubr.bf16.mxu0 %v2335
      %2466 = vmatmul.mubr.bf16.gmra.mxu0 %v2334
      %v2467 = vpop.f32.mrf.mxu0
      %v2468 = vadd.f32 %v2403, %v2467
      %v2469 = vpop.f32.mrf.mxu0
      %v2470 = vpop.f32.mrf.mxu0
      %v2471 = vadd.f32 %v2406, %v2470
      %v2472 = vpop.f32.mrf.mxu0
      %2473 = vmatprep.mubr.bf16.mxu0 %v2339
      %2474 = vmatmul.mubr.bf16.gmra.mxu0 %v2338
      %v2475 = vpop.f32.mrf.mxu0
      %v2476 = vadd.f32 %v2411, %v2475
      %v2477 = vpop.f32.mrf.mxu0
      %v2478 = vpop.f32.mrf.mxu0
      %v2479 = vadd.f32 %v2414, %v2478
      %v2480 = vpop.f32.mrf.mxu0
      %2481 = vmatprep.mubr.bf16.mxu0 %v2343
      %2482 = vmatmul.mubr.bf16.gmra.mxu0 %v2342
      %v2483 = vpop.f32.mrf.mxu0
      %v2484 = vadd.f32 %v2419, %v2483
      %v2485 = vpop.f32.mrf.mxu0
      %v2486 = vpop.f32.mrf.mxu0
      %v2487 = vadd.f32 %v2422, %v2486
      %v2488 = vpop.f32.mrf.mxu0
      %2489 = vdwg.mxu0
      %v2490 = vmax.f32 %v2255, %v2460
      %v2491 = vmax.f32 %v2256, %v2463
      %v2492 = vmax.f32 %v2257, %v2468
      %v2493 = vmax.f32 %v2258, %v2471
      %v2494 = vmax.f32 %v2259, %v2476
      %v2495 = vmax.f32 %v2260, %v2479
      %v2496 = vmax.f32 %v2261, %v2484
      %v2497 = vmax.f32 %v2262, %v2487
      %s2498 = scalar_lea.vmem %s2, 768
      %v2499 = vld [vmem:[%s2498] sm:$0xff]
      %v2500 = vld [vmem:[%s2498 + $0x8] sm:$0xff]
      %v2501 = vld [vmem:[%s2498 + $0x10] sm:$0xff]
      %v2502 = vld [vmem:[%s2498 + $0x18] sm:$0xff]
      %v2503 = vld [vmem:[%s2498 + $0x20] sm:$0xff]
      %v2504 = vld [vmem:[%s2498 + $0x28] sm:$0xff]
      %v2505 = vld [vmem:[%s2498 + $0x30] sm:$0xff]
      %v2506 = vld [vmem:[%s2498 + $0x38] sm:$0xff]
      %v2507 = vld [vmem:[%s2498 + $0x40] sm:$0xff]
      %v2508 = vld [vmem:[%s2498 + $0x48] sm:$0xff]
      %v2509 = vld [vmem:[%s2498 + $0x50] sm:$0xff]
      %v2510 = vld [vmem:[%s2498 + $0x58] sm:$0xff]
      %v2511 = vld [vmem:[%s2498 + $0x60] sm:$0xff]
      %v2512 = vld [vmem:[%s2498 + $0x68] sm:$0xff]
      %v2513 = vld [vmem:[%s2498 + $0x70] sm:$0xff]
      %v2514 = vld [vmem:[%s2498 + $0x78] sm:$0xff]
      %v2531 = vunpack.c.l.b16 %v2499
      %v2532 = vunpack.c.h.b16 %v2499
      %v2533 = vunpack.c.l.b16 %v2500
      %v2534 = vunpack.c.h.b16 %v2500
      %v2535 = vunpack.c.l.b16 %v2501
      %v2536 = vunpack.c.h.b16 %v2501
      %v2537 = vunpack.c.l.b16 %v2502
      %v2538 = vunpack.c.h.b16 %v2502
      %v2539 = vunpack.c.l.b16 %v2503
      %v2540 = vunpack.c.h.b16 %v2503
      %v2541 = vunpack.c.l.b16 %v2504
      %v2542 = vunpack.c.h.b16 %v2504
      %v2543 = vunpack.c.l.b16 %v2505
      %v2544 = vunpack.c.h.b16 %v2505
      %v2545 = vunpack.c.l.b16 %v2506
      %v2546 = vunpack.c.h.b16 %v2506
      %v2547 = vunpack.c.l.b16 %v2507
      %v2548 = vunpack.c.h.b16 %v2507
      %v2549 = vunpack.c.l.b16 %v2508
      %v2550 = vunpack.c.h.b16 %v2508
      %v2551 = vunpack.c.l.b16 %v2509
      %v2552 = vunpack.c.h.b16 %v2509
      %v2553 = vunpack.c.l.b16 %v2510
      %v2554 = vunpack.c.h.b16 %v2510
      %v2555 = vunpack.c.l.b16 %v2511
      %v2556 = vunpack.c.h.b16 %v2511
      %v2557 = vunpack.c.l.b16 %v2512
      %v2558 = vunpack.c.h.b16 %v2512
      %v2559 = vunpack.c.l.b16 %v2513
      %v2560 = vunpack.c.h.b16 %v2513
      %v2561 = vunpack.c.l.b16 %v2514
      %v2562 = vunpack.c.h.b16 %v2514
      %v2563 = vpack.c.b16 %v2535, %v2531
      %v2564 = vpack.c.b16 %v2536, %v2532
      %v2565 = vpack.c.b16 %v2537, %v2533
      %v2566 = vpack.c.b16 %v2538, %v2534
      %v2567 = vpack.c.b16 %v2543, %v2539
      %v2568 = vpack.c.b16 %v2544, %v2540
      %v2569 = vpack.c.b16 %v2545, %v2541
      %v2570 = vpack.c.b16 %v2546, %v2542
      %v2571 = vpack.c.b16 %v2551, %v2547
      %v2572 = vpack.c.b16 %v2552, %v2548
      %v2573 = vpack.c.b16 %v2553, %v2549
      %v2574 = vpack.c.b16 %v2554, %v2550
      %v2575 = vpack.c.b16 %v2559, %v2555
      %v2576 = vpack.c.b16 %v2560, %v2556
      %v2577 = vpack.c.b16 %v2561, %v2557
      %v2578 = vpack.c.b16 %v2562, %v2558
      %2595 = vmatprep.subr.bf16.mxu0 0
      %2596 = vmatpush1.bf16.msra.mxu0 %v1072
      %2597 = vmatprep.subr.bf16.mxu0 0
      %2598 = vmatpush1.bf16.msra.mxu0 %v1071
      %2599 = vmatprep.subr.bf16.mxu0 0
      %2600 = vmatpush1.bf16.msra.mxu0 %v1070
      %2601 = vmatprep.subr.bf16.mxu0 0
      %2602 = vmatpush1.bf16.msra.mxu0 %v1069
      %2603 = vmatprep.subr.bf16.mxu0 0
      %2604 = vmatpush1.bf16.msra.mxu0 %v1068
      %2605 = vmatprep.subr.bf16.mxu0 0
      %2606 = vmatpush1.bf16.msra.mxu0 %v1067
      %2607 = vmatprep.subr.bf16.mxu0 0
      %2608 = vmatpush1.bf16.msra.mxu0 %v1066
      %2609 = vmatprep.subr.bf16.mxu0 0
      %2610 = vmatpush1.bf16.msra.mxu0 %v1065
      %2611 = vmatprep.subr.bf16.mxu0 0
      %2612 = vmatpush2.bf16.msra.mxu0 %v1080
      %2613 = vmatprep.subr.bf16.mxu0 0
      %2614 = vmatpush2.bf16.msra.mxu0 %v1079
      %2615 = vmatprep.subr.bf16.mxu0 0
      %2616 = vmatpush2.bf16.msra.mxu0 %v1078
      %2617 = vmatprep.subr.bf16.mxu0 0
      %2618 = vmatpush2.bf16.msra.mxu0 %v1077
      %2619 = vmatprep.subr.bf16.mxu0 0
      %2620 = vmatpush2.bf16.msra.mxu0 %v1076
      %2621 = vmatprep.subr.bf16.mxu0 0
      %2622 = vmatpush2.bf16.msra.mxu0 %v1075
      %2623 = vmatprep.subr.bf16.mxu0 0
      %2624 = vmatpush2.bf16.msra.mxu0 %v1074
      %2625 = vmatprep.subr.bf16.mxu0 0
      %2626 = vmatpush2.bf16.msra.mxu0 %v1073
      %2627 = vmatprep.mubr.bf16.mxu0 %v2564
      %2628 = vmatmul.mubr.bf16.gmra.mxu0 %v2563
      %v2629 = vpop.f32.mrf.mxu0
      %v2630 = vadd.f32 0.0, %v2629
      %v2631 = vpop.f32.mrf.mxu0
      %v2632 = vpop.f32.mrf.mxu0
      %v2633 = vadd.f32 0.0, %v2632
      %v2634 = vpop.f32.mrf.mxu0
      %2635 = vmatprep.mubr.bf16.mxu0 %v2568
      %2636 = vmatmul.mubr.bf16.gmra.mxu0 %v2567
      %v2637 = vpop.f32.mrf.mxu0
      %v2638 = vadd.f32 0.0, %v2637
      %v2639 = vpop.f32.mrf.mxu0
      %v2640 = vpop.f32.mrf.mxu0
      %v2641 = vadd.f32 0.0, %v2640
      %v2642 = vpop.f32.mrf.mxu0
      %2643 = vmatprep.mubr.bf16.mxu0 %v2572
      %2644 = vmatmul.mubr.bf16.gmra.mxu0 %v2571
      %v2645 = vpop.f32.mrf.mxu0
      %v2646 = vadd.f32 0.0, %v2645
      %v2647 = vpop.f32.mrf.mxu0
      %v2648 = vpop.f32.mrf.mxu0
      %v2649 = vadd.f32 0.0, %v2648
      %v2650 = vpop.f32.mrf.mxu0
      %2651 = vmatprep.mubr.bf16.mxu0 %v2576
      %2652 = vmatmul.mubr.bf16.gmra.mxu0 %v2575
      %v2653 = vpop.f32.mrf.mxu0
      %v2654 = vadd.f32 0.0, %v2653
      %v2655 = vpop.f32.mrf.mxu0
      %v2656 = vpop.f32.mrf.mxu0
      %v2657 = vadd.f32 0.0, %v2656
      %v2658 = vpop.f32.mrf.mxu0
      %2659 = vdwg.mxu0
      %2660 = vmatprep.subr.bf16.mxu0 0
      %2661 = vmatpush1.bf16.msra.mxu0 %v1088
      %2662 = vmatprep.subr.bf16.mxu0 0
      %2663 = vmatpush1.bf16.msra.mxu0 %v1087
      %2664 = vmatprep.subr.bf16.mxu0 0
      %2665 = vmatpush1.bf16.msra.mxu0 %v1086
      %2666 = vmatprep.subr.bf16.mxu0 0
      %2667 = vmatpush1.bf16.msra.mxu0 %v1085
      %2668 = vmatprep.subr.bf16.mxu0 0
      %2669 = vmatpush1.bf16.msra.mxu0 %v1084
      %2670 = vmatprep.subr.bf16.mxu0 0
      %2671 = vmatpush1.bf16.msra.mxu0 %v1083
      %2672 = vmatprep.subr.bf16.mxu0 0
      %2673 = vmatpush1.bf16.msra.mxu0 %v1082
      %2674 = vmatprep.subr.bf16.mxu0 0
      %2675 = vmatpush1.bf16.msra.mxu0 %v1081
      %2676 = vmatprep.subr.bf16.mxu0 0
      %2677 = vmatpush2.bf16.msra.mxu0 %v1096
      %2678 = vmatprep.subr.bf16.mxu0 0
      %2679 = vmatpush2.bf16.msra.mxu0 %v1095
      %2680 = vmatprep.subr.bf16.mxu0 0
      %2681 = vmatpush2.bf16.msra.mxu0 %v1094
      %2682 = vmatprep.subr.bf16.mxu0 0
      %2683 = vmatpush2.bf16.msra.mxu0 %v1093
      %2684 = vmatprep.subr.bf16.mxu0 0
      %2685 = vmatpush2.bf16.msra.mxu0 %v1092
      %2686 = vmatprep.subr.bf16.mxu0 0
      %2687 = vmatpush2.bf16.msra.mxu0 %v1091
      %2688 = vmatprep.subr.bf16.mxu0 0
      %2689 = vmatpush2.bf16.msra.mxu0 %v1090
      %2690 = vmatprep.subr.bf16.mxu0 0
      %2691 = vmatpush2.bf16.msra.mxu0 %v1089
      %2692 = vmatprep.mubr.bf16.mxu0 %v2566
      %2693 = vmatmul.mubr.bf16.gmra.mxu0 %v2565
      %v2694 = vpop.f32.mrf.mxu0
      %v2695 = vadd.f32 %v2630, %v2694
      %v2696 = vpop.f32.mrf.mxu0
      %v2697 = vpop.f32.mrf.mxu0
      %v2698 = vadd.f32 %v2633, %v2697
      %v2699 = vpop.f32.mrf.mxu0
      %2700 = vmatprep.mubr.bf16.mxu0 %v2570
      %2701 = vmatmul.mubr.bf16.gmra.mxu0 %v2569
      %v2702 = vpop.f32.mrf.mxu0
      %v2703 = vadd.f32 %v2638, %v2702
      %v2704 = vpop.f32.mrf.mxu0
      %v2705 = vpop.f32.mrf.mxu0
      %v2706 = vadd.f32 %v2641, %v2705
      %v2707 = vpop.f32.mrf.mxu0
      %2708 = vmatprep.mubr.bf16.mxu0 %v2574
      %2709 = vmatmul.mubr.bf16.gmra.mxu0 %v2573
      %v2710 = vpop.f32.mrf.mxu0
      %v2711 = vadd.f32 %v2646, %v2710
      %v2712 = vpop.f32.mrf.mxu0
      %v2713 = vpop.f32.mrf.mxu0
      %v2714 = vadd.f32 %v2649, %v2713
      %v2715 = vpop.f32.mrf.mxu0
      %2716 = vmatprep.mubr.bf16.mxu0 %v2578
      %2717 = vmatmul.mubr.bf16.gmra.mxu0 %v2577
      %v2718 = vpop.f32.mrf.mxu0
      %v2719 = vadd.f32 %v2654, %v2718
      %v2720 = vpop.f32.mrf.mxu0
      %v2721 = vpop.f32.mrf.mxu0
      %v2722 = vadd.f32 %v2657, %v2721
      %v2723 = vpop.f32.mrf.mxu0
      %2724 = vdwg.mxu0
      %v2725 = vmax.f32 %v2490, %v2695
      %v2726 = vmax.f32 %v2491, %v2698
      %v2727 = vmax.f32 %v2492, %v2703
      %v2728 = vmax.f32 %v2493, %v2706
      %v2729 = vmax.f32 %v2494, %v2711
      %v2730 = vmax.f32 %v2495, %v2714
      %v2731 = vmax.f32 %v2496, %v2719
      %v2732 = vmax.f32 %v2497, %v2722
      %s2733 = scalar_lea.vmem %s2, 896
      %v2734 = vld [vmem:[%s2733] sm:$0xff]
      %v2735 = vld [vmem:[%s2733 + $0x8] sm:$0xff]
      %v2736 = vld [vmem:[%s2733 + $0x10] sm:$0xff]
      %v2737 = vld [vmem:[%s2733 + $0x18] sm:$0xff]
      %v2738 = vld [vmem:[%s2733 + $0x20] sm:$0xff]
      %v2739 = vld [vmem:[%s2733 + $0x28] sm:$0xff]
      %v2740 = vld [vmem:[%s2733 + $0x30] sm:$0xff]
      %v2741 = vld [vmem:[%s2733 + $0x38] sm:$0xff]
      %v2742 = vld [vmem:[%s2733 + $0x40] sm:$0xff]
      %v2743 = vld [vmem:[%s2733 + $0x48] sm:$0xff]
      %v2744 = vld [vmem:[%s2733 + $0x50] sm:$0xff]
      %v2745 = vld [vmem:[%s2733 + $0x58] sm:$0xff]
      %v2746 = vld [vmem:[%s2733 + $0x60] sm:$0xff]
      %v2747 = vld [vmem:[%s2733 + $0x68] sm:$0xff]
      %v2748 = vld [vmem:[%s2733 + $0x70] sm:$0xff]
      %v2749 = vld [vmem:[%s2733 + $0x78] sm:$0xff]
      %v2766 = vunpack.c.l.b16 %v2734
      %v2767 = vunpack.c.h.b16 %v2734
      %v2768 = vunpack.c.l.b16 %v2735
      %v2769 = vunpack.c.h.b16 %v2735
      %v2770 = vunpack.c.l.b16 %v2736
      %v2771 = vunpack.c.h.b16 %v2736
      %v2772 = vunpack.c.l.b16 %v2737
      %v2773 = vunpack.c.h.b16 %v2737
      %v2774 = vunpack.c.l.b16 %v2738
      %v2775 = vunpack.c.h.b16 %v2738
      %v2776 = vunpack.c.l.b16 %v2739
      %v2777 = vunpack.c.h.b16 %v2739
      %v2778 = vunpack.c.l.b16 %v2740
      %v2779 = vunpack.c.h.b16 %v2740
      %v2780 = vunpack.c.l.b16 %v2741
      %v2781 = vunpack.c.h.b16 %v2741
      %v2782 = vunpack.c.l.b16 %v2742
      %v2783 = vunpack.c.h.b16 %v2742
      %v2784 = vunpack.c.l.b16 %v2743
      %v2785 = vunpack.c.h.b16 %v2743
      %v2786 = vunpack.c.l.b16 %v2744
      %v2787 = vunpack.c.h.b16 %v2744
      %v2788 = vunpack.c.l.b16 %v2745
      %v2789 = vunpack.c.h.b16 %v2745
      %v2790 = vunpack.c.l.b16 %v2746
      %v2791 = vunpack.c.h.b16 %v2746
      %v2792 = vunpack.c.l.b16 %v2747
      %v2793 = vunpack.c.h.b16 %v2747
      %v2794 = vunpack.c.l.b16 %v2748
      %v2795 = vunpack.c.h.b16 %v2748
      %v2796 = vunpack.c.l.b16 %v2749
      %v2797 = vunpack.c.h.b16 %v2749
      %v2798 = vpack.c.b16 %v2770, %v2766
      %v2799 = vpack.c.b16 %v2771, %v2767
      %v2800 = vpack.c.b16 %v2772, %v2768
      %v2801 = vpack.c.b16 %v2773, %v2769
      %v2802 = vpack.c.b16 %v2778, %v2774
      %v2803 = vpack.c.b16 %v2779, %v2775
      %v2804 = vpack.c.b16 %v2780, %v2776
      %v2805 = vpack.c.b16 %v2781, %v2777
      %v2806 = vpack.c.b16 %v2786, %v2782
      %v2807 = vpack.c.b16 %v2787, %v2783
      %v2808 = vpack.c.b16 %v2788, %v2784
      %v2809 = vpack.c.b16 %v2789, %v2785
      %v2810 = vpack.c.b16 %v2794, %v2790
      %v2811 = vpack.c.b16 %v2795, %v2791
      %v2812 = vpack.c.b16 %v2796, %v2792
      %v2813 = vpack.c.b16 %v2797, %v2793
      %2830 = vmatprep.subr.bf16.mxu0 0
      %2831 = vmatpush1.bf16.msra.mxu0 %v1072
      %2832 = vmatprep.subr.bf16.mxu0 0
      %2833 = vmatpush1.bf16.msra.mxu0 %v1071
      %2834 = vmatprep.subr.bf16.mxu0 0
      %2835 = vmatpush1.bf16.msra.mxu0 %v1070
      %2836 = vmatprep.subr.bf16.mxu0 0
      %2837 = vmatpush1.bf16.msra.mxu0 %v1069
      %2838 = vmatprep.subr.bf16.mxu0 0
      %2839 = vmatpush1.bf16.msra.mxu0 %v1068
      %2840 = vmatprep.subr.bf16.mxu0 0
      %2841 = vmatpush1.bf16.msra.mxu0 %v1067
      %2842 = vmatprep.subr.bf16.mxu0 0
      %2843 = vmatpush1.bf16.msra.mxu0 %v1066
      %2844 = vmatprep.subr.bf16.mxu0 0
      %2845 = vmatpush1.bf16.msra.mxu0 %v1065
      %2846 = vmatprep.subr.bf16.mxu0 0
      %2847 = vmatpush2.bf16.msra.mxu0 %v1080
      %2848 = vmatprep.subr.bf16.mxu0 0
      %2849 = vmatpush2.bf16.msra.mxu0 %v1079
      %2850 = vmatprep.subr.bf16.mxu0 0
      %2851 = vmatpush2.bf16.msra.mxu0 %v1078
      %2852 = vmatprep.subr.bf16.mxu0 0
      %2853 = vmatpush2.bf16.msra.mxu0 %v1077
      %2854 = vmatprep.subr.bf16.mxu0 0
      %2855 = vmatpush2.bf16.msra.mxu0 %v1076
      %2856 = vmatprep.subr.bf16.mxu0 0
      %2857 = vmatpush2.bf16.msra.mxu0 %v1075
      %2858 = vmatprep.subr.bf16.mxu0 0
      %2859 = vmatpush2.bf16.msra.mxu0 %v1074
      %2860 = vmatprep.subr.bf16.mxu0 0
      %2861 = vmatpush2.bf16.msra.mxu0 %v1073
      %2862 = vmatprep.mubr.bf16.mxu0 %v2799
      %2863 = vmatmul.mubr.bf16.gmra.mxu0 %v2798
      %v2864 = vpop.f32.mrf.mxu0
      %v2865 = vadd.f32 0.0, %v2864
      %v2866 = vpop.f32.mrf.mxu0
      %v2867 = vpop.f32.mrf.mxu0
      %v2868 = vadd.f32 0.0, %v2867
      %v2869 = vpop.f32.mrf.mxu0
      %2870 = vmatprep.mubr.bf16.mxu0 %v2803
      %2871 = vmatmul.mubr.bf16.gmra.mxu0 %v2802
      %v2872 = vpop.f32.mrf.mxu0
      %v2873 = vadd.f32 0.0, %v2872
      %v2874 = vpop.f32.mrf.mxu0
      %v2875 = vpop.f32.mrf.mxu0
      %v2876 = vadd.f32 0.0, %v2875
      %v2877 = vpop.f32.mrf.mxu0
      %2878 = vmatprep.mubr.bf16.mxu0 %v2807
      %2879 = vmatmul.mubr.bf16.gmra.mxu0 %v2806
      %v2880 = vpop.f32.mrf.mxu0
      %v2881 = vadd.f32 0.0, %v2880
      %v2882 = vpop.f32.mrf.mxu0
      %v2883 = vpop.f32.mrf.mxu0
      %v2884 = vadd.f32 0.0, %v2883
      %v2885 = vpop.f32.mrf.mxu0
      %2886 = vmatprep.mubr.bf16.mxu0 %v2811
      %2887 = vmatmul.mubr.bf16.gmra.mxu0 %v2810
      %v2888 = vpop.f32.mrf.mxu0
      %v2889 = vadd.f32 0.0, %v2888
      %v2890 = vpop.f32.mrf.mxu0
      %v2891 = vpop.f32.mrf.mxu0
      %v2892 = vadd.f32 0.0, %v2891
      %v2893 = vpop.f32.mrf.mxu0
      %2894 = vdwg.mxu0
      %2895 = vmatprep.subr.bf16.mxu0 0
      %2896 = vmatpush1.bf16.msra.mxu0 %v1088
      %2897 = vmatprep.subr.bf16.mxu0 0
      %2898 = vmatpush1.bf16.msra.mxu0 %v1087
      %2899 = vmatprep.subr.bf16.mxu0 0
      %2900 = vmatpush1.bf16.msra.mxu0 %v1086
      %2901 = vmatprep.subr.bf16.mxu0 0
      %2902 = vmatpush1.bf16.msra.mxu0 %v1085
      %2903 = vmatprep.subr.bf16.mxu0 0
      %2904 = vmatpush1.bf16.msra.mxu0 %v1084
      %2905 = vmatprep.subr.bf16.mxu0 0
      %2906 = vmatpush1.bf16.msra.mxu0 %v1083
      %2907 = vmatprep.subr.bf16.mxu0 0
      %2908 = vmatpush1.bf16.msra.mxu0 %v1082
      %2909 = vmatprep.subr.bf16.mxu0 0
      %2910 = vmatpush1.bf16.msra.mxu0 %v1081
      %2911 = vmatprep.subr.bf16.mxu0 0
      %2912 = vmatpush2.bf16.msra.mxu0 %v1096
      %2913 = vmatprep.subr.bf16.mxu0 0
      %2914 = vmatpush2.bf16.msra.mxu0 %v1095
      %2915 = vmatprep.subr.bf16.mxu0 0
      %2916 = vmatpush2.bf16.msra.mxu0 %v1094
      %2917 = vmatprep.subr.bf16.mxu0 0
      %2918 = vmatpush2.bf16.msra.mxu0 %v1093
      %2919 = vmatprep.subr.bf16.mxu0 0
      %2920 = vmatpush2.bf16.msra.mxu0 %v1092
      %2921 = vmatprep.subr.bf16.mxu0 0
      %2922 = vmatpush2.bf16.msra.mxu0 %v1091
      %2923 = vmatprep.subr.bf16.mxu0 0
      %2924 = vmatpush2.bf16.msra.mxu0 %v1090
      %2925 = vmatprep.subr.bf16.mxu0 0
      %2926 = vmatpush2.bf16.msra.mxu0 %v1089
      %2927 = vmatprep.mubr.bf16.mxu0 %v2801
      %2928 = vmatmul.mubr.bf16.gmra.mxu0 %v2800
      %v2929 = vpop.f32.mrf.mxu0
      %v2930 = vadd.f32 %v2865, %v2929
      %v2931 = vpop.f32.mrf.mxu0
      %v2932 = vpop.f32.mrf.mxu0
      %v2933 = vadd.f32 %v2868, %v2932
      %v2934 = vpop.f32.mrf.mxu0
      %2935 = vmatprep.mubr.bf16.mxu0 %v2805
      %2936 = vmatmul.mubr.bf16.gmra.mxu0 %v2804
      %v2937 = vpop.f32.mrf.mxu0
      %v2938 = vadd.f32 %v2873, %v2937
      %v2939 = vpop.f32.mrf.mxu0
      %v2940 = vpop.f32.mrf.mxu0
      %v2941 = vadd.f32 %v2876, %v2940
      %v2942 = vpop.f32.mrf.mxu0
      %2943 = vmatprep.mubr.bf16.mxu0 %v2809
      %2944 = vmatmul.mubr.bf16.gmra.mxu0 %v2808
      %v2945 = vpop.f32.mrf.mxu0
      %v2946 = vadd.f32 %v2881, %v2945
      %v2947 = vpop.f32.mrf.mxu0
      %v2948 = vpop.f32.mrf.mxu0
      %v2949 = vadd.f32 %v2884, %v2948
      %v2950 = vpop.f32.mrf.mxu0
      %2951 = vmatprep.mubr.bf16.mxu0 %v2813
      %2952 = vmatmul.mubr.bf16.gmra.mxu0 %v2812
      %v2953 = vpop.f32.mrf.mxu0
      %v2954 = vadd.f32 %v2889, %v2953
      %v2955 = vpop.f32.mrf.mxu0
      %v2956 = vpop.f32.mrf.mxu0
      %v2957 = vadd.f32 %v2892, %v2956
      %v2958 = vpop.f32.mrf.mxu0
      %2959 = vdwg.mxu0
      %v2960 = vmax.f32 %v2725, %v2930
      %v2961 = vmax.f32 %v2726, %v2933
      %v2962 = vmax.f32 %v2727, %v2938
      %v2963 = vmax.f32 %v2728, %v2941
      %v2964 = vmax.f32 %v2729, %v2946
      %v2965 = vmax.f32 %v2730, %v2949
      %v2966 = vmax.f32 %v2731, %v2954
      %v2967 = vmax.f32 %v2732, %v2957
      %v2968 = vpack.c.bf16 %v2961, %v2960
      %v2969 = vpack.c.bf16 %v2963, %v2962
      %v2970 = vpack.c.bf16 %v2965, %v2964
      %v2971 = vpack.c.bf16 %v2967, %v2966
      %v2972 = vld [vmem:[%s3] sm:$0xf]
      %v2973 = vld [vmem:[%s3 + $0x4] sm:$0xf]
      %v2974 = vld [vmem:[%s3 + $0x8] sm:$0xf]
      %v2975 = vld [vmem:[%s3 + $0xc] sm:$0xf]
      %v2976 = vld [vmem:[%s3 + $0x10] sm:$0xf]
      %v2977 = vld [vmem:[%s3 + $0x14] sm:$0xf]
      %v2978 = vld [vmem:[%s3 + $0x18] sm:$0xf]
      %v2979 = vld [vmem:[%s3 + $0x1c] sm:$0xf]
      %v2980 = vld [vmem:[%s3 + $0x20] sm:$0xf]
      %v2981 = vld [vmem:[%s3 + $0x24] sm:$0xf]
      %v2982 = vld [vmem:[%s3 + $0x28] sm:$0xf]
      %v2983 = vld [vmem:[%s3 + $0x2c] sm:$0xf]
      %v2984 = vld [vmem:[%s3 + $0x30] sm:$0xf]
      %v2985 = vld [vmem:[%s3 + $0x34] sm:$0xf]
      %v2986 = vld [vmem:[%s3 + $0x38] sm:$0xf]
      %v2987 = vld [vmem:[%s3 + $0x3c] sm:$0xf]
      %s2988 = scalar_lea.vmem %s3, 64
      %v2989 = vld [vmem:[%s2988] sm:$0xf]
      %v2990 = vld [vmem:[%s2988 + $0x4] sm:$0xf]
      %v2991 = vld [vmem:[%s2988 + $0x8] sm:$0xf]
      %v2992 = vld [vmem:[%s2988 + $0xc] sm:$0xf]
      %v2993 = vld [vmem:[%s2988 + $0x10] sm:$0xf]
      %v2994 = vld [vmem:[%s2988 + $0x14] sm:$0xf]
      %v2995 = vld [vmem:[%s2988 + $0x18] sm:$0xf]
      %v2996 = vld [vmem:[%s2988 + $0x1c] sm:$0xf]
      %v2997 = vld [vmem:[%s2988 + $0x20] sm:$0xf]
      %v2998 = vld [vmem:[%s2988 + $0x24] sm:$0xf]
      %v2999 = vld [vmem:[%s2988 + $0x28] sm:$0xf]
      %v3000 = vld [vmem:[%s2988 + $0x2c] sm:$0xf]
      %v3001 = vld [vmem:[%s2988 + $0x30] sm:$0xf]
      %v3002 = vld [vmem:[%s2988 + $0x34] sm:$0xf]
      %v3003 = vld [vmem:[%s2988 + $0x38] sm:$0xf]
      %v3004 = vld [vmem:[%s2988 + $0x3c] sm:$0xf]
      %v3006 = vrot.slane %v2968, 4
      %v3024 = vunpack.c.l.b16 %v2989
      %v3025 = vunpack.c.l.b16 %v2990
      %v3026 = vunpack.c.l.b16 %v2991
      %v3027 = vunpack.c.l.b16 %v2992
      %v3028 = vunpack.c.l.b16 %v2993
      %v3029 = vunpack.c.l.b16 %v2994
      %v3030 = vunpack.c.l.b16 %v2995
      %v3031 = vunpack.c.l.b16 %v2996
      %v3032 = vunpack.c.l.b16 %v2997
      %v3033 = vunpack.c.l.b16 %v2998
      %v3034 = vunpack.c.l.b16 %v2999
      %v3035 = vunpack.c.l.b16 %v3000
      %v3036 = vunpack.c.l.b16 %v3001
      %v3037 = vunpack.c.l.b16 %v3002
      %v3038 = vunpack.c.l.b16 %v3003
      %v3039 = vunpack.c.l.b16 %v3004
      %v3040 = vpack.c.b16 %v3025, %v3024
      %v3041 = vpack.c.b16 %v3027, %v3026
      %v3042 = vpack.c.b16 %v3029, %v3028
      %v3043 = vpack.c.b16 %v3031, %v3030
      %v3044 = vpack.c.b16 %v3033, %v3032
      %v3045 = vpack.c.b16 %v3035, %v3034
      %v3046 = vpack.c.b16 %v3037, %v3036
      %v3047 = vpack.c.b16 %v3039, %v3038
      %3056 = vmatprep.subr.bf16.mxu0 0
      %3057 = vmatpush1.bf16.msra.mxu0 %v3047
      %3058 = vmatprep.subr.bf16.mxu0 0
      %3059 = vmatpush1.bf16.msra.mxu0 %v3046
      %3060 = vmatprep.subr.bf16.mxu0 0
      %3061 = vmatpush1.bf16.msra.mxu0 %v3045
      %3062 = vmatprep.subr.bf16.mxu0 0
      %3063 = vmatpush1.bf16.msra.mxu0 %v3044
      %3064 = vmatprep.subr.bf16.mxu0 0
      %3065 = vmatpush1.bf16.msra.mxu0 %v3043
      %3066 = vmatprep.subr.bf16.mxu0 0
      %3067 = vmatpush1.bf16.msra.mxu0 %v3042
      %3068 = vmatprep.subr.bf16.mxu0 0
      %3069 = vmatpush1.bf16.msra.mxu0 %v3041
      %3070 = vmatprep.subr.bf16.mxu0 0
      %3071 = vmatpush1.bf16.msra.mxu0 %v3040
      %3072 = vmatprep.subr.bf16.mxu0 0
      %3073 = vmatpush2.bf16.msra.mxu0 0
      %3074 = vmatprep.subr.bf16.mxu0 0
      %3075 = vmatpush2.bf16.msra.mxu0 0
      %3076 = vmatprep.subr.bf16.mxu0 0
      %3077 = vmatpush2.bf16.msra.mxu0 0
      %3078 = vmatprep.subr.bf16.mxu0 0
      %3079 = vmatpush2.bf16.msra.mxu0 0
      %3080 = vmatprep.subr.bf16.mxu0 0
      %3081 = vmatpush2.bf16.msra.mxu0 0
      %3082 = vmatprep.subr.bf16.mxu0 0
      %3083 = vmatpush2.bf16.msra.mxu0 0
      %3084 = vmatprep.subr.bf16.mxu0 0
      %3085 = vmatpush2.bf16.msra.mxu0 0
      %3086 = vmatprep.subr.bf16.mxu0 0
      %3087 = vmatpush2.bf16.msra.mxu0 0
      %3088 = vmatprep.mubr.bf16.mxu0 0
      %3089 = vmatmul.mubr.bf16.gmra.mxu0 %v3006
      %v3090 = vpop.f32.mrf.mxu0
      %v3091 = vadd.f32 0.0, %v3090
      %v3092 = vpop.f32.mrf.mxu0
      %v3093 = vpop.f32.mrf.mxu0
      %v3094 = vpop.f32.mrf.mxu0
      %3095 = vdwg.mxu0
      %v3112 = vunpack.c.l.b16 %v2972
      %v3113 = vunpack.c.l.b16 %v2973
      %v3114 = vunpack.c.l.b16 %v2974
      %v3115 = vunpack.c.l.b16 %v2975
      %v3116 = vunpack.c.l.b16 %v2976
      %v3117 = vunpack.c.l.b16 %v2977
      %v3118 = vunpack.c.l.b16 %v2978
      %v3119 = vunpack.c.l.b16 %v2979
      %v3120 = vunpack.c.l.b16 %v2980
      %v3121 = vunpack.c.l.b16 %v2981
      %v3122 = vunpack.c.l.b16 %v2982
      %v3123 = vunpack.c.l.b16 %v2983
      %v3124 = vunpack.c.l.b16 %v2984
      %v3125 = vunpack.c.l.b16 %v2985
      %v3126 = vunpack.c.l.b16 %v2986
      %v3127 = vunpack.c.l.b16 %v2987
      %v3128 = vpack.c.b16 %v3113, %v3112
      %v3129 = vpack.c.b16 %v3115, %v3114
      %v3130 = vpack.c.b16 %v3117, %v3116
      %v3131 = vpack.c.b16 %v3119, %v3118
      %v3132 = vpack.c.b16 %v3121, %v3120
      %v3133 = vpack.c.b16 %v3123, %v3122
      %v3134 = vpack.c.b16 %v3125, %v3124
      %v3135 = vpack.c.b16 %v3127, %v3126
      %3144 = vmatprep.subr.bf16.mxu0 0
      %3145 = vmatpush1.bf16.msra.mxu0 %v3135
      %3146 = vmatprep.subr.bf16.mxu0 0
      %3147 = vmatpush1.bf16.msra.mxu0 %v3134
      %3148 = vmatprep.subr.bf16.mxu0 0
      %3149 = vmatpush1.bf16.msra.mxu0 %v3133
      %3150 = vmatprep.subr.bf16.mxu0 0
      %3151 = vmatpush1.bf16.msra.mxu0 %v3132
      %3152 = vmatprep.subr.bf16.mxu0 0
      %3153 = vmatpush1.bf16.msra.mxu0 %v3131
      %3154 = vmatprep.subr.bf16.mxu0 0
      %3155 = vmatpush1.bf16.msra.mxu0 %v3130
      %3156 = vmatprep.subr.bf16.mxu0 0
      %3157 = vmatpush1.bf16.msra.mxu0 %v3129
      %3158 = vmatprep.subr.bf16.mxu0 0
      %3159 = vmatpush1.bf16.msra.mxu0 %v3128
      %3160 = vmatprep.subr.bf16.mxu0 0
      %3161 = vmatpush2.bf16.msra.mxu0 0
      %3162 = vmatprep.subr.bf16.mxu0 0
      %3163 = vmatpush2.bf16.msra.mxu0 0
      %3164 = vmatprep.subr.bf16.mxu0 0
      %3165 = vmatpush2.bf16.msra.mxu0 0
      %3166 = vmatprep.subr.bf16.mxu0 0
      %3167 = vmatpush2.bf16.msra.mxu0 0
      %3168 = vmatprep.subr.bf16.mxu0 0
      %3169 = vmatpush2.bf16.msra.mxu0 0
      %3170 = vmatprep.subr.bf16.mxu0 0
      %3171 = vmatpush2.bf16.msra.mxu0 0
      %3172 = vmatprep.subr.bf16.mxu0 0
      %3173 = vmatpush2.bf16.msra.mxu0 0
      %3174 = vmatprep.subr.bf16.mxu0 0
      %3175 = vmatpush2.bf16.msra.mxu0 0
      %3176 = vmatprep.mubr.bf16.mxu0 0
      %3177 = vmatmul.mubr.bf16.gmra.mxu0 %v2968
      %v3178 = vpop.f32.mrf.mxu0
      %v3179 = vadd.f32 %v3091, %v3178
      %v3180 = vpop.f32.mrf.mxu0
      %v3181 = vpop.f32.mrf.mxu0
      %v3182 = vpop.f32.mrf.mxu0
      %3183 = vdwg.mxu0
      %s3184 = scalar_lea.vmem %s3, 128
      %v3185 = vld [vmem:[%s3184] sm:$0xf]
      %v3186 = vld [vmem:[%s3184 + $0x4] sm:$0xf]
      %v3187 = vld [vmem:[%s3184 + $0x8] sm:$0xf]
      %v3188 = vld [vmem:[%s3184 + $0xc] sm:$0xf]
      %v3189 = vld [vmem:[%s3184 + $0x10] sm:$0xf]
      %v3190 = vld [vmem:[%s3184 + $0x14] sm:$0xf]
      %v3191 = vld [vmem:[%s3184 + $0x18] sm:$0xf]
      %v3192 = vld [vmem:[%s3184 + $0x1c] sm:$0xf]
      %v3193 = vld [vmem:[%s3184 + $0x20] sm:$0xf]
      %v3194 = vld [vmem:[%s3184 + $0x24] sm:$0xf]
      %v3195 = vld [vmem:[%s3184 + $0x28] sm:$0xf]
      %v3196 = vld [vmem:[%s3184 + $0x2c] sm:$0xf]
      %v3197 = vld [vmem:[%s3184 + $0x30] sm:$0xf]
      %v3198 = vld [vmem:[%s3184 + $0x34] sm:$0xf]
      %v3199 = vld [vmem:[%s3184 + $0x38] sm:$0xf]
      %v3200 = vld [vmem:[%s3184 + $0x3c] sm:$0xf]
      %v3217 = vunpack.c.l.b16 %v3185
      %v3218 = vunpack.c.l.b16 %v3186
      %v3219 = vunpack.c.l.b16 %v3187
      %v3220 = vunpack.c.l.b16 %v3188
      %v3221 = vunpack.c.l.b16 %v3189
      %v3222 = vunpack.c.l.b16 %v3190
      %v3223 = vunpack.c.l.b16 %v3191
      %v3224 = vunpack.c.l.b16 %v3192
      %v3225 = vunpack.c.l.b16 %v3193
      %v3226 = vunpack.c.l.b16 %v3194
      %v3227 = vunpack.c.l.b16 %v3195
      %v3228 = vunpack.c.l.b16 %v3196
      %v3229 = vunpack.c.l.b16 %v3197
      %v3230 = vunpack.c.l.b16 %v3198
      %v3231 = vunpack.c.l.b16 %v3199
      %v3232 = vunpack.c.l.b16 %v3200
      %v3233 = vpack.c.b16 %v3218, %v3217
      %v3234 = vpack.c.b16 %v3220, %v3219
      %v3235 = vpack.c.b16 %v3222, %v3221
      %v3236 = vpack.c.b16 %v3224, %v3223
      %v3237 = vpack.c.b16 %v3226, %v3225
      %v3238 = vpack.c.b16 %v3228, %v3227
      %v3239 = vpack.c.b16 %v3230, %v3229
      %v3240 = vpack.c.b16 %v3232, %v3231
      %3249 = vmatprep.subr.bf16.mxu0 0
      %3250 = vmatpush1.bf16.msra.mxu0 %v3240
      %3251 = vmatprep.subr.bf16.mxu0 0
      %3252 = vmatpush1.bf16.msra.mxu0 %v3239
      %3253 = vmatprep.subr.bf16.mxu0 0
      %3254 = vmatpush1.bf16.msra.mxu0 %v3238
      %3255 = vmatprep.subr.bf16.mxu0 0
      %3256 = vmatpush1.bf16.msra.mxu0 %v3237
      %3257 = vmatprep.subr.bf16.mxu0 0
      %3258 = vmatpush1.bf16.msra.mxu0 %v3236
      %3259 = vmatprep.subr.bf16.mxu0 0
      %3260 = vmatpush1.bf16.msra.mxu0 %v3235
      %3261 = vmatprep.subr.bf16.mxu0 0
      %3262 = vmatpush1.bf16.msra.mxu0 %v3234
      %3263 = vmatprep.subr.bf16.mxu0 0
      %3264 = vmatpush1.bf16.msra.mxu0 %v3233
      %3265 = vmatprep.subr.bf16.mxu0 0
      %3266 = vmatpush2.bf16.msra.mxu0 0
      %3267 = vmatprep.subr.bf16.mxu0 0
      %3268 = vmatpush2.bf16.msra.mxu0 0
      %3269 = vmatprep.subr.bf16.mxu0 0
      %3270 = vmatpush2.bf16.msra.mxu0 0
      %3271 = vmatprep.subr.bf16.mxu0 0
      %3272 = vmatpush2.bf16.msra.mxu0 0
      %3273 = vmatprep.subr.bf16.mxu0 0
      %3274 = vmatpush2.bf16.msra.mxu0 0
      %3275 = vmatprep.subr.bf16.mxu0 0
      %3276 = vmatpush2.bf16.msra.mxu0 0
      %3277 = vmatprep.subr.bf16.mxu0 0
      %3278 = vmatpush2.bf16.msra.mxu0 0
      %3279 = vmatprep.subr.bf16.mxu0 0
      %3280 = vmatpush2.bf16.msra.mxu0 0
      %3281 = vmatprep.mubr.bf16.mxu0 0
      %3282 = vmatmul.mubr.bf16.gmra.mxu0 %v2969
      %v3283 = vpop.f32.mrf.mxu0
      %v3284 = vadd.f32 0.0, %v3283
      %v3285 = vpop.f32.mrf.mxu0
      %v3286 = vpop.f32.mrf.mxu0
      %v3287 = vpop.f32.mrf.mxu0
      %3288 = vdwg.mxu0
      %v3289 = vadd.f32 %v3179, %v3284
      %s3290 = scalar_lea.vmem %s3, 192
      %v3291 = vld [vmem:[%s3290] sm:$0xf]
      %v3292 = vld [vmem:[%s3290 + $0x4] sm:$0xf]
      %v3293 = vld [vmem:[%s3290 + $0x8] sm:$0xf]
      %v3294 = vld [vmem:[%s3290 + $0xc] sm:$0xf]
      %v3295 = vld [vmem:[%s3290 + $0x10] sm:$0xf]
      %v3296 = vld [vmem:[%s3290 + $0x14] sm:$0xf]
      %v3297 = vld [vmem:[%s3290 + $0x18] sm:$0xf]
      %v3298 = vld [vmem:[%s3290 + $0x1c] sm:$0xf]
      %v3299 = vld [vmem:[%s3290 + $0x20] sm:$0xf]
      %v3300 = vld [vmem:[%s3290 + $0x24] sm:$0xf]
      %v3301 = vld [vmem:[%s3290 + $0x28] sm:$0xf]
      %v3302 = vld [vmem:[%s3290 + $0x2c] sm:$0xf]
      %v3303 = vld [vmem:[%s3290 + $0x30] sm:$0xf]
      %v3304 = vld [vmem:[%s3290 + $0x34] sm:$0xf]
      %v3305 = vld [vmem:[%s3290 + $0x38] sm:$0xf]
      %v3306 = vld [vmem:[%s3290 + $0x3c] sm:$0xf]
      %v3308 = vrot.slane %v2969, 4
      %v3326 = vunpack.c.l.b16 %v3291
      %v3327 = vunpack.c.l.b16 %v3292
      %v3328 = vunpack.c.l.b16 %v3293
      %v3329 = vunpack.c.l.b16 %v3294
      %v3330 = vunpack.c.l.b16 %v3295
      %v3331 = vunpack.c.l.b16 %v3296
      %v3332 = vunpack.c.l.b16 %v3297
      %v3333 = vunpack.c.l.b16 %v3298
      %v3334 = vunpack.c.l.b16 %v3299
      %v3335 = vunpack.c.l.b16 %v3300
      %v3336 = vunpack.c.l.b16 %v3301
      %v3337 = vunpack.c.l.b16 %v3302
      %v3338 = vunpack.c.l.b16 %v3303
      %v3339 = vunpack.c.l.b16 %v3304
      %v3340 = vunpack.c.l.b16 %v3305
      %v3341 = vunpack.c.l.b16 %v3306
      %v3342 = vpack.c.b16 %v3327, %v3326
      %v3343 = vpack.c.b16 %v3329, %v3328
      %v3344 = vpack.c.b16 %v3331, %v3330
      %v3345 = vpack.c.b16 %v3333, %v3332
      %v3346 = vpack.c.b16 %v3335, %v3334
      %v3347 = vpack.c.b16 %v3337, %v3336
      %v3348 = vpack.c.b16 %v3339, %v3338
      %v3349 = vpack.c.b16 %v3341, %v3340
      %3358 = vmatprep.subr.bf16.mxu0 0
      %3359 = vmatpush1.bf16.msra.mxu0 %v3349
      %3360 = vmatprep.subr.bf16.mxu0 0
      %3361 = vmatpush1.bf16.msra.mxu0 %v3348
      %3362 = vmatprep.subr.bf16.mxu0 0
      %3363 = vmatpush1.bf16.msra.mxu0 %v3347
      %3364 = vmatprep.subr.bf16.mxu0 0
      %3365 = vmatpush1.bf16.msra.mxu0 %v3346
      %3366 = vmatprep.subr.bf16.mxu0 0
      %3367 = vmatpush1.bf16.msra.mxu0 %v3345
      %3368 = vmatprep.subr.bf16.mxu0 0
      %3369 = vmatpush1.bf16.msra.mxu0 %v3344
      %3370 = vmatprep.subr.bf16.mxu0 0
      %3371 = vmatpush1.bf16.msra.mxu0 %v3343
      %3372 = vmatprep.subr.bf16.mxu0 0
      %3373 = vmatpush1.bf16.msra.mxu0 %v3342
      %3374 = vmatprep.subr.bf16.mxu0 0
      %3375 = vmatpush2.bf16.msra.mxu0 0
      %3376 = vmatprep.subr.bf16.mxu0 0
      %3377 = vmatpush2.bf16.msra.mxu0 0
      %3378 = vmatprep.subr.bf16.mxu0 0
      %3379 = vmatpush2.bf16.msra.mxu0 0
      %3380 = vmatprep.subr.bf16.mxu0 0
      %3381 = vmatpush2.bf16.msra.mxu0 0
      %3382 = vmatprep.subr.bf16.mxu0 0
      %3383 = vmatpush2.bf16.msra.mxu0 0
      %3384 = vmatprep.subr.bf16.mxu0 0
      %3385 = vmatpush2.bf16.msra.mxu0 0
      %3386 = vmatprep.subr.bf16.mxu0 0
      %3387 = vmatpush2.bf16.msra.mxu0 0
      %3388 = vmatprep.subr.bf16.mxu0 0
      %3389 = vmatpush2.bf16.msra.mxu0 0
      %3390 = vmatprep.mubr.bf16.mxu0 0
      %3391 = vmatmul.mubr.bf16.gmra.mxu0 %v3308
      %v3392 = vpop.f32.mrf.mxu0
      %v3393 = vadd.f32 0.0, %v3392
      %v3394 = vpop.f32.mrf.mxu0
      %v3395 = vpop.f32.mrf.mxu0
      %v3396 = vpop.f32.mrf.mxu0
      %3397 = vdwg.mxu0
      %v3398 = vadd.f32 %v3289, %v3393
      %s3399 = scalar_lea.vmem %s3, 256
      %v3400 = vld [vmem:[%s3399] sm:$0xf]
      %v3401 = vld [vmem:[%s3399 + $0x4] sm:$0xf]
      %v3402 = vld [vmem:[%s3399 + $0x8] sm:$0xf]
      %v3403 = vld [vmem:[%s3399 + $0xc] sm:$0xf]
      %v3404 = vld [vmem:[%s3399 + $0x10] sm:$0xf]
      %v3405 = vld [vmem:[%s3399 + $0x14] sm:$0xf]
      %v3406 = vld [vmem:[%s3399 + $0x18] sm:$0xf]
      %v3407 = vld [vmem:[%s3399 + $0x1c] sm:$0xf]
      %v3408 = vld [vmem:[%s3399 + $0x20] sm:$0xf]
      %v3409 = vld [vmem:[%s3399 + $0x24] sm:$0xf]
      %v3410 = vld [vmem:[%s3399 + $0x28] sm:$0xf]
      %v3411 = vld [vmem:[%s3399 + $0x2c] sm:$0xf]
      %v3412 = vld [vmem:[%s3399 + $0x30] sm:$0xf]
      %v3413 = vld [vmem:[%s3399 + $0x34] sm:$0xf]
      %v3414 = vld [vmem:[%s3399 + $0x38] sm:$0xf]
      %v3415 = vld [vmem:[%s3399 + $0x3c] sm:$0xf]
      %v3432 = vunpack.c.l.b16 %v3400
      %v3433 = vunpack.c.l.b16 %v3401
      %v3434 = vunpack.c.l.b16 %v3402
      %v3435 = vunpack.c.l.b16 %v3403
      %v3436 = vunpack.c.l.b16 %v3404
      %v3437 = vunpack.c.l.b16 %v3405
      %v3438 = vunpack.c.l.b16 %v3406
      %v3439 = vunpack.c.l.b16 %v3407
      %v3440 = vunpack.c.l.b16 %v3408
      %v3441 = vunpack.c.l.b16 %v3409
      %v3442 = vunpack.c.l.b16 %v3410
      %v3443 = vunpack.c.l.b16 %v3411
      %v3444 = vunpack.c.l.b16 %v3412
      %v3445 = vunpack.c.l.b16 %v3413
      %v3446 = vunpack.c.l.b16 %v3414
      %v3447 = vunpack.c.l.b16 %v3415
      %v3448 = vpack.c.b16 %v3433, %v3432
      %v3449 = vpack.c.b16 %v3435, %v3434
      %v3450 = vpack.c.b16 %v3437, %v3436
      %v3451 = vpack.c.b16 %v3439, %v3438
      %v3452 = vpack.c.b16 %v3441, %v3440
      %v3453 = vpack.c.b16 %v3443, %v3442
      %v3454 = vpack.c.b16 %v3445, %v3444
      %v3455 = vpack.c.b16 %v3447, %v3446
      %3464 = vmatprep.subr.bf16.mxu0 0
      %3465 = vmatpush1.bf16.msra.mxu0 %v3455
      %3466 = vmatprep.subr.bf16.mxu0 0
      %3467 = vmatpush1.bf16.msra.mxu0 %v3454
      %3468 = vmatprep.subr.bf16.mxu0 0
      %3469 = vmatpush1.bf16.msra.mxu0 %v3453
      %3470 = vmatprep.subr.bf16.mxu0 0
      %3471 = vmatpush1.bf16.msra.mxu0 %v3452
      %3472 = vmatprep.subr.bf16.mxu0 0
      %3473 = vmatpush1.bf16.msra.mxu0 %v3451
      %3474 = vmatprep.subr.bf16.mxu0 0
      %3475 = vmatpush1.bf16.msra.mxu0 %v3450
      %3476 = vmatprep.subr.bf16.mxu0 0
      %3477 = vmatpush1.bf16.msra.mxu0 %v3449
      %3478 = vmatprep.subr.bf16.mxu0 0
      %3479 = vmatpush1.bf16.msra.mxu0 %v3448
      %3480 = vmatprep.subr.bf16.mxu0 0
      %3481 = vmatpush2.bf16.msra.mxu0 0
      %3482 = vmatprep.subr.bf16.mxu0 0
      %3483 = vmatpush2.bf16.msra.mxu0 0
      %3484 = vmatprep.subr.bf16.mxu0 0
      %3485 = vmatpush2.bf16.msra.mxu0 0
      %3486 = vmatprep.subr.bf16.mxu0 0
      %3487 = vmatpush2.bf16.msra.mxu0 0
      %3488 = vmatprep.subr.bf16.mxu0 0
      %3489 = vmatpush2.bf16.msra.mxu0 0
      %3490 = vmatprep.subr.bf16.mxu0 0
      %3491 = vmatpush2.bf16.msra.mxu0 0
      %3492 = vmatprep.subr.bf16.mxu0 0
      %3493 = vmatpush2.bf16.msra.mxu0 0
      %3494 = vmatprep.subr.bf16.mxu0 0
      %3495 = vmatpush2.bf16.msra.mxu0 0
      %3496 = vmatprep.mubr.bf16.mxu0 0
      %3497 = vmatmul.mubr.bf16.gmra.mxu0 %v2970
      %v3498 = vpop.f32.mrf.mxu0
      %v3499 = vadd.f32 0.0, %v3498
      %v3500 = vpop.f32.mrf.mxu0
      %v3501 = vpop.f32.mrf.mxu0
      %v3502 = vpop.f32.mrf.mxu0
      %3503 = vdwg.mxu0
      %v3504 = vadd.f32 %v3398, %v3499
      %s3505 = scalar_lea.vmem %s3, 320
      %v3506 = vld [vmem:[%s3505] sm:$0xf]
      %v3507 = vld [vmem:[%s3505 + $0x4] sm:$0xf]
      %v3508 = vld [vmem:[%s3505 + $0x8] sm:$0xf]
      %v3509 = vld [vmem:[%s3505 + $0xc] sm:$0xf]
      %v3510 = vld [vmem:[%s3505 + $0x10] sm:$0xf]
      %v3511 = vld [vmem:[%s3505 + $0x14] sm:$0xf]
      %v3512 = vld [vmem:[%s3505 + $0x18] sm:$0xf]
      %v3513 = vld [vmem:[%s3505 + $0x1c] sm:$0xf]
      %v3514 = vld [vmem:[%s3505 + $0x20] sm:$0xf]
      %v3515 = vld [vmem:[%s3505 + $0x24] sm:$0xf]
      %v3516 = vld [vmem:[%s3505 + $0x28] sm:$0xf]
      %v3517 = vld [vmem:[%s3505 + $0x2c] sm:$0xf]
      %v3518 = vld [vmem:[%s3505 + $0x30] sm:$0xf]
      %v3519 = vld [vmem:[%s3505 + $0x34] sm:$0xf]
      %v3520 = vld [vmem:[%s3505 + $0x38] sm:$0xf]
      %v3521 = vld [vmem:[%s3505 + $0x3c] sm:$0xf]
      %v3523 = vrot.slane %v2970, 4
      %v3541 = vunpack.c.l.b16 %v3506
      %v3542 = vunpack.c.l.b16 %v3507
      %v3543 = vunpack.c.l.b16 %v3508
      %v3544 = vunpack.c.l.b16 %v3509
      %v3545 = vunpack.c.l.b16 %v3510
      %v3546 = vunpack.c.l.b16 %v3511
      %v3547 = vunpack.c.l.b16 %v3512
      %v3548 = vunpack.c.l.b16 %v3513
      %v3549 = vunpack.c.l.b16 %v3514
      %v3550 = vunpack.c.l.b16 %v3515
      %v3551 = vunpack.c.l.b16 %v3516
      %v3552 = vunpack.c.l.b16 %v3517
      %v3553 = vunpack.c.l.b16 %v3518
      %v3554 = vunpack.c.l.b16 %v3519
      %v3555 = vunpack.c.l.b16 %v3520
      %v3556 = vunpack.c.l.b16 %v3521
      %v3557 = vpack.c.b16 %v3542, %v3541
      %v3558 = vpack.c.b16 %v3544, %v3543
      %v3559 = vpack.c.b16 %v3546, %v3545
      %v3560 = vpack.c.b16 %v3548, %v3547
      %v3561 = vpack.c.b16 %v3550, %v3549
      %v3562 = vpack.c.b16 %v3552, %v3551
      %v3563 = vpack.c.b16 %v3554, %v3553
      %v3564 = vpack.c.b16 %v3556, %v3555
      %3573 = vmatprep.subr.bf16.mxu0 0
      %3574 = vmatpush1.bf16.msra.mxu0 %v3564
      %3575 = vmatprep.subr.bf16.mxu0 0
      %3576 = vmatpush1.bf16.msra.mxu0 %v3563
      %3577 = vmatprep.subr.bf16.mxu0 0
      %3578 = vmatpush1.bf16.msra.mxu0 %v3562
      %3579 = vmatprep.subr.bf16.mxu0 0
      %3580 = vmatpush1.bf16.msra.mxu0 %v3561
      %3581 = vmatprep.subr.bf16.mxu0 0
      %3582 = vmatpush1.bf16.msra.mxu0 %v3560
      %3583 = vmatprep.subr.bf16.mxu0 0
      %3584 = vmatpush1.bf16.msra.mxu0 %v3559
      %3585 = vmatprep.subr.bf16.mxu0 0
      %3586 = vmatpush1.bf16.msra.mxu0 %v3558
      %3587 = vmatprep.subr.bf16.mxu0 0
      %3588 = vmatpush1.bf16.msra.mxu0 %v3557
      %3589 = vmatprep.subr.bf16.mxu0 0
      %3590 = vmatpush2.bf16.msra.mxu0 0
      %3591 = vmatprep.subr.bf16.mxu0 0
      %3592 = vmatpush2.bf16.msra.mxu0 0
      %3593 = vmatprep.subr.bf16.mxu0 0
      %3594 = vmatpush2.bf16.msra.mxu0 0
      %3595 = vmatprep.subr.bf16.mxu0 0
      %3596 = vmatpush2.bf16.msra.mxu0 0
      %3597 = vmatprep.subr.bf16.mxu0 0
      %3598 = vmatpush2.bf16.msra.mxu0 0
      %3599 = vmatprep.subr.bf16.mxu0 0
      %3600 = vmatpush2.bf16.msra.mxu0 0
      %3601 = vmatprep.subr.bf16.mxu0 0
      %3602 = vmatpush2.bf16.msra.mxu0 0
      %3603 = vmatprep.subr.bf16.mxu0 0
      %3604 = vmatpush2.bf16.msra.mxu0 0
      %3605 = vmatprep.mubr.bf16.mxu0 0
      %3606 = vmatmul.mubr.bf16.gmra.mxu0 %v3523
      %v3607 = vpop.f32.mrf.mxu0
      %v3608 = vadd.f32 0.0, %v3607
      %v3609 = vpop.f32.mrf.mxu0
      %v3610 = vpop.f32.mrf.mxu0
      %v3611 = vpop.f32.mrf.mxu0
      %3612 = vdwg.mxu0
      %v3613 = vadd.f32 %v3504, %v3608
      %s3614 = scalar_lea.vmem %s3, 384
      %v3615 = vld [vmem:[%s3614] sm:$0xf]
      %v3616 = vld [vmem:[%s3614 + $0x4] sm:$0xf]
      %v3617 = vld [vmem:[%s3614 + $0x8] sm:$0xf]
      %v3618 = vld [vmem:[%s3614 + $0xc] sm:$0xf]
      %v3619 = vld [vmem:[%s3614 + $0x10] sm:$0xf]
      %v3620 = vld [vmem:[%s3614 + $0x14] sm:$0xf]
      %v3621 = vld [vmem:[%s3614 + $0x18] sm:$0xf]
      %v3622 = vld [vmem:[%s3614 + $0x1c] sm:$0xf]
      %v3623 = vld [vmem:[%s3614 + $0x20] sm:$0xf]
      %v3624 = vld [vmem:[%s3614 + $0x24] sm:$0xf]
      %v3625 = vld [vmem:[%s3614 + $0x28] sm:$0xf]
      %v3626 = vld [vmem:[%s3614 + $0x2c] sm:$0xf]
      %v3627 = vld [vmem:[%s3614 + $0x30] sm:$0xf]
      %v3628 = vld [vmem:[%s3614 + $0x34] sm:$0xf]
      %v3629 = vld [vmem:[%s3614 + $0x38] sm:$0xf]
      %v3630 = vld [vmem:[%s3614 + $0x3c] sm:$0xf]
      %v3647 = vunpack.c.l.b16 %v3615
      %v3648 = vunpack.c.l.b16 %v3616
      %v3649 = vunpack.c.l.b16 %v3617
      %v3650 = vunpack.c.l.b16 %v3618
      %v3651 = vunpack.c.l.b16 %v3619
      %v3652 = vunpack.c.l.b16 %v3620
      %v3653 = vunpack.c.l.b16 %v3621
      %v3654 = vunpack.c.l.b16 %v3622
      %v3655 = vunpack.c.l.b16 %v3623
      %v3656 = vunpack.c.l.b16 %v3624
      %v3657 = vunpack.c.l.b16 %v3625
      %v3658 = vunpack.c.l.b16 %v3626
      %v3659 = vunpack.c.l.b16 %v3627
      %v3660 = vunpack.c.l.b16 %v3628
      %v3661 = vunpack.c.l.b16 %v3629
      %v3662 = vunpack.c.l.b16 %v3630
      %v3663 = vpack.c.b16 %v3648, %v3647
      %v3664 = vpack.c.b16 %v3650, %v3649
      %v3665 = vpack.c.b16 %v3652, %v3651
      %v3666 = vpack.c.b16 %v3654, %v3653
      %v3667 = vpack.c.b16 %v3656, %v3655
      %v3668 = vpack.c.b16 %v3658, %v3657
      %v3669 = vpack.c.b16 %v3660, %v3659
      %v3670 = vpack.c.b16 %v3662, %v3661
      %3679 = vmatprep.subr.bf16.mxu0 0
      %3680 = vmatpush1.bf16.msra.mxu0 %v3670
      %3681 = vmatprep.subr.bf16.mxu0 0
      %3682 = vmatpush1.bf16.msra.mxu0 %v3669
      %3683 = vmatprep.subr.bf16.mxu0 0
      %3684 = vmatpush1.bf16.msra.mxu0 %v3668
      %3685 = vmatprep.subr.bf16.mxu0 0
      %3686 = vmatpush1.bf16.msra.mxu0 %v3667
      %3687 = vmatprep.subr.bf16.mxu0 0
      %3688 = vmatpush1.bf16.msra.mxu0 %v3666
      %3689 = vmatprep.subr.bf16.mxu0 0
      %3690 = vmatpush1.bf16.msra.mxu0 %v3665
      %3691 = vmatprep.subr.bf16.mxu0 0
      %3692 = vmatpush1.bf16.msra.mxu0 %v3664
      %3693 = vmatprep.subr.bf16.mxu0 0
      %3694 = vmatpush1.bf16.msra.mxu0 %v3663
      %3695 = vmatprep.subr.bf16.mxu0 0
      %3696 = vmatpush2.bf16.msra.mxu0 0
      %3697 = vmatprep.subr.bf16.mxu0 0
      %3698 = vmatpush2.bf16.msra.mxu0 0
      %3699 = vmatprep.subr.bf16.mxu0 0
      %3700 = vmatpush2.bf16.msra.mxu0 0
      %3701 = vmatprep.subr.bf16.mxu0 0
      %3702 = vmatpush2.bf16.msra.mxu0 0
      %3703 = vmatprep.subr.bf16.mxu0 0
      %3704 = vmatpush2.bf16.msra.mxu0 0
      %3705 = vmatprep.subr.bf16.mxu0 0
      %3706 = vmatpush2.bf16.msra.mxu0 0
      %3707 = vmatprep.subr.bf16.mxu0 0
      %3708 = vmatpush2.bf16.msra.mxu0 0
      %3709 = vmatprep.subr.bf16.mxu0 0
      %3710 = vmatpush2.bf16.msra.mxu0 0
      %3711 = vmatprep.mubr.bf16.mxu0 0
      %3712 = vmatmul.mubr.bf16.gmra.mxu0 %v2971
      %v3713 = vpop.f32.mrf.mxu0
      %v3714 = vadd.f32 0.0, %v3713
      %v3715 = vpop.f32.mrf.mxu0
      %v3716 = vpop.f32.mrf.mxu0
      %v3717 = vpop.f32.mrf.mxu0
      %3718 = vdwg.mxu0
      %v3719 = vadd.f32 %v3613, %v3714
      %s3720 = scalar_lea.vmem %s3, 448
      %v3721 = vld [vmem:[%s3720] sm:$0xf]
      %v3722 = vld [vmem:[%s3720 + $0x4] sm:$0xf]
      %v3723 = vld [vmem:[%s3720 + $0x8] sm:$0xf]
      %v3724 = vld [vmem:[%s3720 + $0xc] sm:$0xf]
      %v3725 = vld [vmem:[%s3720 + $0x10] sm:$0xf]
      %v3726 = vld [vmem:[%s3720 + $0x14] sm:$0xf]
      %v3727 = vld [vmem:[%s3720 + $0x18] sm:$0xf]
      %v3728 = vld [vmem:[%s3720 + $0x1c] sm:$0xf]
      %v3729 = vld [vmem:[%s3720 + $0x20] sm:$0xf]
      %v3730 = vld [vmem:[%s3720 + $0x24] sm:$0xf]
      %v3731 = vld [vmem:[%s3720 + $0x28] sm:$0xf]
      %v3732 = vld [vmem:[%s3720 + $0x2c] sm:$0xf]
      %v3733 = vld [vmem:[%s3720 + $0x30] sm:$0xf]
      %v3734 = vld [vmem:[%s3720 + $0x34] sm:$0xf]
      %v3735 = vld [vmem:[%s3720 + $0x38] sm:$0xf]
      %v3736 = vld [vmem:[%s3720 + $0x3c] sm:$0xf]
      %v3738 = vrot.slane %v2971, 4
      %v3756 = vunpack.c.l.b16 %v3721
      %v3757 = vunpack.c.l.b16 %v3722
      %v3758 = vunpack.c.l.b16 %v3723
      %v3759 = vunpack.c.l.b16 %v3724
      %v3760 = vunpack.c.l.b16 %v3725
      %v3761 = vunpack.c.l.b16 %v3726
      %v3762 = vunpack.c.l.b16 %v3727
      %v3763 = vunpack.c.l.b16 %v3728
      %v3764 = vunpack.c.l.b16 %v3729
      %v3765 = vunpack.c.l.b16 %v3730
      %v3766 = vunpack.c.l.b16 %v3731
      %v3767 = vunpack.c.l.b16 %v3732
      %v3768 = vunpack.c.l.b16 %v3733
      %v3769 = vunpack.c.l.b16 %v3734
      %v3770 = vunpack.c.l.b16 %v3735
      %v3771 = vunpack.c.l.b16 %v3736
      %v3772 = vpack.c.b16 %v3757, %v3756
      %v3773 = vpack.c.b16 %v3759, %v3758
      %v3774 = vpack.c.b16 %v3761, %v3760
      %v3775 = vpack.c.b16 %v3763, %v3762
      %v3776 = vpack.c.b16 %v3765, %v3764
      %v3777 = vpack.c.b16 %v3767, %v3766
      %v3778 = vpack.c.b16 %v3769, %v3768
      %v3779 = vpack.c.b16 %v3771, %v3770
      %3788 = vmatprep.subr.bf16.mxu0 0
      %3789 = vmatpush1.bf16.msra.mxu0 %v3779
      %3790 = vmatprep.subr.bf16.mxu0 0
      %3791 = vmatpush1.bf16.msra.mxu0 %v3778
      %3792 = vmatprep.subr.bf16.mxu0 0
      %3793 = vmatpush1.bf16.msra.mxu0 %v3777
      %3794 = vmatprep.subr.bf16.mxu0 0
      %3795 = vmatpush1.bf16.msra.mxu0 %v3776
      %3796 = vmatprep.subr.bf16.mxu0 0
      %3797 = vmatpush1.bf16.msra.mxu0 %v3775
      %3798 = vmatprep.subr.bf16.mxu0 0
      %3799 = vmatpush1.bf16.msra.mxu0 %v3774
      %3800 = vmatprep.subr.bf16.mxu0 0
      %3801 = vmatpush1.bf16.msra.mxu0 %v3773
      %3802 = vmatprep.subr.bf16.mxu0 0
      %3803 = vmatpush1.bf16.msra.mxu0 %v3772
      %3804 = vmatprep.subr.bf16.mxu0 0
      %3805 = vmatpush2.bf16.msra.mxu0 0
      %3806 = vmatprep.subr.bf16.mxu0 0
      %3807 = vmatpush2.bf16.msra.mxu0 0
      %3808 = vmatprep.subr.bf16.mxu0 0
      %3809 = vmatpush2.bf16.msra.mxu0 0
      %3810 = vmatprep.subr.bf16.mxu0 0
      %3811 = vmatpush2.bf16.msra.mxu0 0
      %3812 = vmatprep.subr.bf16.mxu0 0
      %3813 = vmatpush2.bf16.msra.mxu0 0
      %3814 = vmatprep.subr.bf16.mxu0 0
      %3815 = vmatpush2.bf16.msra.mxu0 0
      %3816 = vmatprep.subr.bf16.mxu0 0
      %3817 = vmatpush2.bf16.msra.mxu0 0
      %3818 = vmatprep.subr.bf16.mxu0 0
      %3819 = vmatpush2.bf16.msra.mxu0 0
      %3820 = vmatprep.mubr.bf16.mxu0 0
      %3821 = vmatmul.mubr.bf16.gmra.mxu0 %v3738
      %v3822 = vpop.f32.mrf.mxu0
      %v3823 = vadd.f32 0.0, %v3822
      %v3824 = vpop.f32.mrf.mxu0
      %v3825 = vpop.f32.mrf.mxu0
      %v3826 = vpop.f32.mrf.mxu0
      %3827 = vdwg.mxu0
      %v3828 = vadd.f32 %v3719, %v3823
      %v3829 = vlaneseq
      %v3830 = vshrl.u32 %v3829, 7
      %v3831 = vsub.s32 3, %v3830
      %v3832 = vrot.slane %v251, %v3831
      %v3833 = vadd.f32 %v3828, %v3832
      %vm3834 = vcmp.ge.f32.partialorder %v3833, 0.0
      %v3835 = vmul.f32 %v3833, 0.01
      %v3836 = vsel %vm3834, %v3833, %v3835
      %v3837 = vpack.c.bf16 %v3836, %v3836
      %v3838 = vld [vmem:[%s4] sm:$0xf]
      %v3839 = vld [vmem:[%s4 + $0x4] sm:$0xf]
      %v3840 = vld [vmem:[%s4 + $0x8] sm:$0xf]
      %v3841 = vld [vmem:[%s4 + $0xc] sm:$0xf]
      %v3842 = vld [vmem:[%s4 + $0x10] sm:$0xf]
      %v3843 = vld [vmem:[%s4 + $0x14] sm:$0xf]
      %v3844 = vld [vmem:[%s4 + $0x18] sm:$0xf]
      %v3845 = vld [vmem:[%s4 + $0x1c] sm:$0xf]
      %v3846 = vld [vmem:[%s4 + $0x20] sm:$0xf]
      %v3847 = vld [vmem:[%s4 + $0x24] sm:$0xf]
      %v3848 = vld [vmem:[%s4 + $0x28] sm:$0xf]
      %v3849 = vld [vmem:[%s4 + $0x2c] sm:$0xf]
      %v3850 = vld [vmem:[%s4 + $0x30] sm:$0xf]
      %v3851 = vld [vmem:[%s4 + $0x34] sm:$0xf]
      %v3852 = vld [vmem:[%s4 + $0x38] sm:$0xf]
      %v3853 = vld [vmem:[%s4 + $0x3c] sm:$0xf]
      %s3854 = scalar_lea.vmem %s4, 64
      %v3855 = vld [vmem:[%s3854] sm:$0xf]
      %v3856 = vld [vmem:[%s3854 + $0x4] sm:$0xf]
      %v3857 = vld [vmem:[%s3854 + $0x8] sm:$0xf]
      %v3858 = vld [vmem:[%s3854 + $0xc] sm:$0xf]
      %v3859 = vld [vmem:[%s3854 + $0x10] sm:$0xf]
      %v3860 = vld [vmem:[%s3854 + $0x14] sm:$0xf]
      %v3861 = vld [vmem:[%s3854 + $0x18] sm:$0xf]
      %v3862 = vld [vmem:[%s3854 + $0x1c] sm:$0xf]
      %v3863 = vld [vmem:[%s3854 + $0x20] sm:$0xf]
      %v3864 = vld [vmem:[%s3854 + $0x24] sm:$0xf]
      %v3865 = vld [vmem:[%s3854 + $0x28] sm:$0xf]
      %v3866 = vld [vmem:[%s3854 + $0x2c] sm:$0xf]
      %v3867 = vld [vmem:[%s3854 + $0x30] sm:$0xf]
      %v3868 = vld [vmem:[%s3854 + $0x34] sm:$0xf]
      %v3869 = vld [vmem:[%s3854 + $0x38] sm:$0xf]
      %v3870 = vld [vmem:[%s3854 + $0x3c] sm:$0xf]
      %v3872 = vshrl.u32 %v3837, 16
      %v3891 = vunpack.c.l.b16 %v3855
      %v3892 = vunpack.c.l.b16 %v3856
      %v3893 = vunpack.c.l.b16 %v3857
      %v3894 = vunpack.c.l.b16 %v3858
      %v3895 = vunpack.c.l.b16 %v3859
      %v3896 = vunpack.c.l.b16 %v3860
      %v3897 = vunpack.c.l.b16 %v3861
      %v3898 = vunpack.c.l.b16 %v3862
      %v3899 = vunpack.c.l.b16 %v3863
      %v3900 = vunpack.c.l.b16 %v3864
      %v3901 = vunpack.c.l.b16 %v3865
      %v3902 = vunpack.c.l.b16 %v3866
      %v3903 = vunpack.c.l.b16 %v3867
      %v3904 = vunpack.c.l.b16 %v3868
      %v3905 = vunpack.c.l.b16 %v3869
      %v3906 = vunpack.c.l.b16 %v3870
      %v3907 = vpack.c.b16 %v3892, %v3891
      %v3908 = vpack.c.b16 %v3894, %v3893
      %v3909 = vpack.c.b16 %v3896, %v3895
      %v3910 = vpack.c.b16 %v3898, %v3897
      %v3911 = vpack.c.b16 %v3900, %v3899
      %v3912 = vpack.c.b16 %v3902, %v3901
      %v3913 = vpack.c.b16 %v3904, %v3903
      %v3914 = vpack.c.b16 %v3906, %v3905
      %3923 = vmatprep.subr.bf16.mxu0 0
      %3924 = vmatpush1.bf16.msra.mxu0 %v3914
      %3925 = vmatprep.subr.bf16.mxu0 0
      %3926 = vmatpush1.bf16.msra.mxu0 %v3913
      %3927 = vmatprep.subr.bf16.mxu0 0
      %3928 = vmatpush1.bf16.msra.mxu0 %v3912
      %3929 = vmatprep.subr.bf16.mxu0 0
      %3930 = vmatpush1.bf16.msra.mxu0 %v3911
      %3931 = vmatprep.subr.bf16.mxu0 0
      %3932 = vmatpush1.bf16.msra.mxu0 %v3910
      %3933 = vmatprep.subr.bf16.mxu0 0
      %3934 = vmatpush1.bf16.msra.mxu0 %v3909
      %3935 = vmatprep.subr.bf16.mxu0 0
      %3936 = vmatpush1.bf16.msra.mxu0 %v3908
      %3937 = vmatprep.subr.bf16.mxu0 0
      %3938 = vmatpush1.bf16.msra.mxu0 %v3907
      %3939 = vmatprep.subr.bf16.mxu0 0
      %3940 = vmatpush2.bf16.msra.mxu0 0
      %3941 = vmatprep.subr.bf16.mxu0 0
      %3942 = vmatpush2.bf16.msra.mxu0 0
      %3943 = vmatprep.subr.bf16.mxu0 0
      %3944 = vmatpush2.bf16.msra.mxu0 0
      %3945 = vmatprep.subr.bf16.mxu0 0
      %3946 = vmatpush2.bf16.msra.mxu0 0
      %3947 = vmatprep.subr.bf16.mxu0 0
      %3948 = vmatpush2.bf16.msra.mxu0 0
      %3949 = vmatprep.subr.bf16.mxu0 0
      %3950 = vmatpush2.bf16.msra.mxu0 0
      %3951 = vmatprep.subr.bf16.mxu0 0
      %3952 = vmatpush2.bf16.msra.mxu0 0
      %3953 = vmatprep.subr.bf16.mxu0 0
      %3954 = vmatpush2.bf16.msra.mxu0 0
      %3955 = vmatprep.mubr.bf16.mxu0 0
      %3956 = vmatmul.mubr.bf16.gmra.mxu0 %v3872
      %v3957 = vpop.f32.mrf.mxu0
      %v3958 = vadd.f32 0.0, %v3957
      %v3959 = vpop.f32.mrf.mxu0
      %v3960 = vpop.f32.mrf.mxu0
      %v3961 = vpop.f32.mrf.mxu0
      %3962 = vdwg.mxu0
      %v3979 = vunpack.c.l.b16 %v3838
      %v3980 = vunpack.c.l.b16 %v3839
      %v3981 = vunpack.c.l.b16 %v3840
      %v3982 = vunpack.c.l.b16 %v3841
      %v3983 = vunpack.c.l.b16 %v3842
      %v3984 = vunpack.c.l.b16 %v3843
      %v3985 = vunpack.c.l.b16 %v3844
      %v3986 = vunpack.c.l.b16 %v3845
      %v3987 = vunpack.c.l.b16 %v3846
      %v3988 = vunpack.c.l.b16 %v3847
      %v3989 = vunpack.c.l.b16 %v3848
      %v3990 = vunpack.c.l.b16 %v3849
      %v3991 = vunpack.c.l.b16 %v3850
      %v3992 = vunpack.c.l.b16 %v3851
      %v3993 = vunpack.c.l.b16 %v3852
      %v3994 = vunpack.c.l.b16 %v3853
      %v3995 = vpack.c.b16 %v3980, %v3979
      %v3996 = vpack.c.b16 %v3982, %v3981
      %v3997 = vpack.c.b16 %v3984, %v3983
      %v3998 = vpack.c.b16 %v3986, %v3985
      %v3999 = vpack.c.b16 %v3988, %v3987
      %v4000 = vpack.c.b16 %v3990, %v3989
      %v4001 = vpack.c.b16 %v3992, %v3991
      %v4002 = vpack.c.b16 %v3994, %v3993
      %4011 = vmatprep.subr.bf16.mxu0 0
      %4012 = vmatpush1.bf16.msra.mxu0 %v4002
      %4013 = vmatprep.subr.bf16.mxu0 0
      %4014 = vmatpush1.bf16.msra.mxu0 %v4001
      %4015 = vmatprep.subr.bf16.mxu0 0
      %4016 = vmatpush1.bf16.msra.mxu0 %v4000
      %4017 = vmatprep.subr.bf16.mxu0 0
      %4018 = vmatpush1.bf16.msra.mxu0 %v3999
      %4019 = vmatprep.subr.bf16.mxu0 0
      %4020 = vmatpush1.bf16.msra.mxu0 %v3998
      %4021 = vmatprep.subr.bf16.mxu0 0
      %4022 = vmatpush1.bf16.msra.mxu0 %v3997
      %4023 = vmatprep.subr.bf16.mxu0 0
      %4024 = vmatpush1.bf16.msra.mxu0 %v3996
      %4025 = vmatprep.subr.bf16.mxu0 0
      %4026 = vmatpush1.bf16.msra.mxu0 %v3995
      %4027 = vmatprep.subr.bf16.mxu0 0
      %4028 = vmatpush2.bf16.msra.mxu0 0
      %4029 = vmatprep.subr.bf16.mxu0 0
      %4030 = vmatpush2.bf16.msra.mxu0 0
      %4031 = vmatprep.subr.bf16.mxu0 0
      %4032 = vmatpush2.bf16.msra.mxu0 0
      %4033 = vmatprep.subr.bf16.mxu0 0
      %4034 = vmatpush2.bf16.msra.mxu0 0
      %4035 = vmatprep.subr.bf16.mxu0 0
      %4036 = vmatpush2.bf16.msra.mxu0 0
      %4037 = vmatprep.subr.bf16.mxu0 0
      %4038 = vmatpush2.bf16.msra.mxu0 0
      %4039 = vmatprep.subr.bf16.mxu0 0
      %4040 = vmatpush2.bf16.msra.mxu0 0
      %4041 = vmatprep.subr.bf16.mxu0 0
      %4042 = vmatpush2.bf16.msra.mxu0 0
      %4043 = vmatprep.mubr.bf16.mxu0 0
      %4044 = vmatmul.mubr.bf16.gmra.mxu0 %v3837
      %v4045 = vpop.f32.mrf.mxu0
      %v4046 = vadd.f32 %v3958, %v4045
      %v4047 = vpop.f32.mrf.mxu0
      %v4048 = vpop.f32.mrf.mxu0
      %v4049 = vpop.f32.mrf.mxu0
      %4050 = vdwg.mxu0
      %s4051 = scalar_lea.vmem %s4, 128
      %v4052 = vld [vmem:[%s4051] sm:$0xf]
      %v4053 = vld [vmem:[%s4051 + $0x4] sm:$0xf]
      %v4054 = vld [vmem:[%s4051 + $0x8] sm:$0xf]
      %v4055 = vld [vmem:[%s4051 + $0xc] sm:$0xf]
      %v4056 = vld [vmem:[%s4051 + $0x10] sm:$0xf]
      %v4057 = vld [vmem:[%s4051 + $0x14] sm:$0xf]
      %v4058 = vld [vmem:[%s4051 + $0x18] sm:$0xf]
      %v4059 = vld [vmem:[%s4051 + $0x1c] sm:$0xf]
      %v4060 = vld [vmem:[%s4051 + $0x20] sm:$0xf]
      %v4061 = vld [vmem:[%s4051 + $0x24] sm:$0xf]
      %v4062 = vld [vmem:[%s4051 + $0x28] sm:$0xf]
      %v4063 = vld [vmem:[%s4051 + $0x2c] sm:$0xf]
      %v4064 = vld [vmem:[%s4051 + $0x30] sm:$0xf]
      %v4065 = vld [vmem:[%s4051 + $0x34] sm:$0xf]
      %v4066 = vld [vmem:[%s4051 + $0x38] sm:$0xf]
      %v4067 = vld [vmem:[%s4051 + $0x3c] sm:$0xf]
      %v4069 = vrot.slane %v3837, 1
      %v4087 = vunpack.c.l.b16 %v4052
      %v4088 = vunpack.c.l.b16 %v4053
      %v4089 = vunpack.c.l.b16 %v4054
      %v4090 = vunpack.c.l.b16 %v4055
      %v4091 = vunpack.c.l.b16 %v4056
      %v4092 = vunpack.c.l.b16 %v4057
      %v4093 = vunpack.c.l.b16 %v4058
      %v4094 = vunpack.c.l.b16 %v4059
      %v4095 = vunpack.c.l.b16 %v4060
      %v4096 = vunpack.c.l.b16 %v4061
      %v4097 = vunpack.c.l.b16 %v4062
      %v4098 = vunpack.c.l.b16 %v4063
      %v4099 = vunpack.c.l.b16 %v4064
      %v4100 = vunpack.c.l.b16 %v4065
      %v4101 = vunpack.c.l.b16 %v4066
      %v4102 = vunpack.c.l.b16 %v4067
      %v4103 = vpack.c.b16 %v4088, %v4087
      %v4104 = vpack.c.b16 %v4090, %v4089
      %v4105 = vpack.c.b16 %v4092, %v4091
      %v4106 = vpack.c.b16 %v4094, %v4093
      %v4107 = vpack.c.b16 %v4096, %v4095
      %v4108 = vpack.c.b16 %v4098, %v4097
      %v4109 = vpack.c.b16 %v4100, %v4099
      %v4110 = vpack.c.b16 %v4102, %v4101
      %4119 = vmatprep.subr.bf16.mxu0 0
      %4120 = vmatpush1.bf16.msra.mxu0 %v4110
      %4121 = vmatprep.subr.bf16.mxu0 0
      %4122 = vmatpush1.bf16.msra.mxu0 %v4109
      %4123 = vmatprep.subr.bf16.mxu0 0
      %4124 = vmatpush1.bf16.msra.mxu0 %v4108
      %4125 = vmatprep.subr.bf16.mxu0 0
      %4126 = vmatpush1.bf16.msra.mxu0 %v4107
      %4127 = vmatprep.subr.bf16.mxu0 0
      %4128 = vmatpush1.bf16.msra.mxu0 %v4106
      %4129 = vmatprep.subr.bf16.mxu0 0
      %4130 = vmatpush1.bf16.msra.mxu0 %v4105
      %4131 = vmatprep.subr.bf16.mxu0 0
      %4132 = vmatpush1.bf16.msra.mxu0 %v4104
      %4133 = vmatprep.subr.bf16.mxu0 0
      %4134 = vmatpush1.bf16.msra.mxu0 %v4103
      %4135 = vmatprep.subr.bf16.mxu0 0
      %4136 = vmatpush2.bf16.msra.mxu0 0
      %4137 = vmatprep.subr.bf16.mxu0 0
      %4138 = vmatpush2.bf16.msra.mxu0 0
      %4139 = vmatprep.subr.bf16.mxu0 0
      %4140 = vmatpush2.bf16.msra.mxu0 0
      %4141 = vmatprep.subr.bf16.mxu0 0
      %4142 = vmatpush2.bf16.msra.mxu0 0
      %4143 = vmatprep.subr.bf16.mxu0 0
      %4144 = vmatpush2.bf16.msra.mxu0 0
      %4145 = vmatprep.subr.bf16.mxu0 0
      %4146 = vmatpush2.bf16.msra.mxu0 0
      %4147 = vmatprep.subr.bf16.mxu0 0
      %4148 = vmatpush2.bf16.msra.mxu0 0
      %4149 = vmatprep.subr.bf16.mxu0 0
      %4150 = vmatpush2.bf16.msra.mxu0 0
      %4151 = vmatprep.mubr.bf16.mxu0 0
      %4152 = vmatmul.mubr.bf16.gmra.mxu0 %v4069
      %v4153 = vpop.f32.mrf.mxu0
      %v4154 = vadd.f32 0.0, %v4153
      %v4155 = vpop.f32.mrf.mxu0
      %v4156 = vpop.f32.mrf.mxu0
      %v4157 = vpop.f32.mrf.mxu0
      %4158 = vdwg.mxu0
      %v4159 = vadd.f32 %v4046, %v4154
      %s4160 = scalar_lea.vmem %s4, 192
      %v4161 = vld [vmem:[%s4160] sm:$0xf]
      %v4162 = vld [vmem:[%s4160 + $0x4] sm:$0xf]
      %v4163 = vld [vmem:[%s4160 + $0x8] sm:$0xf]
      %v4164 = vld [vmem:[%s4160 + $0xc] sm:$0xf]
      %v4165 = vld [vmem:[%s4160 + $0x10] sm:$0xf]
      %v4166 = vld [vmem:[%s4160 + $0x14] sm:$0xf]
      %v4167 = vld [vmem:[%s4160 + $0x18] sm:$0xf]
      %v4168 = vld [vmem:[%s4160 + $0x1c] sm:$0xf]
      %v4169 = vld [vmem:[%s4160 + $0x20] sm:$0xf]
      %v4170 = vld [vmem:[%s4160 + $0x24] sm:$0xf]
      %v4171 = vld [vmem:[%s4160 + $0x28] sm:$0xf]
      %v4172 = vld [vmem:[%s4160 + $0x2c] sm:$0xf]
      %v4173 = vld [vmem:[%s4160 + $0x30] sm:$0xf]
      %v4174 = vld [vmem:[%s4160 + $0x34] sm:$0xf]
      %v4175 = vld [vmem:[%s4160 + $0x38] sm:$0xf]
      %v4176 = vld [vmem:[%s4160 + $0x3c] sm:$0xf]
      %v4177 = vrot.slane %v3872, 1
      %v4195 = vunpack.c.l.b16 %v4161
      %v4196 = vunpack.c.l.b16 %v4162
      %v4197 = vunpack.c.l.b16 %v4163
      %v4198 = vunpack.c.l.b16 %v4164
      %v4199 = vunpack.c.l.b16 %v4165
      %v4200 = vunpack.c.l.b16 %v4166
      %v4201 = vunpack.c.l.b16 %v4167
      %v4202 = vunpack.c.l.b16 %v4168
      %v4203 = vunpack.c.l.b16 %v4169
      %v4204 = vunpack.c.l.b16 %v4170
      %v4205 = vunpack.c.l.b16 %v4171
      %v4206 = vunpack.c.l.b16 %v4172
      %v4207 = vunpack.c.l.b16 %v4173
      %v4208 = vunpack.c.l.b16 %v4174
      %v4209 = vunpack.c.l.b16 %v4175
      %v4210 = vunpack.c.l.b16 %v4176
      %v4211 = vpack.c.b16 %v4196, %v4195
      %v4212 = vpack.c.b16 %v4198, %v4197
      %v4213 = vpack.c.b16 %v4200, %v4199
      %v4214 = vpack.c.b16 %v4202, %v4201
      %v4215 = vpack.c.b16 %v4204, %v4203
      %v4216 = vpack.c.b16 %v4206, %v4205
      %v4217 = vpack.c.b16 %v4208, %v4207
      %v4218 = vpack.c.b16 %v4210, %v4209
      %4227 = vmatprep.subr.bf16.mxu0 0
      %4228 = vmatpush1.bf16.msra.mxu0 %v4218
      %4229 = vmatprep.subr.bf16.mxu0 0
      %4230 = vmatpush1.bf16.msra.mxu0 %v4217
      %4231 = vmatprep.subr.bf16.mxu0 0
      %4232 = vmatpush1.bf16.msra.mxu0 %v4216
      %4233 = vmatprep.subr.bf16.mxu0 0
      %4234 = vmatpush1.bf16.msra.mxu0 %v4215
      %4235 = vmatprep.subr.bf16.mxu0 0
      %4236 = vmatpush1.bf16.msra.mxu0 %v4214
      %4237 = vmatprep.subr.bf16.mxu0 0
      %4238 = vmatpush1.bf16.msra.mxu0 %v4213
      %4239 = vmatprep.subr.bf16.mxu0 0
      %4240 = vmatpush1.bf16.msra.mxu0 %v4212
      %4241 = vmatprep.subr.bf16.mxu0 0
      %4242 = vmatpush1.bf16.msra.mxu0 %v4211
      %4243 = vmatprep.subr.bf16.mxu0 0
      %4244 = vmatpush2.bf16.msra.mxu0 0
      %4245 = vmatprep.subr.bf16.mxu0 0
      %4246 = vmatpush2.bf16.msra.mxu0 0
      %4247 = vmatprep.subr.bf16.mxu0 0
      %4248 = vmatpush2.bf16.msra.mxu0 0
      %4249 = vmatprep.subr.bf16.mxu0 0
      %4250 = vmatpush2.bf16.msra.mxu0 0
      %4251 = vmatprep.subr.bf16.mxu0 0
      %4252 = vmatpush2.bf16.msra.mxu0 0
      %4253 = vmatprep.subr.bf16.mxu0 0
      %4254 = vmatpush2.bf16.msra.mxu0 0
      %4255 = vmatprep.subr.bf16.mxu0 0
      %4256 = vmatpush2.bf16.msra.mxu0 0
      %4257 = vmatprep.subr.bf16.mxu0 0
      %4258 = vmatpush2.bf16.msra.mxu0 0
      %4259 = vmatprep.mubr.bf16.mxu0 0
      %4260 = vmatmul.mubr.bf16.gmra.mxu0 %v4177
      %v4261 = vpop.f32.mrf.mxu0
      %v4262 = vadd.f32 0.0, %v4261
      %v4263 = vpop.f32.mrf.mxu0
      %v4264 = vpop.f32.mrf.mxu0
      %v4265 = vpop.f32.mrf.mxu0
      %4266 = vdwg.mxu0
      %v4267 = vadd.f32 %v4159, %v4262
      %s4268 = scalar_lea.vmem %s4, 256
      %v4269 = vld [vmem:[%s4268] sm:$0xf]
      %v4270 = vld [vmem:[%s4268 + $0x4] sm:$0xf]
      %v4271 = vld [vmem:[%s4268 + $0x8] sm:$0xf]
      %v4272 = vld [vmem:[%s4268 + $0xc] sm:$0xf]
      %v4273 = vld [vmem:[%s4268 + $0x10] sm:$0xf]
      %v4274 = vld [vmem:[%s4268 + $0x14] sm:$0xf]
      %v4275 = vld [vmem:[%s4268 + $0x18] sm:$0xf]
      %v4276 = vld [vmem:[%s4268 + $0x1c] sm:$0xf]
      %v4277 = vld [vmem:[%s4268 + $0x20] sm:$0xf]
      %v4278 = vld [vmem:[%s4268 + $0x24] sm:$0xf]
      %v4279 = vld [vmem:[%s4268 + $0x28] sm:$0xf]
      %v4280 = vld [vmem:[%s4268 + $0x2c] sm:$0xf]
      %v4281 = vld [vmem:[%s4268 + $0x30] sm:$0xf]
      %v4282 = vld [vmem:[%s4268 + $0x34] sm:$0xf]
      %v4283 = vld [vmem:[%s4268 + $0x38] sm:$0xf]
      %v4284 = vld [vmem:[%s4268 + $0x3c] sm:$0xf]
      %v4285 = vrot.slane %v3837, 2
      %v4303 = vunpack.c.l.b16 %v4269
      %v4304 = vunpack.c.l.b16 %v4270
      %v4305 = vunpack.c.l.b16 %v4271
      %v4306 = vunpack.c.l.b16 %v4272
      %v4307 = vunpack.c.l.b16 %v4273
      %v4308 = vunpack.c.l.b16 %v4274
      %v4309 = vunpack.c.l.b16 %v4275
      %v4310 = vunpack.c.l.b16 %v4276
      %v4311 = vunpack.c.l.b16 %v4277
      %v4312 = vunpack.c.l.b16 %v4278
      %v4313 = vunpack.c.l.b16 %v4279
      %v4314 = vunpack.c.l.b16 %v4280
      %v4315 = vunpack.c.l.b16 %v4281
      %v4316 = vunpack.c.l.b16 %v4282
      %v4317 = vunpack.c.l.b16 %v4283
      %v4318 = vunpack.c.l.b16 %v4284
      %v4319 = vpack.c.b16 %v4304, %v4303
      %v4320 = vpack.c.b16 %v4306, %v4305
      %v4321 = vpack.c.b16 %v4308, %v4307
      %v4322 = vpack.c.b16 %v4310, %v4309
      %v4323 = vpack.c.b16 %v4312, %v4311
      %v4324 = vpack.c.b16 %v4314, %v4313
      %v4325 = vpack.c.b16 %v4316, %v4315
      %v4326 = vpack.c.b16 %v4318, %v4317
      %4335 = vmatprep.subr.bf16.mxu0 0
      %4336 = vmatpush1.bf16.msra.mxu0 %v4326
      %4337 = vmatprep.subr.bf16.mxu0 0
      %4338 = vmatpush1.bf16.msra.mxu0 %v4325
      %4339 = vmatprep.subr.bf16.mxu0 0
      %4340 = vmatpush1.bf16.msra.mxu0 %v4324
      %4341 = vmatprep.subr.bf16.mxu0 0
      %4342 = vmatpush1.bf16.msra.mxu0 %v4323
      %4343 = vmatprep.subr.bf16.mxu0 0
      %4344 = vmatpush1.bf16.msra.mxu0 %v4322
      %4345 = vmatprep.subr.bf16.mxu0 0
      %4346 = vmatpush1.bf16.msra.mxu0 %v4321
      %4347 = vmatprep.subr.bf16.mxu0 0
      %4348 = vmatpush1.bf16.msra.mxu0 %v4320
      %4349 = vmatprep.subr.bf16.mxu0 0
      %4350 = vmatpush1.bf16.msra.mxu0 %v4319
      %4351 = vmatprep.subr.bf16.mxu0 0
      %4352 = vmatpush2.bf16.msra.mxu0 0
      %4353 = vmatprep.subr.bf16.mxu0 0
      %4354 = vmatpush2.bf16.msra.mxu0 0
      %4355 = vmatprep.subr.bf16.mxu0 0
      %4356 = vmatpush2.bf16.msra.mxu0 0
      %4357 = vmatprep.subr.bf16.mxu0 0
      %4358 = vmatpush2.bf16.msra.mxu0 0
      %4359 = vmatprep.subr.bf16.mxu0 0
      %4360 = vmatpush2.bf16.msra.mxu0 0
      %4361 = vmatprep.subr.bf16.mxu0 0
      %4362 = vmatpush2.bf16.msra.mxu0 0
      %4363 = vmatprep.subr.bf16.mxu0 0
      %4364 = vmatpush2.bf16.msra.mxu0 0
      %4365 = vmatprep.subr.bf16.mxu0 0
      %4366 = vmatpush2.bf16.msra.mxu0 0
      %4367 = vmatprep.mubr.bf16.mxu0 0
      %4368 = vmatmul.mubr.bf16.gmra.mxu0 %v4285
      %v4369 = vpop.f32.mrf.mxu0
      %v4370 = vadd.f32 0.0, %v4369
      %v4371 = vpop.f32.mrf.mxu0
      %v4372 = vpop.f32.mrf.mxu0
      %v4373 = vpop.f32.mrf.mxu0
      %4374 = vdwg.mxu0
      %v4375 = vadd.f32 %v4267, %v4370
      %s4376 = scalar_lea.vmem %s4, 320
      %v4377 = vld [vmem:[%s4376] sm:$0xf]
      %v4378 = vld [vmem:[%s4376 + $0x4] sm:$0xf]
      %v4379 = vld [vmem:[%s4376 + $0x8] sm:$0xf]
      %v4380 = vld [vmem:[%s4376 + $0xc] sm:$0xf]
      %v4381 = vld [vmem:[%s4376 + $0x10] sm:$0xf]
      %v4382 = vld [vmem:[%s4376 + $0x14] sm:$0xf]
      %v4383 = vld [vmem:[%s4376 + $0x18] sm:$0xf]
      %v4384 = vld [vmem:[%s4376 + $0x1c] sm:$0xf]
      %v4385 = vld [vmem:[%s4376 + $0x20] sm:$0xf]
      %v4386 = vld [vmem:[%s4376 + $0x24] sm:$0xf]
      %v4387 = vld [vmem:[%s4376 + $0x28] sm:$0xf]
      %v4388 = vld [vmem:[%s4376 + $0x2c] sm:$0xf]
      %v4389 = vld [vmem:[%s4376 + $0x30] sm:$0xf]
      %v4390 = vld [vmem:[%s4376 + $0x34] sm:$0xf]
      %v4391 = vld [vmem:[%s4376 + $0x38] sm:$0xf]
      %v4392 = vld [vmem:[%s4376 + $0x3c] sm:$0xf]
      %v4393 = vrot.slane %v3872, 2
      %v4411 = vunpack.c.l.b16 %v4377
      %v4412 = vunpack.c.l.b16 %v4378
      %v4413 = vunpack.c.l.b16 %v4379
      %v4414 = vunpack.c.l.b16 %v4380
      %v4415 = vunpack.c.l.b16 %v4381
      %v4416 = vunpack.c.l.b16 %v4382
      %v4417 = vunpack.c.l.b16 %v4383
      %v4418 = vunpack.c.l.b16 %v4384
      %v4419 = vunpack.c.l.b16 %v4385
      %v4420 = vunpack.c.l.b16 %v4386
      %v4421 = vunpack.c.l.b16 %v4387
      %v4422 = vunpack.c.l.b16 %v4388
      %v4423 = vunpack.c.l.b16 %v4389
      %v4424 = vunpack.c.l.b16 %v4390
      %v4425 = vunpack.c.l.b16 %v4391
      %v4426 = vunpack.c.l.b16 %v4392
      %v4427 = vpack.c.b16 %v4412, %v4411
      %v4428 = vpack.c.b16 %v4414, %v4413
      %v4429 = vpack.c.b16 %v4416, %v4415
      %v4430 = vpack.c.b16 %v4418, %v4417
      %v4431 = vpack.c.b16 %v4420, %v4419
      %v4432 = vpack.c.b16 %v4422, %v4421
      %v4433 = vpack.c.b16 %v4424, %v4423
      %v4434 = vpack.c.b16 %v4426, %v4425
      %4443 = vmatprep.subr.bf16.mxu0 0
      %4444 = vmatpush1.bf16.msra.mxu0 %v4434
      %4445 = vmatprep.subr.bf16.mxu0 0
      %4446 = vmatpush1.bf16.msra.mxu0 %v4433
      %4447 = vmatprep.subr.bf16.mxu0 0
      %4448 = vmatpush1.bf16.msra.mxu0 %v4432
      %4449 = vmatprep.subr.bf16.mxu0 0
      %4450 = vmatpush1.bf16.msra.mxu0 %v4431
      %4451 = vmatprep.subr.bf16.mxu0 0
      %4452 = vmatpush1.bf16.msra.mxu0 %v4430
      %4453 = vmatprep.subr.bf16.mxu0 0
      %4454 = vmatpush1.bf16.msra.mxu0 %v4429
      %4455 = vmatprep.subr.bf16.mxu0 0
      %4456 = vmatpush1.bf16.msra.mxu0 %v4428
      %4457 = vmatprep.subr.bf16.mxu0 0
      %4458 = vmatpush1.bf16.msra.mxu0 %v4427
      %4459 = vmatprep.subr.bf16.mxu0 0
      %4460 = vmatpush2.bf16.msra.mxu0 0
      %4461 = vmatprep.subr.bf16.mxu0 0
      %4462 = vmatpush2.bf16.msra.mxu0 0
      %4463 = vmatprep.subr.bf16.mxu0 0
      %4464 = vmatpush2.bf16.msra.mxu0 0
      %4465 = vmatprep.subr.bf16.mxu0 0
      %4466 = vmatpush2.bf16.msra.mxu0 0
      %4467 = vmatprep.subr.bf16.mxu0 0
      %4468 = vmatpush2.bf16.msra.mxu0 0
      %4469 = vmatprep.subr.bf16.mxu0 0
      %4470 = vmatpush2.bf16.msra.mxu0 0
      %4471 = vmatprep.subr.bf16.mxu0 0
      %4472 = vmatpush2.bf16.msra.mxu0 0
      %4473 = vmatprep.subr.bf16.mxu0 0
      %4474 = vmatpush2.bf16.msra.mxu0 0
      %4475 = vmatprep.mubr.bf16.mxu0 0
      %4476 = vmatmul.mubr.bf16.gmra.mxu0 %v4393
      %v4477 = vpop.f32.mrf.mxu0
      %v4478 = vadd.f32 0.0, %v4477
      %v4479 = vpop.f32.mrf.mxu0
      %v4480 = vpop.f32.mrf.mxu0
      %v4481 = vpop.f32.mrf.mxu0
      %4482 = vdwg.mxu0
      %v4483 = vadd.f32 %v4375, %v4478
      %s4484 = scalar_lea.vmem %s4, 384
      %v4485 = vld [vmem:[%s4484] sm:$0xf]
      %v4486 = vld [vmem:[%s4484 + $0x4] sm:$0xf]
      %v4487 = vld [vmem:[%s4484 + $0x8] sm:$0xf]
      %v4488 = vld [vmem:[%s4484 + $0xc] sm:$0xf]
      %v4489 = vld [vmem:[%s4484 + $0x10] sm:$0xf]
      %v4490 = vld [vmem:[%s4484 + $0x14] sm:$0xf]
      %v4491 = vld [vmem:[%s4484 + $0x18] sm:$0xf]
      %v4492 = vld [vmem:[%s4484 + $0x1c] sm:$0xf]
      %v4493 = vld [vmem:[%s4484 + $0x20] sm:$0xf]
      %v4494 = vld [vmem:[%s4484 + $0x24] sm:$0xf]
      %v4495 = vld [vmem:[%s4484 + $0x28] sm:$0xf]
      %v4496 = vld [vmem:[%s4484 + $0x2c] sm:$0xf]
      %v4497 = vld [vmem:[%s4484 + $0x30] sm:$0xf]
      %v4498 = vld [vmem:[%s4484 + $0x34] sm:$0xf]
      %v4499 = vld [vmem:[%s4484 + $0x38] sm:$0xf]
      %v4500 = vld [vmem:[%s4484 + $0x3c] sm:$0xf]
      %v4501 = vrot.slane %v3837, 3
      %v4519 = vunpack.c.l.b16 %v4485
      %v4520 = vunpack.c.l.b16 %v4486
      %v4521 = vunpack.c.l.b16 %v4487
      %v4522 = vunpack.c.l.b16 %v4488
      %v4523 = vunpack.c.l.b16 %v4489
      %v4524 = vunpack.c.l.b16 %v4490
      %v4525 = vunpack.c.l.b16 %v4491
      %v4526 = vunpack.c.l.b16 %v4492
      %v4527 = vunpack.c.l.b16 %v4493
      %v4528 = vunpack.c.l.b16 %v4494
      %v4529 = vunpack.c.l.b16 %v4495
      %v4530 = vunpack.c.l.b16 %v4496
      %v4531 = vunpack.c.l.b16 %v4497
      %v4532 = vunpack.c.l.b16 %v4498
      %v4533 = vunpack.c.l.b16 %v4499
      %v4534 = vunpack.c.l.b16 %v4500
      %v4535 = vpack.c.b16 %v4520, %v4519
      %v4536 = vpack.c.b16 %v4522, %v4521
      %v4537 = vpack.c.b16 %v4524, %v4523
      %v4538 = vpack.c.b16 %v4526, %v4525
      %v4539 = vpack.c.b16 %v4528, %v4527
      %v4540 = vpack.c.b16 %v4530, %v4529
      %v4541 = vpack.c.b16 %v4532, %v4531
      %v4542 = vpack.c.b16 %v4534, %v4533
      %4551 = vmatprep.subr.bf16.mxu0 0
      %4552 = vmatpush1.bf16.msra.mxu0 %v4542
      %4553 = vmatprep.subr.bf16.mxu0 0
      %4554 = vmatpush1.bf16.msra.mxu0 %v4541
      %4555 = vmatprep.subr.bf16.mxu0 0
      %4556 = vmatpush1.bf16.msra.mxu0 %v4540
      %4557 = vmatprep.subr.bf16.mxu0 0
      %4558 = vmatpush1.bf16.msra.mxu0 %v4539
      %4559 = vmatprep.subr.bf16.mxu0 0
      %4560 = vmatpush1.bf16.msra.mxu0 %v4538
      %4561 = vmatprep.subr.bf16.mxu0 0
      %4562 = vmatpush1.bf16.msra.mxu0 %v4537
      %4563 = vmatprep.subr.bf16.mxu0 0
      %4564 = vmatpush1.bf16.msra.mxu0 %v4536
      %4565 = vmatprep.subr.bf16.mxu0 0
      %4566 = vmatpush1.bf16.msra.mxu0 %v4535
      %4567 = vmatprep.subr.bf16.mxu0 0
      %4568 = vmatpush2.bf16.msra.mxu0 0
      %4569 = vmatprep.subr.bf16.mxu0 0
      %4570 = vmatpush2.bf16.msra.mxu0 0
      %4571 = vmatprep.subr.bf16.mxu0 0
      %4572 = vmatpush2.bf16.msra.mxu0 0
      %4573 = vmatprep.subr.bf16.mxu0 0
      %4574 = vmatpush2.bf16.msra.mxu0 0
      %4575 = vmatprep.subr.bf16.mxu0 0
      %4576 = vmatpush2.bf16.msra.mxu0 0
      %4577 = vmatprep.subr.bf16.mxu0 0
      %4578 = vmatpush2.bf16.msra.mxu0 0
      %4579 = vmatprep.subr.bf16.mxu0 0
      %4580 = vmatpush2.bf16.msra.mxu0 0
      %4581 = vmatprep.subr.bf16.mxu0 0
      %4582 = vmatpush2.bf16.msra.mxu0 0
      %4583 = vmatprep.mubr.bf16.mxu0 0
      %4584 = vmatmul.mubr.bf16.gmra.mxu0 %v4501
      %v4585 = vpop.f32.mrf.mxu0
      %v4586 = vadd.f32 0.0, %v4585
      %v4587 = vpop.f32.mrf.mxu0
      %v4588 = vpop.f32.mrf.mxu0
      %v4589 = vpop.f32.mrf.mxu0
      %4590 = vdwg.mxu0
      %v4591 = vadd.f32 %v4483, %v4586
      %s4592 = scalar_lea.vmem %s4, 448
      %v4593 = vld [vmem:[%s4592] sm:$0xf]
      %v4594 = vld [vmem:[%s4592 + $0x4] sm:$0xf]
      %v4595 = vld [vmem:[%s4592 + $0x8] sm:$0xf]
      %v4596 = vld [vmem:[%s4592 + $0xc] sm:$0xf]
      %v4597 = vld [vmem:[%s4592 + $0x10] sm:$0xf]
      %v4598 = vld [vmem:[%s4592 + $0x14] sm:$0xf]
      %v4599 = vld [vmem:[%s4592 + $0x18] sm:$0xf]
      %v4600 = vld [vmem:[%s4592 + $0x1c] sm:$0xf]
      %v4601 = vld [vmem:[%s4592 + $0x20] sm:$0xf]
      %v4602 = vld [vmem:[%s4592 + $0x24] sm:$0xf]
      %v4603 = vld [vmem:[%s4592 + $0x28] sm:$0xf]
      %v4604 = vld [vmem:[%s4592 + $0x2c] sm:$0xf]
      %v4605 = vld [vmem:[%s4592 + $0x30] sm:$0xf]
      %v4606 = vld [vmem:[%s4592 + $0x34] sm:$0xf]
      %v4607 = vld [vmem:[%s4592 + $0x38] sm:$0xf]
      %v4608 = vld [vmem:[%s4592 + $0x3c] sm:$0xf]
      %v4609 = vrot.slane %v3872, 3
      %v4627 = vunpack.c.l.b16 %v4593
      %v4628 = vunpack.c.l.b16 %v4594
      %v4629 = vunpack.c.l.b16 %v4595
      %v4630 = vunpack.c.l.b16 %v4596
      %v4631 = vunpack.c.l.b16 %v4597
      %v4632 = vunpack.c.l.b16 %v4598
      %v4633 = vunpack.c.l.b16 %v4599
      %v4634 = vunpack.c.l.b16 %v4600
      %v4635 = vunpack.c.l.b16 %v4601
      %v4636 = vunpack.c.l.b16 %v4602
      %v4637 = vunpack.c.l.b16 %v4603
      %v4638 = vunpack.c.l.b16 %v4604
      %v4639 = vunpack.c.l.b16 %v4605
      %v4640 = vunpack.c.l.b16 %v4606
      %v4641 = vunpack.c.l.b16 %v4607
      %v4642 = vunpack.c.l.b16 %v4608
      %v4643 = vpack.c.b16 %v4628, %v4627
      %v4644 = vpack.c.b16 %v4630, %v4629
      %v4645 = vpack.c.b16 %v4632, %v4631
      %v4646 = vpack.c.b16 %v4634, %v4633
      %v4647 = vpack.c.b16 %v4636, %v4635
      %v4648 = vpack.c.b16 %v4638, %v4637
      %v4649 = vpack.c.b16 %v4640, %v4639
      %v4650 = vpack.c.b16 %v4642, %v4641
      %4659 = vmatprep.subr.bf16.mxu0 0
      %4660 = vmatpush1.bf16.msra.mxu0 %v4650
      %4661 = vmatprep.subr.bf16.mxu0 0
      %4662 = vmatpush1.bf16.msra.mxu0 %v4649
      %4663 = vmatprep.subr.bf16.mxu0 0
      %4664 = vmatpush1.bf16.msra.mxu0 %v4648
      %4665 = vmatprep.subr.bf16.mxu0 0
      %4666 = vmatpush1.bf16.msra.mxu0 %v4647
      %4667 = vmatprep.subr.bf16.mxu0 0
      %4668 = vmatpush1.bf16.msra.mxu0 %v4646
      %4669 = vmatprep.subr.bf16.mxu0 0
      %4670 = vmatpush1.bf16.msra.mxu0 %v4645
      %4671 = vmatprep.subr.bf16.mxu0 0
      %4672 = vmatpush1.bf16.msra.mxu0 %v4644
      %4673 = vmatprep.subr.bf16.mxu0 0
      %4674 = vmatpush1.bf16.msra.mxu0 %v4643
      %4675 = vmatprep.subr.bf16.mxu0 0
      %4676 = vmatpush2.bf16.msra.mxu0 0
      %4677 = vmatprep.subr.bf16.mxu0 0
      %4678 = vmatpush2.bf16.msra.mxu0 0
      %4679 = vmatprep.subr.bf16.mxu0 0
      %4680 = vmatpush2.bf16.msra.mxu0 0
      %4681 = vmatprep.subr.bf16.mxu0 0
      %4682 = vmatpush2.bf16.msra.mxu0 0
      %4683 = vmatprep.subr.bf16.mxu0 0
      %4684 = vmatpush2.bf16.msra.mxu0 0
      %4685 = vmatprep.subr.bf16.mxu0 0
      %4686 = vmatpush2.bf16.msra.mxu0 0
      %4687 = vmatprep.subr.bf16.mxu0 0
      %4688 = vmatpush2.bf16.msra.mxu0 0
      %4689 = vmatprep.subr.bf16.mxu0 0
      %4690 = vmatpush2.bf16.msra.mxu0 0
      %4691 = vmatprep.mubr.bf16.mxu0 0
      %4692 = vmatmul.mubr.bf16.gmra.mxu0 %v4609
      %v4693 = vpop.f32.mrf.mxu0
      %v4694 = vadd.f32 0.0, %v4693
      %v4695 = vpop.f32.mrf.mxu0
      %v4696 = vpop.f32.mrf.mxu0
      %v4697 = vpop.f32.mrf.mxu0
      %4698 = vdwg.mxu0
      %v4699 = vadd.f32 %v4591, %v4694
      %v4701 = vrot.slane %v251, 4
      %v4703 = vadd.f32 %v4699, %v4701
      %v4704 = vmax.f32 %v4703, 0.0
      %v4705 = vrot.slane %v251, 5
      %v4707 = vmul.f32 %v4704, %v4705
      %vm4708 = vcmask 1040384
      %v4709 = vsel %vm4708, %v4707, 0.0
      %4710 = vadd.xlane.f32.xlu0 %v4709
      %v4711 = vpop.xlane.xlu0 %4710
      %v4712 = vrot.slane %v251, 6
      %v4714 = vadd.f32 %v4711, %v4712
      %v4715 = vlaneseq
      %v4716 = vshrl.u32 %v4715, 7
      %v4717 = vsub.s32 0, %v4716
      %v4718 = vrot.slane %v4714, %v4717
      %4719 = vst [vmem:[%s249] sm:$0xff] %v4718
      %p4720 = scmp.lt.s32.totalorder %s17, 1
      %s4721 = scalar_select %p4720, %s17, 1
      %s4722 = smul.addr %s4721, 8
      %s4723 = scalar_lea.vmem %s6, %s4722
      // Predicated region
      $region45: #{forward.1} parent=43 // pred_check
        %p4724 = pneg %p166
      $region46: #{forward.1} parent=43 // pred_check_branch
        %4726 = sbr.rel (%p4724) target = $region48
      $region47: #{forward.1} parent=43 // pred_region
        _
      $region48: #{forward.1} parent=43 // pred_fallthru
        _
    $region44: #{forward.1} parent=5 // pred_fallthru
      _
    %p4727 = scmp.le.s32.totalorder 2, %s12
    // Predicated region
    $region49: #{forward.1} parent=5 // pred_check
      %p4728 = pneg %p4727
    $region50: #{forward.1} parent=5 // pred_check_branch
      %4730 = sbr.rel (%p4728) target = $region52
    $region51: #{forward.1} parent=5 // pred_region
      %s4731 = ssub.s32 %s12, 2
      // Predicated region
      $region53: #{forward.1} parent=51 // pred_check
        %p4732 = pneg %p172
      $region54: #{forward.1} parent=51 // pred_check_branch
        %4734 = sbr.rel (%p4732) target = $region56
      $region55: #{forward.1} parent=51 // pred_region
        %p4735 = scmp.lt.s32.totalorder %s18, 1
        %s4736 = scalar_select %p4735, %s18, 1
        %s4737 = smul.addr %s4736, 8
        %s4738 = scalar_lea.vmem %s6, %s4737
      $region56: #{forward.1} parent=51 // pred_fallthru
        _
    $region52: #{forward.1} parent=5 // pred_fallthru
      _
  $region6: #{forward.1} parent=0 // loop_footer
    %s16 = sadd.s32 1, %s12
  $region7: #{forward.1} parent=0 // loop_footer_branch
    %11 = sbr.rel target = $region3
  $region8: #{forward.1} parent=0 // loop_exit
    _

</llo_original>
